<compile_context>
chip_gen: v6e
topology: v6e:2x2x1
jax: 0.10.0
libtpu: 0.0.40
codegen_flags: <defaults>
</compile_context>

<pallas_src>
import functools

import jax
import jax.numpy as jnp
import numpy as np
from jax.experimental import pallas as pl
from jax.experimental.pallas import tpu as pltpu

HID_DIM = 64
HID_PAD = 128            # hidden padded to one full lane block
GATES = 3 * HID_PAD      # fused r|i|n gates, each 128-lane aligned
GNN_OUT = 9
E_H = 32
E_OUT = 22


# ----------------------------------------------------------------------------
# Pallas kernel: one prediction step per (sequential) grid iteration.
# ----------------------------------------------------------------------------
def pm25_gnn_kernel(
    # inputs
    pm25_last_ref,    # (B*N, 1)
    feat_ref,         # (1, B*N, F)   feature slice for step t
    gsrc_ref,         # (B*E, B*N)    block-diag one-hot gather by edge src
    gtgt_ref,         # (B*E, B*N)    block-diag one-hot gather by edge target
    scat_ref,         # (B*N, B*E)    (G_tgt - G_src)^T scatter matrix
    einv_dist_ref,    # (B*E, 1)      1 / city_dist
    edirec_ref,       # (B*E, 1)      city direction
    wmin_ref,         # (1, 2)
    wrng_ref,         # (1, 2)        wind_max - wind_min
    w1_src_xn_ref,    # (1, 32)
    w1_src_f_ref,     # (F, 32)
    w1_tgt_xn_ref,    # (1, 32)
    w1_tgt_f_ref,     # (F, 32)
    w1_w_ref,         # (1, 32)
    edge_bias_ref,    # (B*E, 32)     ean @ W1_ea + b_e1 (precomputed)
    w_e2_ref,         # (32, 22)
    b_e2_ref,         # (1, 22)
    w_n_ref,          # (22, 9)
    b_n_ref,          # (1, 9)
    wx_gnn_ref,       # (9, 384)      fused+padded GRU x-side rows (xn_gnn)
    wx_xn_ref,        # (1, 384)      ... rows for the xn column
    wx_f_ref,         # (F, 384)      ... rows for the feature block
    bx_ref,           # (1, 384)
    wh_ref,           # (128, 384)    fused+padded GRU h-side (pad rows zero)
    bh_ref,           # (1, 384)
    w_o_ref,          # (1, 128)      fc_out (pad lanes zero)
    b_o_ref,          # (1, 1)
    # outputs
    out_ref,          # (1, B, N)     lane-dense per-step prediction
    # scratch
    h_sc,             # (B*N, 128)    GRU hidden state, carried across steps
    xn_sc,            # (B*N, 1)      autoregressive pm25 value
    *, batch, n_city):
  t = pl.program_id(0)

  @pl.when(t == 0)
  def _init():
    h_sc[...] = jnp.zeros_like(h_sc)
    xn_sc[...] = pm25_last_ref[...]

  f32 = jnp.float32
  dot = lambda a, b: jnp.dot(a, b, preferred_element_type=f32)

  xn = xn_sc[...]                                   # (BN, 1)
  feat = feat_ref[0]                                # (BN, F)
  gsrc = gsrc_ref[...]                              # (BE, BN)
  gtgt = gtgt_ref[...]                              # (BE, BN)

  # ---- GraphGNN: project-then-gather edge MLP ------------------------------
  # x = concat(xn, feat); W_e1 split by row blocks -> no in-kernel concats.
  p_src = xn * w1_src_xn_ref[...] + dot(feat, w1_src_f_ref[...])   # (BN, 32)
  p_tgt = xn * w1_tgt_xn_ref[...] + dot(feat, w1_tgt_f_ref[...])   # (BN, 32)

  wind_e = dot(gsrc, feat[:, -2:]) * wrng_ref[...] + wmin_ref[...]  # (BE, 2)
  src_speed = wind_e[:, 0:1]
  src_direc = wind_e[:, 1:2]
  theta = jnp.abs(edirec_ref[...] - src_direc)
  edge_w = jnp.maximum(src_speed * jnp.cos(theta) * einv_dist_ref[...], 0.0)

  h1 = jax.nn.sigmoid(dot(gsrc, p_src) + dot(gtgt, p_tgt)
                      + edge_w * w1_w_ref[...] + edge_bias_ref[...])  # (BE, 32)
  eo = jax.nn.sigmoid(dot(h1, w_e2_ref[...]) + b_e2_ref[...])         # (BE, 22)

  # scatter_add(eo, edge_target) - scatter_add(eo, edge_src) as one matmul
  agg = dot(scat_ref[...], eo)                                        # (BN, 22)
  xn_gnn = jax.nn.sigmoid(dot(agg, w_n_ref[...]) + b_n_ref[...])      # (BN, 9)

  # ---- fused GRU cell (2 matmuls, gates padded to 128-lane blocks) ---------
  h = h_sc[...]                                                       # (BN, 128)
  gx = (dot(xn_gnn, wx_gnn_ref[...]) + xn * wx_xn_ref[...]
        + dot(feat, wx_f_ref[...]) + bx_ref[...])                     # (BN, 384)
  gh = dot(h, wh_ref[...]) + bh_ref[...]                              # (BN, 384)

  H = HID_PAD
  r = jax.nn.sigmoid(gx[:, 0:H] + gh[:, 0:H])
  z = jax.nn.sigmoid(gx[:, H:2 * H] + gh[:, H:2 * H])
  n = jnp.tanh(gx[:, 2 * H:3 * H] + r * gh[:, 2 * H:3 * H])
  hy = n + z * (h - n)                                                # (BN, 128)
  h_sc[...] = hy

  # ---- fc_out ---------------------------------------------------------------
  w_o = w_o_ref[...]                                                  # (1, 128)
  # column form, carried to the next step
  xn_sc[...] = jnp.sum(hy * w_o, axis=-1, keepdims=True) + b_o_ref[...]
  # lane-dense form (N on lanes), written to the output block
  out_ref[0] = (jnp.sum(hy.reshape(batch, n_city, H) * w_o[None, :, :],
                        axis=-1) + b_o_ref[...])


# ----------------------------------------------------------------------------
# Wrapper: graph glue, weight splitting/fusion, layout plumbing.
# ----------------------------------------------------------------------------
def pm25_gnn_forward(pm25_hist, feature, params, edge_index, edge_attr,
                     wind_max, wind_min, hist_len, pred_len):
  B, _, N, _ = pm25_hist.shape
  F = feature.shape[-1]
  in_dim = 1 + F
  E = edge_index.shape[1]
  BN, BE = B * N, B * E
  f32 = jnp.float32

  # ---- graph glue: block-diagonal one-hot gather / scatter matrices --------
  # NOTE: block-diagonal is O(B^2 * E * N); for large graphs switch to the
  # (N, B*feat) lane-layout variant with a single (E, N) gather matrix.
  g_src = jax.nn.one_hot(edge_index[0], N, dtype=f32)            # (E, N)
  g_tgt = jax.nn.one_hot(edge_index[1], N, dtype=f32)            # (E, N)
  eye_b = jnp.eye(B, dtype=f32)
  gsrc_bd = jnp.kron(eye_b, g_src)                               # (BE, BN)
  gtgt_bd = jnp.kron(eye_b, g_tgt)                               # (BE, BN)
  scat = (gtgt_bd - gsrc_bd).T                                   # (BN, BE)

  ea = edge_attr.astype(f32)                                     # (E, 2)
  ean = (ea - ea.min(axis=0)) / (ea.max(axis=0) - ea.min(axis=0))
  einv_dist = jnp.tile(1.0 / ea[:, 0:1], (B, 1))                 # (BE, 1)
  edirec = jnp.tile(ea[:, 1:2], (B, 1))                          # (BE, 1)
  wmin = wind_min.reshape(1, 2).astype(f32)
  wrng = (wind_max - wind_min).reshape(1, 2).astype(f32)

  # ---- edge-MLP layer 1: split weight rows (concat elimination) ------------
  we1 = params["w_e1"]                                           # (2*in_dim+3, 32)
  w1_src_xn = we1[0:1]
  w1_src_f = we1[1:in_dim]
  w1_tgt_xn = we1[in_dim:in_dim + 1]
  w1_tgt_f = we1[in_dim + 1:2 * in_dim]
  w1_ea = we1[2 * in_dim:2 * in_dim + 2]
  w1_w = we1[2 * in_dim + 2:2 * in_dim + 3]
  edge_bias = jnp.tile(ean @ w1_ea + params["b_e1"], (B, 1))     # (BE, 32)

  # ---- GRU: fuse r/i/n gates, pad each gate to a 128-lane block ------------
  def fuse_gates(wr, wi, wn):
    rows = wr.shape[0]
    w = jnp.zeros((rows, GATES), f32)
    w = w.at[:, 0:HID_DIM].set(wr)
    w = w.at[:, HID_PAD:HID_PAD + HID_DIM].set(wi)
    w = w.at[:, 2 * HID_PAD:2 * HID_PAD + HID_DIM].set(wn)
    return w

  wx = fuse_gates(params["w_xr"], params["w_xi"], params["w_xn"])  # (17, 384)
  wx_gnn = wx[0:GNN_OUT]
  wx_xn = wx[GNN_OUT:GNN_OUT + 1]
  wx_f = wx[GNN_OUT + 1:GNN_OUT + 1 + F]
  bx = fuse_gates(params["b_xr"], params["b_xi"], params["b_xn"])  # (1, 384)
  wh = jnp.zeros((HID_PAD, GATES), f32).at[:HID_DIM].set(
      fuse_gates(params["w_hr"], params["w_hi"], params["w_hn"]))  # (128, 384)
  bh = fuse_gates(params["b_hr"], params["b_hi"], params["b_hn"])  # (1, 384)
  w_o = jnp.zeros((1, HID_PAD), f32).at[0, :HID_DIM].set(params["w_o"][:, 0])
  b_o = params["b_o"].reshape(1, 1)

  # ---- data layout: batch folded into the sublane (row) dimension ----------
  pm25_last = pm25_hist[:, -1].reshape(BN, 1)                      # (BN, 1)
  feat_steps = jnp.transpose(
      feature[:, hist_len:hist_len + pred_len], (1, 0, 2, 3)
  ).reshape(pred_len, BN, F)                                       # (T, BN, F)

  inputs = [
      pm25_last, feat_steps,
      gsrc_bd, gtgt_bd, scat,
      einv_dist, edirec, wmin, wrng,
      w1_src_xn, w1_src_f, w1_tgt_xn, w1_tgt_f, w1_w, edge_bias,
      params["w_e2"], params["b_e2"], params["w_n"], params["b_n"],
      wx_gnn, wx_xn, wx_f, bx, wh, bh, w_o, b_o,
  ]

  def const_spec(a):
    nd = a.ndim
    return pl.BlockSpec(a.shape, lambda t, _nd=nd: (0,) * _nd)

  in_specs = []
  for i, a in enumerate(inputs):
    if i == 1:   # feature: one time step per grid iteration
      in_specs.append(pl.BlockSpec((1, BN, F), lambda t: (t, 0, 0)))
    else:
      in_specs.append(const_spec(a))

  out_specs = pl.BlockSpec((1, B, N), lambda t: (t, 0, 0))

  grid_spec = pltpu.PrefetchScalarGridSpec(
      num_scalar_prefetch=0,
      grid=(pred_len,),
      in_specs=in_specs,
      out_specs=out_specs,
      scratch_shapes=[
          pltpu.VMEM((BN, HID_PAD), f32),   # GRU hidden state (padded to 128)
          pltpu.VMEM((BN, 1), f32),         # autoregressive pm25 value
      ],
  )

  kernel = functools.partial(pm25_gnn_kernel, batch=B, n_city=N)
  out_tbn = pl.pallas_call(
      kernel,
      out_shape=jax.ShapeDtypeStruct((pred_len, B, N), f32),
      grid_spec=grid_spec,
      compiler_params=pltpu.CompilerParams(
          dimension_semantics=("arbitrary",)),   # time axis carries state
  )(*inputs)

  return jnp.transpose(out_tbn, (1, 0, 2))[..., None]   # (B, T, N, 1)


# ----------------------------------------------------------------------------
# Pure-JAX reference (mirrors the PyTorch forward)
# ----------------------------------------------------------------------------
def reference_forward(pm25_hist, feature, params, edge_index, edge_attr,
                      wind_max, wind_min, hist_len, pred_len):
  B, _, N, _ = pm25_hist.shape
  E = edge_index.shape[1]
  ea = edge_attr.astype(jnp.float32)
  ean = (ea - ea.min(axis=0)) / (ea.max(axis=0) - ea.min(axis=0))
  edge_src = edge_index[0]
  edge_tgt = edge_index[1]

  hn = jnp.zeros((B, N, HID_DIM), jnp.float32)
  xn = pm25_hist[:, -1]
  preds = []
  for i in range(pred_len):
    x = jnp.concatenate([xn, feature[:, hist_len + i]], axis=-1)    # (B,N,in_dim)
    node_src = x[:, edge_src]                                       # (B,E,in_dim)
    node_tgt = x[:, edge_tgt]
    src_wind = node_src[..., -2:] * (wind_max - wind_min) + wind_min
    src_speed = src_wind[..., 0]
    src_direc = src_wind[..., 1]
    city_dist = ea[:, 0][None, :]
    city_direc = ea[:, 1][None, :]
    theta = jnp.abs(city_direc - src_direc)
    edge_w = jax.nn.relu(src_speed * jnp.cos(theta) / city_dist)    # (B,E)
    ean_b = jnp.broadcast_to(ean[None], (B,) + ean.shape)
    edge_in = jnp.concatenate(
        [node_src, node_tgt, ean_b, edge_w[..., None]], axis=-1)
    h1 = jax.nn.sigmoid(edge_in @ params["w_e1"] + params["b_e1"])
    eo = jax.nn.sigmoid(h1 @ params["w_e2"] + params["b_e2"])       # (B,E,22)
    out_add = jnp.zeros((B, N, E_OUT), jnp.float32).at[:, edge_tgt].add(eo)
    out_sub = jnp.zeros((B, N, E_OUT), jnp.float32).at[:, edge_src].add(-eo)
    agg = out_add + out_sub
    xn_gnn = jax.nn.sigmoid(agg @ params["w_n"] + params["b_n"])    # (B,N,9)

    xg = jnp.concatenate([xn_gnn, x], axis=-1)
    i_r = xg @ params["w_xr"] + params["b_xr"]
    i_i = xg @ params["w_xi"] + params["b_xi"]
    i_n = xg @ params["w_xn"] + params["b_xn"]
    h_r = hn @ params["w_hr"] + params["b_hr"]
    h_i = hn @ params["w_hi"] + params["b_hi"]
    h_n = hn @ params["w_hn"] + params["b_hn"]
    resetgate = jax.nn.sigmoid(i_r + h_r)
    inputgate = jax.nn.sigmoid(i_i + h_i)
    newgate = jnp.tanh(i_n + resetgate * h_n)
    hn = newgate + inputgate * (hn - newgate)

    xn = hn @ params["w_o"] + params["b_o"]                         # (B,N,1)
    preds.append(xn)
  return jnp.stack(preds, axis=1)


# ----------------------------------------------------------------------------
# Main
# ----------------------------------------------------------------------------
if __name__ == "__main__":
  B, N, E = 2, 8, 16
  in_dim = 8                   # xn (1) + feature (7)
  F = in_dim - 1
  hist_len, pred_len = 4, 3
  gru_in = in_dim + GNN_OUT    # 17
  edge_in_dim = in_dim * 2 + 2 + 1

  key = jax.random.PRNGKey(0)
  keys = jax.random.split(key, 32)
  u = lambda k, shape, lo, hi: jax.random.uniform(
      k, shape, dtype=jnp.float32, minval=lo, maxval=hi)

  std = 1.0 / np.sqrt(HID_DIM)
  params = {
      "w_e1": u(keys[0], (edge_in_dim, E_H), -0.2, 0.2),
      "b_e1": u(keys[1], (1, E_H), -0.2, 0.2),
      "w_e2": u(keys[2], (E_H, E_OUT), -0.2, 0.2),
      "b_e2": u(keys[3], (1, E_OUT), -0.2, 0.2),
      "w_n":  u(keys[4], (E_OUT, GNN_OUT), -0.2, 0.2),
      "b_n":  u(keys[5], (1, GNN_OUT), -0.2, 0.2),
      "w_xr": u(keys[6], (gru_in, HID_DIM), -std, std),
      "w_xi": u(keys[7], (gru_in, HID_DIM), -std, std),
      "w_xn": u(keys[8], (gru_in, HID_DIM), -std, std),
      "b_xr": u(keys[9], (1, HID_DIM), -std, std),
      "b_xi": u(keys[10], (1, HID_DIM), -std, std),
      "b_xn": u(keys[11], (1, HID_DIM), -std, std),
      "w_hr": u(keys[12], (HID_DIM, HID_DIM), -std, std),
      "w_hi": u(keys[13], (HID_DIM, HID_DIM), -std, std),
      "w_hn": u(keys[14], (HID_DIM, HID_DIM), -std, std),
      "b_hr": u(keys[15], (1, HID_DIM), -std, std),
      "b_hi": u(keys[16], (1, HID_DIM), -std, std),
      "b_hn": u(keys[17], (1, HID_DIM), -std, std),
      "w_o":  u(keys[18], (HID_DIM, 1), -std, std),
      "b_o":  u(keys[19], (1, 1), -std, std),
  }

  edge_index = jnp.stack([
      jax.random.randint(keys[20], (E,), 0, N),
      jax.random.randint(keys[21], (E,), 0, N),
  ], axis=0)                                                   # (2, E)
  edge_attr = jnp.stack([
      u(keys[22], (E,), 0.5, 2.0),        # city distance  (> 0)
      u(keys[23], (E,), 0.0, 360.0),      # city direction
  ], axis=-1)                                                  # (E, 2)

  wind_min = jnp.array([0.0, 0.0], jnp.float32)
  wind_max = jnp.array([10.0, 360.0], jnp.float32)

  pm25_hist = u(keys[24], (B, hist_len, N, 1), 0.0, 1.0)
  feature = u(keys[25], (B, hist_len + pred_len, N, F), 0.0, 1.0)

  out = pm25_gnn_forward(pm25_hist, feature, params, edge_index, edge_attr,
                         wind_max, wind_min, hist_len, pred_len)
  out = jax.block_until_ready(out)

  ref = reference_forward(pm25_hist, feature, params, edge_index, edge_attr,
                          wind_max, wind_min, hist_len, pred_len)
  ref = jax.block_until_ready(ref)

  assert out.shape == (B, pred_len, N, 1), out.shape
  np.testing.assert_allclose(np.asarray(out), np.asarray(ref),
                             rtol=5e-5, atol=5e-5)
  print("KERNEL_OK")
</pallas_src>

<mosaic_0001>
module attributes {stable_mosaic.version = 11 : i64} {
  func.func @pm25_gnn_kernel(%arg0: i32, %arg1: memref<16x1xf32, #tpu.memory_space<vmem>>, %arg2: memref<1x16x7xf32, #tpu.memory_space<vmem>>, %arg3: memref<32x16xf32, #tpu.memory_space<vmem>>, %arg4: memref<32x16xf32, #tpu.memory_space<vmem>>, %arg5: memref<16x32xf32, #tpu.memory_space<vmem>>, %arg6: memref<32x1xf32, #tpu.memory_space<vmem>>, %arg7: memref<32x1xf32, #tpu.memory_space<vmem>>, %arg8: memref<1x2xf32, #tpu.memory_space<vmem>>, %arg9: memref<1x2xf32, #tpu.memory_space<vmem>>, %arg10: memref<1x32xf32, #tpu.memory_space<vmem>>, %arg11: memref<7x32xf32, #tpu.memory_space<vmem>>, %arg12: memref<1x32xf32, #tpu.memory_space<vmem>>, %arg13: memref<7x32xf32, #tpu.memory_space<vmem>>, %arg14: memref<1x32xf32, #tpu.memory_space<vmem>>, %arg15: memref<32x32xf32, #tpu.memory_space<vmem>>, %arg16: memref<32x22xf32, #tpu.memory_space<vmem>>, %arg17: memref<1x22xf32, #tpu.memory_space<vmem>>, %arg18: memref<22x9xf32, #tpu.memory_space<vmem>>, %arg19: memref<1x9xf32, #tpu.memory_space<vmem>>, %arg20: memref<9x384xf32, #tpu.memory_space<vmem>>, %arg21: memref<1x384xf32, #tpu.memory_space<vmem>>, %arg22: memref<7x384xf32, #tpu.memory_space<vmem>>, %arg23: memref<1x384xf32, #tpu.memory_space<vmem>>, %arg24: memref<128x384xf32, #tpu.memory_space<vmem>>, %arg25: memref<1x384xf32, #tpu.memory_space<vmem>>, %arg26: memref<1x128xf32, #tpu.memory_space<vmem>>, %arg27: memref<1x1xf32, #tpu.memory_space<vmem>>, %arg28: memref<1x2x8xf32, #tpu.memory_space<vmem>>, %arg29: memref<16x128xf32, #tpu.memory_space<vmem>>, %arg30: memref<16x1xf32, #tpu.memory_space<vmem>>) attributes {dimension_semantics = [#tpu.dimension_semantics<arbitrary>], iteration_bounds = array<i64: 3>, scalar_prefetch = 0 : i64, scratch_operands = 2 : i64, tpu.core_type = #tpu.core_type<tc>, window_params = [{pipeline_mode = #tpu.pipeline_mode<synchronous>, transform_indices = @transform_0, window_bounds = array<i64: 16, 1>}, {transform_indices = @transform_1, window_bounds = array<i64: 1, 16, 7>}, {pipeline_mode = #tpu.pipeline_mode<synchronous>, transform_indices = @transform_2, window_bounds = array<i64: 32, 16>}, {pipeline_mode = #tpu.pipeline_mode<synchronous>, transform_indices = @transform_3, window_bounds = array<i64: 32, 16>}, {pipeline_mode = #tpu.pipeline_mode<synchronous>, transform_indices = @transform_4, window_bounds = array<i64: 16, 32>}, {pipeline_mode = #tpu.pipeline_mode<synchronous>, transform_indices = @transform_5, window_bounds = array<i64: 32, 1>}, {pipeline_mode = #tpu.pipeline_mode<synchronous>, transform_indices = @transform_6, window_bounds = array<i64: 32, 1>}, {pipeline_mode = #tpu.pipeline_mode<synchronous>, transform_indices = @transform_7, window_bounds = array<i64: 1, 2>}, {pipeline_mode = #tpu.pipeline_mode<synchronous>, transform_indices = @transform_8, window_bounds = array<i64: 1, 2>}, {pipeline_mode = #tpu.pipeline_mode<synchronous>, transform_indices = @transform_9, window_bounds = array<i64: 1, 32>}, {pipeline_mode = #tpu.pipeline_mode<synchronous>, transform_indices = @transform_10, window_bounds = array<i64: 7, 32>}, {pipeline_mode = #tpu.pipeline_mode<synchronous>, transform_indices = @transform_11, window_bounds = array<i64: 1, 32>}, {pipeline_mode = #tpu.pipeline_mode<synchronous>, transform_indices = @transform_12, window_bounds = array<i64: 7, 32>}, {pipeline_mode = #tpu.pipeline_mode<synchronous>, transform_indices = @transform_13, window_bounds = array<i64: 1, 32>}, {pipeline_mode = #tpu.pipeline_mode<synchronous>, transform_indices = @transform_14, window_bounds = array<i64: 32, 32>}, {pipeline_mode = #tpu.pipeline_mode<synchronous>, transform_indices = @transform_15, window_bounds = array<i64: 32, 22>}, {pipeline_mode = #tpu.pipeline_mode<synchronous>, transform_indices = @transform_16, window_bounds = array<i64: 1, 22>}, {pipeline_mode = #tpu.pipeline_mode<synchronous>, transform_indices = @transform_17, window_bounds = array<i64: 22, 9>}, {pipeline_mode = #tpu.pipeline_mode<synchronous>, transform_indices = @transform_18, window_bounds = array<i64: 1, 9>}, {pipeline_mode = #tpu.pipeline_mode<synchronous>, transform_indices = @transform_19, window_bounds = array<i64: 9, 384>}, {pipeline_mode = #tpu.pipeline_mode<synchronous>, transform_indices = @transform_20, window_bounds = array<i64: 1, 384>}, {pipeline_mode = #tpu.pipeline_mode<synchronous>, transform_indices = @transform_21, window_bounds = array<i64: 7, 384>}, {pipeline_mode = #tpu.pipeline_mode<synchronous>, transform_indices = @transform_22, window_bounds = array<i64: 1, 384>}, {pipeline_mode = #tpu.pipeline_mode<synchronous>, transform_indices = @transform_23, window_bounds = array<i64: 128, 384>}, {pipeline_mode = #tpu.pipeline_mode<synchronous>, transform_indices = @transform_24, window_bounds = array<i64: 1, 384>}, {pipeline_mode = #tpu.pipeline_mode<synchronous>, transform_indices = @transform_25, window_bounds = array<i64: 1, 128>}, {pipeline_mode = #tpu.pipeline_mode<synchronous>, transform_indices = @transform_26, window_bounds = array<i64: 1, 1>}, {transform_indices = @transform_27, window_bounds = array<i64: 1, 2, 8>}]} {
    %c0_i32 = arith.constant 0 : i32
    %0 = arith.cmpi eq, %arg0, %c0_i32 : i32
    %1 = arith.extui %0 : i1 to i32
    %c0_i32_0 = arith.constant 0 : i32
    %2 = arith.cmpi ne, %1, %c0_i32_0 : i32
    scf.if %2 {
      %cst_84 = arith.constant 0.000000e+00 : f32
      %142 = vector.broadcast %cst_84 : f32 to vector<16x128xf32>
      %c0_85 = arith.constant 0 : index
      %c0_86 = arith.constant 0 : index
      %143 = vector.load %arg29[%c0_85, %c0_86] : memref<16x128xf32, #tpu.memory_space<vmem>>, vector<16x128xf32>
      tpu.vector_store %arg29[%c0_85, %c0_86], %142 {strides = array<i32>} : memref<16x128xf32, #tpu.memory_space<vmem>>, vector<16x128xf32>,
      %c0_87 = arith.constant 0 : index
      %c0_88 = arith.constant 0 : index
      %144 = vector.load %arg1[%c0_87, %c0_88] : memref<16x1xf32, #tpu.memory_space<vmem>>, vector<16x1xf32>
      %c0_89 = arith.constant 0 : index
      %c0_90 = arith.constant 0 : index
      %145 = vector.load %arg30[%c0_89, %c0_90] : memref<16x1xf32, #tpu.memory_space<vmem>>, vector<16x1xf32>
      tpu.vector_store %arg30[%c0_89, %c0_90], %144 {strides = array<i32>} : memref<16x1xf32, #tpu.memory_space<vmem>>, vector<16x1xf32>,
    } else {
    }
    %c0 = arith.constant 0 : index
    %c0_1 = arith.constant 0 : index
    %3 = vector.load %arg30[%c0, %c0_1] : memref<16x1xf32, #tpu.memory_space<vmem>>, vector<16x1xf32>
    %c0_2 = arith.constant 0 : index
    %c0_3 = arith.constant 0 : index
    %c0_4 = arith.constant 0 : index
    %4 = vector.load %arg2[%c0_2, %c0_3, %c0_4] : memref<1x16x7xf32, #tpu.memory_space<vmem>>, vector<1x16x7xf32>
    %5 = vector.shape_cast %4 : vector<1x16x7xf32> to vector<16x7xf32>
    %c0_5 = arith.constant 0 : index
    %c0_6 = arith.constant 0 : index
    %6 = vector.load %arg3[%c0_5, %c0_6] : memref<32x16xf32, #tpu.memory_space<vmem>>, vector<32x16xf32>
    %c0_7 = arith.constant 0 : index
    %c0_8 = arith.constant 0 : index
    %7 = vector.load %arg4[%c0_7, %c0_8] : memref<32x16xf32, #tpu.memory_space<vmem>>, vector<32x16xf32>
    %c0_9 = arith.constant 0 : index
    %c0_10 = arith.constant 0 : index
    %8 = vector.load %arg10[%c0_9, %c0_10] : memref<1x32xf32, #tpu.memory_space<vmem>>, vector<1x32xf32>
    %9 = vector.broadcast %3 : vector<16x1xf32> to vector<16x32xf32>
    %10 = vector.broadcast %8 : vector<1x32xf32> to vector<16x32xf32>
    %11 = arith.mulf %9, %10 : vector<16x32xf32>
    %c0_11 = arith.constant 0 : index
    %c0_12 = arith.constant 0 : index
    %12 = vector.load %arg11[%c0_11, %c0_12] : memref<7x32xf32, #tpu.memory_space<vmem>>, vector<7x32xf32>
    %cst = arith.constant dense<0.000000e+00> : vector<16x32xf32>
    %13 = tpu.matmul %5, %12, %cst {dimension_numbers = #tpu.dot_dimension_numbers<[1], [0], [0], [1], [0, 0, 1, 1], [], []>} : vector<16x7xf32>, vector<7x32xf32>, vector<16x32xf32> -> vector<16x32xf32>
    %14 = arith.addf %11, %13 : vector<16x32xf32>
    %c0_13 = arith.constant 0 : index
    %c0_14 = arith.constant 0 : index
    %15 = vector.load %arg12[%c0_13, %c0_14] : memref<1x32xf32, #tpu.memory_space<vmem>>, vector<1x32xf32>
    %16 = vector.broadcast %3 : vector<16x1xf32> to vector<16x32xf32>
    %17 = vector.broadcast %15 : vector<1x32xf32> to vector<16x32xf32>
    %18 = arith.mulf %16, %17 : vector<16x32xf32>
    %c0_15 = arith.constant 0 : index
    %c0_16 = arith.constant 0 : index
    %19 = vector.load %arg13[%c0_15, %c0_16] : memref<7x32xf32, #tpu.memory_space<vmem>>, vector<7x32xf32>
    %cst_17 = arith.constant dense<0.000000e+00> : vector<16x32xf32>
    %20 = tpu.matmul %5, %19, %cst_17 {dimension_numbers = #tpu.dot_dimension_numbers<[1], [0], [0], [1], [0, 0, 1, 1], [], []>} : vector<16x7xf32>, vector<7x32xf32>, vector<16x32xf32> -> vector<16x32xf32>
    %21 = arith.addf %18, %20 : vector<16x32xf32>
    %22 = vector.extract_strided_slice %5 {offsets = [0, 5], sizes = [16, 2], strides = [1, 1]} : vector<16x7xf32> to vector<16x2xf32>
    %cst_18 = arith.constant dense<0.000000e+00> : vector<32x2xf32>
    %23 = tpu.matmul %6, %22, %cst_18 {dimension_numbers = #tpu.dot_dimension_numbers<[1], [0], [0], [1], [0, 0, 1, 1], [], []>} : vector<32x16xf32>, vector<16x2xf32>, vector<32x2xf32> -> vector<32x2xf32>
    %c0_19 = arith.constant 0 : index
    %c0_20 = arith.constant 0 : index
    %24 = vector.load %arg9[%c0_19, %c0_20] : memref<1x2xf32, #tpu.memory_space<vmem>>, vector<1x2xf32>
    %25 = vector.broadcast %24 : vector<1x2xf32> to vector<32x2xf32>
    %26 = arith.mulf %23, %25 : vector<32x2xf32>
    %c0_21 = arith.constant 0 : index
    %c0_22 = arith.constant 0 : index
    %27 = vector.load %arg8[%c0_21, %c0_22] : memref<1x2xf32, #tpu.memory_space<vmem>>, vector<1x2xf32>
    %28 = vector.broadcast %27 : vector<1x2xf32> to vector<32x2xf32>
    %29 = arith.addf %26, %28 : vector<32x2xf32>
    %30 = vector.extract_strided_slice %29 {offsets = [0, 0], sizes = [32, 1], strides = [1, 1]} : vector<32x2xf32> to vector<32x1xf32>
    %31 = vector.extract_strided_slice %29 {offsets = [0, 1], sizes = [32, 1], strides = [1, 1]} : vector<32x2xf32> to vector<32x1xf32>
    %c0_23 = arith.constant 0 : index
    %c0_24 = arith.constant 0 : index
    %32 = vector.load %arg7[%c0_23, %c0_24] : memref<32x1xf32, #tpu.memory_space<vmem>>, vector<32x1xf32>
    %33 = arith.subf %32, %31 : vector<32x1xf32>
    %34 = math.absf %33 : vector<32x1xf32>
    %35 = math.cos %34 : vector<32x1xf32>
    %36 = arith.mulf %30, %35 : vector<32x1xf32>
    %c0_25 = arith.constant 0 : index
    %c0_26 = arith.constant 0 : index
    %37 = vector.load %arg6[%c0_25, %c0_26] : memref<32x1xf32, #tpu.memory_space<vmem>>, vector<32x1xf32>
    %38 = arith.mulf %36, %37 : vector<32x1xf32>
    %cst_27 = arith.constant 0.000000e+00 : f32
    %39 = vector.broadcast %cst_27 : f32 to vector<32x1xf32>
    %40 = arith.maximumf %38, %39 : vector<32x1xf32>
    %cst_28 = arith.constant dense<0.000000e+00> : vector<32x32xf32>
    %41 = tpu.matmul %6, %14, %cst_28 {dimension_numbers = #tpu.dot_dimension_numbers<[1], [0], [0], [1], [0, 0, 1, 1], [], []>} : vector<32x16xf32>, vector<16x32xf32>, vector<32x32xf32> -> vector<32x32xf32>
    %cst_29 = arith.constant dense<0.000000e+00> : vector<32x32xf32>
    %42 = tpu.matmul %7, %21, %cst_29 {dimension_numbers = #tpu.dot_dimension_numbers<[1], [0], [0], [1], [0, 0, 1, 1], [], []>} : vector<32x16xf32>, vector<16x32xf32>, vector<32x32xf32> -> vector<32x32xf32>
    %43 = arith.addf %41, %42 : vector<32x32xf32>
    %c0_30 = arith.constant 0 : index
    %c0_31 = arith.constant 0 : index
    %44 = vector.load %arg14[%c0_30, %c0_31] : memref<1x32xf32, #tpu.memory_space<vmem>>, vector<1x32xf32>
    %45 = vector.broadcast %40 : vector<32x1xf32> to vector<32x32xf32>
    %46 = vector.broadcast %44 : vector<1x32xf32> to vector<32x32xf32>
    %47 = arith.mulf %45, %46 : vector<32x32xf32>
    %48 = arith.addf %43, %47 : vector<32x32xf32>
    %c0_32 = arith.constant 0 : index
    %c0_33 = arith.constant 0 : index
    %49 = vector.load %arg15[%c0_32, %c0_33] : memref<32x32xf32, #tpu.memory_space<vmem>>, vector<32x32xf32>
    %50 = arith.addf %48, %49 : vector<32x32xf32>
    %51 = arith.negf %50 : vector<32x32xf32>
    %52 = math.exp %51 : vector<32x32xf32>
    %cst_34 = arith.constant 1.000000e+00 : f32
    %53 = vector.broadcast %cst_34 : f32 to vector<32x32xf32>
    %54 = arith.addf %53, %52 : vector<32x32xf32>
    %55 = arith.divf %53, %54 : vector<32x32xf32>
    %c0_35 = arith.constant 0 : index
    %c0_36 = arith.constant 0 : index
    %56 = vector.load %arg16[%c0_35, %c0_36] : memref<32x22xf32, #tpu.memory_space<vmem>>, vector<32x22xf32>
    %cst_37 = arith.constant dense<0.000000e+00> : vector<32x22xf32>
    %57 = tpu.matmul %55, %56, %cst_37 {dimension_numbers = #tpu.dot_dimension_numbers<[1], [0], [0], [1], [0, 0, 1, 1], [], []>} : vector<32x32xf32>, vector<32x22xf32>, vector<32x22xf32> -> vector<32x22xf32>
    %c0_38 = arith.constant 0 : index
    %c0_39 = arith.constant 0 : index
    %58 = vector.load %arg17[%c0_38, %c0_39] : memref<1x22xf32, #tpu.memory_space<vmem>>, vector<1x22xf32>
    %59 = vector.broadcast %58 : vector<1x22xf32> to vector<32x22xf32>
    %60 = arith.addf %57, %59 : vector<32x22xf32>
    %61 = arith.negf %60 : vector<32x22xf32>
    %62 = math.exp %61 : vector<32x22xf32>
    %cst_40 = arith.constant 1.000000e+00 : f32
    %63 = vector.broadcast %cst_40 : f32 to vector<32x22xf32>
    %64 = arith.addf %63, %62 : vector<32x22xf32>
    %65 = arith.divf %63, %64 : vector<32x22xf32>
    %c0_41 = arith.constant 0 : index
    %c0_42 = arith.constant 0 : index
    %66 = vector.load %arg5[%c0_41, %c0_42] : memref<16x32xf32, #tpu.memory_space<vmem>>, vector<16x32xf32>
    %cst_43 = arith.constant dense<0.000000e+00> : vector<16x22xf32>
    %67 = tpu.matmul %66, %65, %cst_43 {dimension_numbers = #tpu.dot_dimension_numbers<[1], [0], [0], [1], [0, 0, 1, 1], [], []>} : vector<16x32xf32>, vector<32x22xf32>, vector<16x22xf32> -> vector<16x22xf32>
    %c0_44 = arith.constant 0 : index
    %c0_45 = arith.constant 0 : index
    %68 = vector.load %arg18[%c0_44, %c0_45] : memref<22x9xf32, #tpu.memory_space<vmem>>, vector<22x9xf32>
    %cst_46 = arith.constant dense<0.000000e+00> : vector<16x9xf32>
    %69 = tpu.matmul %67, %68, %cst_46 {dimension_numbers = #tpu.dot_dimension_numbers<[1], [0], [0], [1], [0, 0, 1, 1], [], []>} : vector<16x22xf32>, vector<22x9xf32>, vector<16x9xf32> -> vector<16x9xf32>
    %c0_47 = arith.constant 0 : index
    %c0_48 = arith.constant 0 : index
    %70 = vector.load %arg19[%c0_47, %c0_48] : memref<1x9xf32, #tpu.memory_space<vmem>>, vector<1x9xf32>
    %71 = vector.broadcast %70 : vector<1x9xf32> to vector<16x9xf32>
    %72 = arith.addf %69, %71 : vector<16x9xf32>
    %73 = arith.negf %72 : vector<16x9xf32>
    %74 = math.exp %73 : vector<16x9xf32>
    %cst_49 = arith.constant 1.000000e+00 : f32
    %75 = vector.broadcast %cst_49 : f32 to vector<16x9xf32>
    %76 = arith.addf %75, %74 : vector<16x9xf32>
    %77 = arith.divf %75, %76 : vector<16x9xf32>
    %c0_50 = arith.constant 0 : index
    %c0_51 = arith.constant 0 : index
    %78 = vector.load %arg29[%c0_50, %c0_51] : memref<16x128xf32, #tpu.memory_space<vmem>>, vector<16x128xf32>
    %c0_52 = arith.constant 0 : index
    %c0_53 = arith.constant 0 : index
    %79 = vector.load %arg20[%c0_52, %c0_53] : memref<9x384xf32, #tpu.memory_space<vmem>>, vector<9x384xf32>
    %cst_54 = arith.constant dense<0.000000e+00> : vector<16x384xf32>
    %80 = tpu.matmul %77, %79, %cst_54 {dimension_numbers = #tpu.dot_dimension_numbers<[1], [0], [0], [1], [0, 0, 1, 1], [], []>} : vector<16x9xf32>, vector<9x384xf32>, vector<16x384xf32> -> vector<16x384xf32>
    %c0_55 = arith.constant 0 : index
    %c0_56 = arith.constant 0 : index
    %81 = vector.load %arg21[%c0_55, %c0_56] : memref<1x384xf32, #tpu.memory_space<vmem>>, vector<1x384xf32>
    %82 = vector.broadcast %3 : vector<16x1xf32> to vector<16x384xf32>
    %83 = vector.broadcast %81 : vector<1x384xf32> to vector<16x384xf32>
    %84 = arith.mulf %82, %83 : vector<16x384xf32>
    %85 = arith.addf %80, %84 : vector<16x384xf32>
    %c0_57 = arith.constant 0 : index
    %c0_58 = arith.constant 0 : index
    %86 = vector.load %arg22[%c0_57, %c0_58] : memref<7x384xf32, #tpu.memory_space<vmem>>, vector<7x384xf32>
    %cst_59 = arith.constant dense<0.000000e+00> : vector<16x384xf32>
    %87 = tpu.matmul %5, %86, %cst_59 {dimension_numbers = #tpu.dot_dimension_numbers<[1], [0], [0], [1], [0, 0, 1, 1], [], []>} : vector<16x7xf32>, vector<7x384xf32>, vector<16x384xf32> -> vector<16x384xf32>
    %88 = arith.addf %85, %87 : vector<16x384xf32>
    %c0_60 = arith.constant 0 : index
    %c0_61 = arith.constant 0 : index
    %89 = vector.load %arg23[%c0_60, %c0_61] : memref<1x384xf32, #tpu.memory_space<vmem>>, vector<1x384xf32>
    %90 = vector.broadcast %89 : vector<1x384xf32> to vector<16x384xf32>
    %91 = arith.addf %88, %90 : vector<16x384xf32>
    %c0_62 = arith.constant 0 : index
    %c0_63 = arith.constant 0 : index
    %92 = vector.load %arg24[%c0_62, %c0_63] : memref<128x384xf32, #tpu.memory_space<vmem>>, vector<128x384xf32>
    %cst_64 = arith.constant dense<0.000000e+00> : vector<16x384xf32>
    %93 = tpu.matmul %78, %92, %cst_64 {dimension_numbers = #tpu.dot_dimension_numbers<[1], [0], [0], [1], [0, 0, 1, 1], [], []>} : vector<16x128xf32>, vector<128x384xf32>, vector<16x384xf32> -> vector<16x384xf32>
    %c0_65 = arith.constant 0 : index
    %c0_66 = arith.constant 0 : index
    %94 = vector.load %arg25[%c0_65, %c0_66] : memref<1x384xf32, #tpu.memory_space<vmem>>, vector<1x384xf32>
    %95 = vector.broadcast %94 : vector<1x384xf32> to vector<16x384xf32>
    %96 = arith.addf %93, %95 : vector<16x384xf32>
    %97 = vector.extract_strided_slice %91 {offsets = [0, 0], sizes = [16, 128], strides = [1, 1]} : vector<16x384xf32> to vector<16x128xf32>
    %98 = vector.extract_strided_slice %96 {offsets = [0, 0], sizes = [16, 128], strides = [1, 1]} : vector<16x384xf32> to vector<16x128xf32>
    %99 = arith.addf %97, %98 : vector<16x128xf32>
    %100 = arith.negf %99 : vector<16x128xf32>
    %101 = math.exp %100 : vector<16x128xf32>
    %cst_67 = arith.constant 1.000000e+00 : f32
    %102 = vector.broadcast %cst_67 : f32 to vector<16x128xf32>
    %103 = arith.addf %102, %101 : vector<16x128xf32>
    %104 = arith.divf %102, %103 : vector<16x128xf32>
    %105 = vector.extract_strided_slice %91 {offsets = [0, 128], sizes = [16, 128], strides = [1, 1]} : vector<16x384xf32> to vector<16x128xf32>
    %106 = vector.extract_strided_slice %96 {offsets = [0, 128], sizes = [16, 128], strides = [1, 1]} : vector<16x384xf32> to vector<16x128xf32>
    %107 = arith.addf %105, %106 : vector<16x128xf32>
    %108 = arith.negf %107 : vector<16x128xf32>
    %109 = math.exp %108 : vector<16x128xf32>
    %cst_68 = arith.constant 1.000000e+00 : f32
    %110 = vector.broadcast %cst_68 : f32 to vector<16x128xf32>
    %111 = arith.addf %110, %109 : vector<16x128xf32>
    %112 = arith.divf %110, %111 : vector<16x128xf32>
    %113 = vector.extract_strided_slice %91 {offsets = [0, 256], sizes = [16, 128], strides = [1, 1]} : vector<16x384xf32> to vector<16x128xf32>
    %114 = vector.extract_strided_slice %96 {offsets = [0, 256], sizes = [16, 128], strides = [1, 1]} : vector<16x384xf32> to vector<16x128xf32>
    %115 = arith.mulf %104, %114 : vector<16x128xf32>
    %116 = arith.addf %113, %115 : vector<16x128xf32>
    %117 = math.tanh %116 : vector<16x128xf32>
    %118 = arith.subf %78, %117 : vector<16x128xf32>
    %119 = arith.mulf %112, %118 : vector<16x128xf32>
    %120 = arith.addf %117, %119 : vector<16x128xf32>
    %c0_69 = arith.constant 0 : index
    %c0_70 = arith.constant 0 : index
    %121 = vector.load %arg29[%c0_69, %c0_70] : memref<16x128xf32, #tpu.memory_space<vmem>>, vector<16x128xf32>
    tpu.vector_store %arg29[%c0_69, %c0_70], %120 {strides = array<i32>} : memref<16x128xf32, #tpu.memory_space<vmem>>, vector<16x128xf32>,
    %c0_71 = arith.constant 0 : index
    %c0_72 = arith.constant 0 : index
    %122 = vector.load %arg26[%c0_71, %c0_72] : memref<1x128xf32, #tpu.memory_space<vmem>>, vector<1x128xf32>
    %123 = vector.broadcast %122 : vector<1x128xf32> to vector<16x128xf32>
    %124 = arith.mulf %120, %123 : vector<16x128xf32>
    %cst_73 = arith.constant dense<0.000000e+00> : vector<16xf32>
    %125 = vector.multi_reduction <add>, %124, %cst_73 [1] : vector<16x128xf32> to vector<16xf32>
    %126 = vector.shape_cast %125 : vector<16xf32> to vector<16x1xf32>
    %c0_74 = arith.constant 0 : index
    %c0_75 = arith.constant 0 : index
    %127 = vector.load %arg27[%c0_74, %c0_75] : memref<1x1xf32, #tpu.memory_space<vmem>>, vector<1x1xf32>
    %128 = vector.broadcast %127 : vector<1x1xf32> to vector<16x1xf32>
    %129 = arith.addf %126, %128 : vector<16x1xf32>
    %c0_76 = arith.constant 0 : index
    %c0_77 = arith.constant 0 : index
    %130 = vector.load %arg30[%c0_76, %c0_77] : memref<16x1xf32, #tpu.memory_space<vmem>>, vector<16x1xf32>
    tpu.vector_store %arg30[%c0_76, %c0_77], %129 {strides = array<i32>} : memref<16x1xf32, #tpu.memory_space<vmem>>, vector<16x1xf32>,
    %131 = vector.shape_cast %120 : vector<16x128xf32> to vector<2x8x128xf32>
    %132 = vector.shape_cast %122 : vector<1x128xf32> to vector<1x1x128xf32>
    %133 = vector.broadcast %132 : vector<1x1x128xf32> to vector<2x8x128xf32>
    %134 = arith.mulf %131, %133 : vector<2x8x128xf32>
    %cst_78 = arith.constant dense<0.000000e+00> : vector<2x8xf32>
    %135 = vector.multi_reduction <add>, %134, %cst_78 [2] : vector<2x8x128xf32> to vector<2x8xf32>
    %c0_79 = arith.constant 0 : index
    %c0_80 = arith.constant 0 : index
    %136 = vector.load %arg27[%c0_79, %c0_80] : memref<1x1xf32, #tpu.memory_space<vmem>>, vector<1x1xf32>
    %137 = vector.broadcast %136 : vector<1x1xf32> to vector<2x8xf32>
    %138 = arith.addf %135, %137 : vector<2x8xf32>
    %c0_81 = arith.constant 0 : index
    %c0_82 = arith.constant 0 : index
    %c0_83 = arith.constant 0 : index
    %139 = vector.load %arg28[%c0_81, %c0_82, %c0_83] : memref<1x2x8xf32, #tpu.memory_space<vmem>>, vector<1x2x8xf32>
    %140 = vector.shape_cast %139 : vector<1x2x8xf32> to vector<2x8xf32>
    %141 = vector.shape_cast %138 : vector<2x8xf32> to vector<1x2x8xf32>
    tpu.vector_store %arg28[%c0_81, %c0_82, %c0_83], %141 {strides = array<i32>} : memref<1x2x8xf32, #tpu.memory_space<vmem>>, vector<1x2x8xf32>,
    return
  }
  func.func @transform_0(%arg0: i32) -> (i32, i32) {
    %c0_i32 = arith.constant 0 : i32
    %c0_i32_0 = arith.constant 0 : i32
    %c0_i32_1 = arith.constant 0 : i32
    return %c0_i32, %c0_i32_0 : i32, i32
  }
  func.func @transform_1(%arg0: i32) -> (i32, i32, i32) {
    %c0_i32 = arith.constant 0 : i32
    %c0_i32_0 = arith.constant 0 : i32
    %c0_i32_1 = arith.constant 0 : i32
    return %arg0, %c0_i32, %c0_i32_0 : i32, i32, i32
  }
  func.func @transform_2(%arg0: i32) -> (i32, i32) {
    %c0_i32 = arith.constant 0 : i32
    %c0_i32_0 = arith.constant 0 : i32
    %c0_i32_1 = arith.constant 0 : i32
    return %c0_i32, %c0_i32_0 : i32, i32
  }
  func.func @transform_3(%arg0: i32) -> (i32, i32) {
    %c0_i32 = arith.constant 0 : i32
    %c0_i32_0 = arith.constant 0 : i32
    %c0_i32_1 = arith.constant 0 : i32
    return %c0_i32, %c0_i32_0 : i32, i32
  }
  func.func @transform_4(%arg0: i32) -> (i32, i32) {
    %c0_i32 = arith.constant 0 : i32
    %c0_i32_0 = arith.constant 0 : i32
    %c0_i32_1 = arith.constant 0 : i32
    return %c0_i32, %c0_i32_0 : i32, i32
  }
  func.func @transform_5(%arg0: i32) -> (i32, i32) {
    %c0_i32 = arith.constant 0 : i32
    %c0_i32_0 = arith.constant 0 : i32
    %c0_i32_1 = arith.constant 0 : i32
    return %c0_i32, %c0_i32_0 : i32, i32
  }
  func.func @transform_6(%arg0: i32) -> (i32, i32) {
    %c0_i32 = arith.constant 0 : i32
    %c0_i32_0 = arith.constant 0 : i32
    %c0_i32_1 = arith.constant 0 : i32
    return %c0_i32, %c0_i32_0 : i32, i32
  }
  func.func @transform_7(%arg0: i32) -> (i32, i32) {
    %c0_i32 = arith.constant 0 : i32
    %c0_i32_0 = arith.constant 0 : i32
    %c0_i32_1 = arith.constant 0 : i32
    return %c0_i32, %c0_i32_0 : i32, i32
  }
  func.func @transform_8(%arg0: i32) -> (i32, i32) {
    %c0_i32 = arith.constant 0 : i32
    %c0_i32_0 = arith.constant 0 : i32
    %c0_i32_1 = arith.constant 0 : i32
    return %c0_i32, %c0_i32_0 : i32, i32
  }
  func.func @transform_9(%arg0: i32) -> (i32, i32) {
    %c0_i32 = arith.constant 0 : i32
    %c0_i32_0 = arith.constant 0 : i32
    %c0_i32_1 = arith.constant 0 : i32
    return %c0_i32, %c0_i32_0 : i32, i32
  }
  func.func @transform_10(%arg0: i32) -> (i32, i32) {
    %c0_i32 = arith.constant 0 : i32
    %c0_i32_0 = arith.constant 0 : i32
    %c0_i32_1 = arith.constant 0 : i32
    return %c0_i32, %c0_i32_0 : i32, i32
  }
  func.func @transform_11(%arg0: i32) -> (i32, i32) {
    %c0_i32 = arith.constant 0 : i32
    %c0_i32_0 = arith.constant 0 : i32
    %c0_i32_1 = arith.constant 0 : i32
    return %c0_i32, %c0_i32_0 : i32, i32
  }
  func.func @transform_12(%arg0: i32) -> (i32, i32) {
    %c0_i32 = arith.constant 0 : i32
    %c0_i32_0 = arith.constant 0 : i32
    %c0_i32_1 = arith.constant 0 : i32
    return %c0_i32, %c0_i32_0 : i32, i32
  }
  func.func @transform_13(%arg0: i32) -> (i32, i32) {
    %c0_i32 = arith.constant 0 : i32
    %c0_i32_0 = arith.constant 0 : i32
    %c0_i32_1 = arith.constant 0 : i32
    return %c0_i32, %c0_i32_0 : i32, i32
  }
  func.func @transform_14(%arg0: i32) -> (i32, i32) {
    %c0_i32 = arith.constant 0 : i32
    %c0_i32_0 = arith.constant 0 : i32
    %c0_i32_1 = arith.constant 0 : i32
    return %c0_i32, %c0_i32_0 : i32, i32
  }
  func.func @transform_15(%arg0: i32) -> (i32, i32) {
    %c0_i32 = arith.constant 0 : i32
    %c0_i32_0 = arith.constant 0 : i32
    %c0_i32_1 = arith.constant 0 : i32
    return %c0_i32, %c0_i32_0 : i32, i32
  }
  func.func @transform_16(%arg0: i32) -> (i32, i32) {
    %c0_i32 = arith.constant 0 : i32
    %c0_i32_0 = arith.constant 0 : i32
    %c0_i32_1 = arith.constant 0 : i32
    return %c0_i32, %c0_i32_0 : i32, i32
  }
  func.func @transform_17(%arg0: i32) -> (i32, i32) {
    %c0_i32 = arith.constant 0 : i32
    %c0_i32_0 = arith.constant 0 : i32
    %c0_i32_1 = arith.constant 0 : i32
    return %c0_i32, %c0_i32_0 : i32, i32
  }
  func.func @transform_18(%arg0: i32) -> (i32, i32) {
    %c0_i32 = arith.constant 0 : i32
    %c0_i32_0 = arith.constant 0 : i32
    %c0_i32_1 = arith.constant 0 : i32
    return %c0_i32, %c0_i32_0 : i32, i32
  }
  func.func @transform_19(%arg0: i32) -> (i32, i32) {
    %c0_i32 = arith.constant 0 : i32
    %c0_i32_0 = arith.constant 0 : i32
    %c0_i32_1 = arith.constant 0 : i32
    return %c0_i32, %c0_i32_0 : i32, i32
  }
  func.func @transform_20(%arg0: i32) -> (i32, i32) {
    %c0_i32 = arith.constant 0 : i32
    %c0_i32_0 = arith.constant 0 : i32
    %c0_i32_1 = arith.constant 0 : i32
    return %c0_i32, %c0_i32_0 : i32, i32
  }
  func.func @transform_21(%arg0: i32) -> (i32, i32) {
    %c0_i32 = arith.constant 0 : i32
    %c0_i32_0 = arith.constant 0 : i32
    %c0_i32_1 = arith.constant 0 : i32
    return %c0_i32, %c0_i32_0 : i32, i32
  }
  func.func @transform_22(%arg0: i32) -> (i32, i32) {
    %c0_i32 = arith.constant 0 : i32
    %c0_i32_0 = arith.constant 0 : i32
    %c0_i32_1 = arith.constant 0 : i32
    return %c0_i32, %c0_i32_0 : i32, i32
  }
  func.func @transform_23(%arg0: i32) -> (i32, i32) {
    %c0_i32 = arith.constant 0 : i32
    %c0_i32_0 = arith.constant 0 : i32
    %c0_i32_1 = arith.constant 0 : i32
    return %c0_i32, %c0_i32_0 : i32, i32
  }
  func.func @transform_24(%arg0: i32) -> (i32, i32) {
    %c0_i32 = arith.constant 0 : i32
    %c0_i32_0 = arith.constant 0 : i32
    %c0_i32_1 = arith.constant 0 : i32
    return %c0_i32, %c0_i32_0 : i32, i32
  }
  func.func @transform_25(%arg0: i32) -> (i32, i32) {
    %c0_i32 = arith.constant 0 : i32
    %c0_i32_0 = arith.constant 0 : i32
    %c0_i32_1 = arith.constant 0 : i32
    return %c0_i32, %c0_i32_0 : i32, i32
  }
  func.func @transform_26(%arg0: i32) -> (i32, i32) {
    %c0_i32 = arith.constant 0 : i32
    %c0_i32_0 = arith.constant 0 : i32
    %c0_i32_1 = arith.constant 0 : i32
    return %c0_i32, %c0_i32_0 : i32, i32
  }
  func.func @transform_27(%arg0: i32) -> (i32, i32, i32) {
    %c0_i32 = arith.constant 0 : i32
    %c0_i32_0 = arith.constant 0 : i32
    %c0_i32_1 = arith.constant 0 : i32
    return %arg0, %c0_i32, %c0_i32_0 : i32, i32, i32
  }
}

</mosaic_0001>

<llo_original>
// kernel: tpu_custom_call.1
$region0: #{tpu_custom_call.1}
  #allocation0 [shape = 'u32[]', space=smem, size = 0x4, offset = 0x4, fixed_abs, tag = 'smem constant byte address 0x4 - core index']
  #allocation1 [shape = 'u32[144,128]{1,0:T(1,128)}', space=vmem, size = 0x12000, scoped, tag = 'internal scratch']
  #allocation2 [shape = 'f32[16,128]{1,0:T(8,128)}', space=vmem, size = 0x2000, scoped, tag = 'scratch operand']
  #allocation3 [shape = 'f32[16,1]{1,0:T(8,128)}', space=vmem, size = 0x2000, scoped, tag = 'scratch operand']
  #allocation4 [shape = 'f32[1,1]{1,0:T(1,128)S(1)}', space=vmem, size = 0x200, scoped, tag = 'scoped memory for tpu_custom_call.1']
  %s0 = inlined_call_operand.vmem [shape: f32[16,1], index: 0, kind: input, shape index: {}]
  %s1 = inlined_call_operand.vmem [shape: f32[3,16,7], index: 1, kind: input, shape index: {}]
  %s2 = inlined_call_operand.vmem [shape: f32[32,16], index: 2, kind: input, shape index: {}]
  %s3 = inlined_call_operand.vmem [shape: f32[32,16], index: 3, kind: input, shape index: {}]
  %s4 = inlined_call_operand.hbm [shape: f32[16,32], index: 4, kind: input, shape index: {}]
  %s5 = inlined_call_operand.vmem [shape: f32[32,1], index: 5, kind: input, shape index: {}]
  %s6 = inlined_call_operand.vmem [shape: f32[32,1], index: 6, kind: input, shape index: {}]
  %s7 = inlined_call_operand.vmem [shape: f32[1,2], index: 7, kind: input, shape index: {}]
  %s8 = inlined_call_operand.hbm [shape: f32[1,2], index: 8, kind: input, shape index: {}]
  %s9 = inlined_call_operand.hbm [shape: f32[1,32], index: 9, kind: input, shape index: {}]
  %s10 = inlined_call_operand.hbm [shape: f32[7,32], index: 10, kind: input, shape index: {}]
  %s11 = inlined_call_operand.hbm [shape: f32[1,32], index: 11, kind: input, shape index: {}]
  %s12 = inlined_call_operand.hbm [shape: f32[7,32], index: 12, kind: input, shape index: {}]
  %s13 = inlined_call_operand.hbm [shape: f32[1,32], index: 13, kind: input, shape index: {}]
  %s14 = inlined_call_operand.hbm [shape: f32[32,32], index: 14, kind: input, shape index: {}]
  %s15 = inlined_call_operand.vmem [shape: f32[32,22], index: 15, kind: input, shape index: {}]
  %s16 = inlined_call_operand.hbm [shape: f32[1,22], index: 16, kind: input, shape index: {}]
  %s17 = inlined_call_operand.vmem [shape: f32[22,9], index: 17, kind: input, shape index: {}]
  %s18 = inlined_call_operand.hbm [shape: f32[1,9], index: 18, kind: input, shape index: {}]
  %s19 = inlined_call_operand.hbm [shape: f32[9,384], index: 19, kind: input, shape index: {}]
  %s20 = inlined_call_operand.vmem [shape: f32[1,384], index: 20, kind: input, shape index: {}]
  %s21 = inlined_call_operand.hbm [shape: f32[7,384], index: 21, kind: input, shape index: {}]
  %s22 = inlined_call_operand.vmem [shape: f32[1,384], index: 22, kind: input, shape index: {}]
  %s23 = inlined_call_operand.vmem [shape: f32[128,384], index: 23, kind: input, shape index: {}]
  %s24 = inlined_call_operand.hbm [shape: f32[1,384], index: 24, kind: input, shape index: {}]
  %s25 = inlined_call_operand.hbm [shape: f32[1,128], index: 25, kind: input, shape index: {}]
  %s26 = inlined_call_operand.<no memory space> [shape: f32[1,1], index: 26, kind: input, shape index: {}]
  %s27 = inlined_call_operand.hbm [shape: f32[3,2,8], index: 27, kind: output, shape index: {}]
  %s28 = sld [smem:[#allocation0]]
  $region201: #{tpu_custom_call.1} parent=0
    _
  %s30 = ssub.s32 1, %s28
  %s31 = scalar_select 0, %s30, %s28
  %v32 = vstv %s26
  %33 = vst [vmem:[#allocation4] sm:$0x1] %v32
  $region1: #{tpu_custom_call.1} parent=0
    #allocation5 [shape = 'u8[8192]{0}', space=vmem, size = 0x2000, scoped, tag = 'input window, operand 4, single buffered']
    #allocation6 [shape = 's32[2]{0}', space=sflag, size = 0x8, scoped, tag = 'scoped memory for tpu_custom_call.1']
    #allocation7 [shape = 's32[2]{0}', space=sflag, size = 0x8, scoped, tag = 'scoped memory for tpu_custom_call.1']
    #allocation8 [shape = 'u8[512]{0}', space=vmem, size = 0x400, scoped, tag = 'input window, operand 8, single buffered']
    #allocation9 [shape = 's32[1]{0}', space=sflag, size = 0x4, scoped, tag = 'scoped memory for tpu_custom_call.1']
    #allocation10 [shape = 'u8[512]{0}', space=vmem, size = 0x400, scoped, tag = 'input window, operand 9, single buffered']
    #allocation11 [shape = 'u8[4096]{0}', space=vmem, size = 0x1000, scoped, tag = 'input window, operand 10, single buffered']
    #allocation12 [shape = 's32[1]{0}', space=sflag, size = 0x4, scoped, tag = 'scoped memory for tpu_custom_call.1']
    #allocation13 [shape = 'u8[512]{0}', space=vmem, size = 0x400, scoped, tag = 'input window, operand 11, single buffered']
    #allocation14 [shape = 'u8[4096]{0}', space=vmem, size = 0x1000, scoped, tag = 'input window, operand 12, single buffered']
    #allocation15 [shape = 's32[1]{0}', space=sflag, size = 0x4, scoped, tag = 'scoped memory for tpu_custom_call.1']
    #allocation16 [shape = 'u8[512]{0}', space=vmem, size = 0x400, scoped, tag = 'input window, operand 13, single buffered']
    #allocation17 [shape = 'u8[16384]{0}', space=vmem, size = 0x4000, scoped, tag = 'input window, operand 14, single buffered']
    #allocation18 [shape = 's32[1]{0}', space=sflag, size = 0x4, scoped, tag = 'scoped memory for tpu_custom_call.1']
    #allocation19 [shape = 'u8[512]{0}', space=vmem, size = 0x400, scoped, tag = 'input window, operand 16, single buffered']
    #allocation20 [shape = 'u8[512]{0}', space=vmem, size = 0x400, scoped, tag = 'input window, operand 18, single buffered']
    #allocation21 [shape = 's32[1]{0}', space=sflag, size = 0x4, scoped, tag = 'scoped memory for tpu_custom_call.1']
    #allocation22 [shape = 'u8[24576]{0}', space=vmem, size = 0x6000, scoped, tag = 'input window, operand 19, single buffered']
    #allocation23 [shape = 'u8[12288]{0}', space=vmem, size = 0x3000, scoped, tag = 'input window, operand 21, single buffered']
    #allocation24 [shape = 's32[1]{0}', space=sflag, size = 0x4, scoped, tag = 'scoped memory for tpu_custom_call.1']
    #allocation25 [shape = 'u8[1536]{0}', space=vmem, size = 0x800, scoped, tag = 'input window, operand 24, single buffered']
    #allocation26 [shape = 'u8[512]{0}', space=vmem, size = 0x400, scoped, tag = 'input window, operand 25, single buffered']
    #allocation27 [shape = 's32[1]{0}', space=sflag, size = 0x4, scoped, tag = 'scoped memory for tpu_custom_call.1']
    #allocation28 [shape = 'u8[2048]{0}', space=vmem, size = 0x800, scoped, tag = 'output window, operand 0']
    %34 = vsyncpa [#allocation6], 0
    %35 = vsyncpa [#allocation9], 0
    %36 = vsyncpa [#allocation12], 0
    %37 = vsyncpa [#allocation15], 0
    %38 = vsyncpa [#allocation18], 0
    %39 = vsyncpa [#allocation21], 0
    %40 = vsyncpa [#allocation24], 0
    %41 = vsyncpa [#allocation27], 0
    %42 = vsyncpa [#allocation7], 0
    %s43 = scalar_lea.sflag [#allocation7], 1
    %44 = vsyncpa %s43, 0
    loop: start=0, step=1, limit=5
    $region2: #{tpu_custom_call.1} parent=1 // loop_pre_header
      _
    $region3: #{tpu_custom_call.1} parent=1 // loop_header
      %s46 = sphi 0, %s50
      %p47 = scmp.ge.s32.totalorder %s46, 5
      %s54 = sphi 0, %s54
      %s56 = sphi 0, %s54
      %s57 = sphi 0, %s56
      %s71 = sphi 0, %s57
      %s77 = sphi 0, %s79
      %s80 = sphi 0, %s77
      %s81 = sphi 0, %s80
      %s97 = sphi 0, %s81
      %s101 = sphi 0, %s101
      %s103 = sphi 0, %s101
      %s104 = sphi 0, %s103
      %s118 = sphi 0, %s104
      %s122 = sphi 0, %s122
      %s124 = sphi 0, %s122
      %s125 = sphi 0, %s124
      %s139 = sphi 0, %s125
      %s143 = sphi 0, %s143
      %s145 = sphi 0, %s143
      %s146 = sphi 0, %s145
      %s160 = sphi 0, %s146
      %s164 = sphi 0, %s164
      %s166 = sphi 0, %s164
      %s167 = sphi 0, %s166
      %s181 = sphi 0, %s167
      %s185 = sphi 0, %s185
      %s187 = sphi 0, %s185
      %s188 = sphi 0, %s187
      %s202 = sphi 0, %s188
      %s206 = sphi 0, %s206
      %s208 = sphi 0, %s206
      %s209 = sphi 0, %s208
      %s223 = sphi 0, %s209
      %s227 = sphi 0, %s227
      %s229 = sphi 0, %s227
      %s230 = sphi 0, %s229
      %s244 = sphi 0, %s230
      %s248 = sphi 0, %s248
      %s250 = sphi 0, %s248
      %s251 = sphi 0, %s250
      %s265 = sphi 0, %s251
      %s269 = sphi 0, %s269
      %s271 = sphi 0, %s269
      %s272 = sphi 0, %s271
      %s286 = sphi 0, %s272
      %s290 = sphi 0, %s290
      %s292 = sphi 0, %s290
      %s293 = sphi 0, %s292
      %s307 = sphi 0, %s293
      %s311 = sphi 0, %s311
      %s313 = sphi 0, %s311
      %s314 = sphi 0, %s313
      %s328 = sphi 0, %s314
      %s332 = sphi 0, %s332
      %s334 = sphi 0, %s332
      %s335 = sphi 0, %s334
      %s349 = sphi 0, %s335
      %s353 = sphi 0, %s353
      %s355 = sphi 0, %s353
      %s356 = sphi 0, %s355
      %s370 = sphi 0, %s356
      %s374 = sphi 0, %s374
      %s376 = sphi 0, %s374
      %s377 = sphi 0, %s376
      %s391 = sphi 0, %s377
      %s395 = sphi 0, %s395
      %s397 = sphi 0, %s395
      %s398 = sphi 0, %s397
      %s412 = sphi 0, %s398
      %s416 = sphi 0, %s416
      %s418 = sphi 0, %s416
      %s419 = sphi 0, %s418
      %s433 = sphi 0, %s419
      %s437 = sphi 0, %s437
      %s439 = sphi 0, %s437
      %s440 = sphi 0, %s439
      %s454 = sphi 0, %s440
      %s458 = sphi 0, %s458
      %s460 = sphi 0, %s458
      %s461 = sphi 0, %s460
      %s475 = sphi 0, %s461
      %s479 = sphi 0, %s479
      %s481 = sphi 0, %s479
      %s482 = sphi 0, %s481
      %s496 = sphi 0, %s482
      %s500 = sphi 0, %s500
      %s502 = sphi 0, %s500
      %s503 = sphi 0, %s502
      %s517 = sphi 0, %s503
      %s521 = sphi 0, %s521
      %s523 = sphi 0, %s521
      %s524 = sphi 0, %s523
      %s538 = sphi 0, %s524
      %s542 = sphi 0, %s542
      %s544 = sphi 0, %s542
      %s545 = sphi 0, %s544
      %s559 = sphi 0, %s545
      %s563 = sphi 0, %s563
      %s565 = sphi 0, %s563
      %s566 = sphi 0, %s565
      %s580 = sphi 0, %s566
      %s584 = sphi 0, %s584
      %s586 = sphi 0, %s584
      %s587 = sphi 0, %s586
      %s601 = sphi 0, %s587
      %s605 = sphi 0, %s605
      %s607 = sphi 0, %s605
      %s608 = sphi 0, %s607
      %s622 = sphi 0, %s608
      %s628 = sphi 0, %s630
      %s631 = sphi 0, %s628
      %s632 = sphi 0, %s631
      %s648 = sphi 0, %s632
    $region4: #{tpu_custom_call.1} parent=1 // loop_header_branch
      %49 = sbr.rel (%p47) target = $region8
    $region5: #{tpu_custom_call.1} parent=1 // loop_body
      %s51 = ssub.s32 %s46, 1
      %s52 = ssub.s32 %s46, 2
      %s53 = sadd.s32 %s46, 1
      %s55 = sadd.s32 %s54, 1
      %p58 = scmp.eq.s32.totalorder %s46, 2
      %p59 = scmp.ne.s32.totalorder %s54, %s56
      %p60 = scmp.eq.s32.totalorder %s46, 0
      %p61 = por %p59, %p60
      %p62 = scmp.ne.s32.totalorder %s54, %s56
      %p63 = scmp.eq.s32.totalorder %s51, 2
      %p64 = por %p62, %p63
      %p65 = scmp.ne.s32.totalorder %s56, %s57
      %p66 = scmp.eq.s32.totalorder %s51, 0
      %p67 = por %p65, %p66
      %p68 = scmp.ne.s32.totalorder %s56, %s57
      %p69 = scmp.eq.s32.totalorder %s52, 2
      %p70 = por %p68, %p69
      %p72 = scmp.ne.s32.totalorder %s57, %s71
      %p73 = scmp.eq.s32.totalorder %s52, 0
      %p74 = por %p72, %p73
      %s75 = ssub.s32 %s46, %s53
      %p76 = scmp.eq.s32.totalorder %s75, 0
      %s78 = sadd.s32 %s77, 1
      %s79 = scalar_select %p76, %s77, %s78
      %p82 = pneg %p76
      %p83 = scmp.eq.s32.totalorder %s46, 2
      %p84 = por %p82, %p83
      %p85 = scmp.ne.s32.totalorder %s77, %s80
      %p86 = scmp.eq.s32.totalorder %s46, 0
      %p87 = por %p85, %p86
      %p88 = scmp.ne.s32.totalorder %s77, %s80
      %p89 = scmp.eq.s32.totalorder %s51, 2
      %p90 = por %p88, %p89
      %p91 = scmp.ne.s32.totalorder %s80, %s81
      %p92 = scmp.eq.s32.totalorder %s51, 0
      %p93 = por %p91, %p92
      %p94 = scmp.ne.s32.totalorder %s80, %s81
      %p95 = scmp.eq.s32.totalorder %s52, 2
      %p96 = por %p94, %p95
      %p98 = scmp.ne.s32.totalorder %s81, %s97
      %p99 = scmp.eq.s32.totalorder %s52, 0
      %p100 = por %p98, %p99
      %s102 = sadd.s32 %s101, 1
      %p105 = scmp.eq.s32.totalorder %s46, 2
      %p106 = scmp.ne.s32.totalorder %s101, %s103
      %p107 = scmp.eq.s32.totalorder %s46, 0
      %p108 = por %p106, %p107
      %p109 = scmp.ne.s32.totalorder %s101, %s103
      %p110 = scmp.eq.s32.totalorder %s51, 2
      %p111 = por %p109, %p110
      %p112 = scmp.ne.s32.totalorder %s103, %s104
      %p113 = scmp.eq.s32.totalorder %s51, 0
      %p114 = por %p112, %p113
      %p115 = scmp.ne.s32.totalorder %s103, %s104
      %p116 = scmp.eq.s32.totalorder %s52, 2
      %p117 = por %p115, %p116
      %p119 = scmp.ne.s32.totalorder %s104, %s118
      %p120 = scmp.eq.s32.totalorder %s52, 0
      %p121 = por %p119, %p120
      %s123 = sadd.s32 %s122, 1
      %p126 = scmp.eq.s32.totalorder %s46, 2
      %p127 = scmp.ne.s32.totalorder %s122, %s124
      %p128 = scmp.eq.s32.totalorder %s46, 0
      %p129 = por %p127, %p128
      %p130 = scmp.ne.s32.totalorder %s122, %s124
      %p131 = scmp.eq.s32.totalorder %s51, 2
      %p132 = por %p130, %p131
      %p133 = scmp.ne.s32.totalorder %s124, %s125
      %p134 = scmp.eq.s32.totalorder %s51, 0
      %p135 = por %p133, %p134
      %p136 = scmp.ne.s32.totalorder %s124, %s125
      %p137 = scmp.eq.s32.totalorder %s52, 2
      %p138 = por %p136, %p137
      %p140 = scmp.ne.s32.totalorder %s125, %s139
      %p141 = scmp.eq.s32.totalorder %s52, 0
      %p142 = por %p140, %p141
      %s144 = sadd.s32 %s143, 1
      %p147 = scmp.eq.s32.totalorder %s46, 2
      %p148 = scmp.ne.s32.totalorder %s143, %s145
      %p149 = scmp.eq.s32.totalorder %s46, 0
      %p150 = por %p148, %p149
      %p151 = scmp.ne.s32.totalorder %s143, %s145
      %p152 = scmp.eq.s32.totalorder %s51, 2
      %p153 = por %p151, %p152
      %p154 = scmp.ne.s32.totalorder %s145, %s146
      %p155 = scmp.eq.s32.totalorder %s51, 0
      %p156 = por %p154, %p155
      %p157 = scmp.ne.s32.totalorder %s145, %s146
      %p158 = scmp.eq.s32.totalorder %s52, 2
      %p159 = por %p157, %p158
      %p161 = scmp.ne.s32.totalorder %s146, %s160
      %p162 = scmp.eq.s32.totalorder %s52, 0
      %p163 = por %p161, %p162
      %s165 = sadd.s32 %s164, 1
      %p168 = scmp.eq.s32.totalorder %s46, 2
      %p169 = scmp.ne.s32.totalorder %s164, %s166
      %p170 = scmp.eq.s32.totalorder %s46, 0
      %p171 = por %p169, %p170
      %p172 = scmp.ne.s32.totalorder %s164, %s166
      %p173 = scmp.eq.s32.totalorder %s51, 2
      %p174 = por %p172, %p173
      %p175 = scmp.ne.s32.totalorder %s166, %s167
      %p176 = scmp.eq.s32.totalorder %s51, 0
      %p177 = por %p175, %p176
      %p178 = scmp.ne.s32.totalorder %s166, %s167
      %p179 = scmp.eq.s32.totalorder %s52, 2
      %p180 = por %p178, %p179
      %p182 = scmp.ne.s32.totalorder %s167, %s181
      %p183 = scmp.eq.s32.totalorder %s52, 0
      %p184 = por %p182, %p183
      %s186 = sadd.s32 %s185, 1
      %p189 = scmp.eq.s32.totalorder %s46, 2
      %p190 = scmp.ne.s32.totalorder %s185, %s187
      %p191 = scmp.eq.s32.totalorder %s46, 0
      %p192 = por %p190, %p191
      %p193 = scmp.ne.s32.totalorder %s185, %s187
      %p194 = scmp.eq.s32.totalorder %s51, 2
      %p195 = por %p193, %p194
      %p196 = scmp.ne.s32.totalorder %s187, %s188
      %p197 = scmp.eq.s32.totalorder %s51, 0
      %p198 = por %p196, %p197
      %p199 = scmp.ne.s32.totalorder %s187, %s188
      %p200 = scmp.eq.s32.totalorder %s52, 2
      %p201 = por %p199, %p200
      %p203 = scmp.ne.s32.totalorder %s188, %s202
      %p204 = scmp.eq.s32.totalorder %s52, 0
      %p205 = por %p203, %p204
      %s207 = sadd.s32 %s206, 1
      %p210 = scmp.eq.s32.totalorder %s46, 2
      %p211 = scmp.ne.s32.totalorder %s206, %s208
      %p212 = scmp.eq.s32.totalorder %s46, 0
      %p213 = por %p211, %p212
      %p214 = scmp.ne.s32.totalorder %s206, %s208
      %p215 = scmp.eq.s32.totalorder %s51, 2
      %p216 = por %p214, %p215
      %p217 = scmp.ne.s32.totalorder %s208, %s209
      %p218 = scmp.eq.s32.totalorder %s51, 0
      %p219 = por %p217, %p218
      %p220 = scmp.ne.s32.totalorder %s208, %s209
      %p221 = scmp.eq.s32.totalorder %s52, 2
      %p222 = por %p220, %p221
      %p224 = scmp.ne.s32.totalorder %s209, %s223
      %p225 = scmp.eq.s32.totalorder %s52, 0
      %p226 = por %p224, %p225
      %s228 = sadd.s32 %s227, 1
      %p231 = scmp.eq.s32.totalorder %s46, 2
      %p232 = scmp.ne.s32.totalorder %s227, %s229
      %p233 = scmp.eq.s32.totalorder %s46, 0
      %p234 = por %p232, %p233
      %p235 = scmp.ne.s32.totalorder %s227, %s229
      %p236 = scmp.eq.s32.totalorder %s51, 2
      %p237 = por %p235, %p236
      %p238 = scmp.ne.s32.totalorder %s229, %s230
      %p239 = scmp.eq.s32.totalorder %s51, 0
      %p240 = por %p238, %p239
      %p241 = scmp.ne.s32.totalorder %s229, %s230
      %p242 = scmp.eq.s32.totalorder %s52, 2
      %p243 = por %p241, %p242
      %p245 = scmp.ne.s32.totalorder %s230, %s244
      %p246 = scmp.eq.s32.totalorder %s52, 0
      %p247 = por %p245, %p246
      %s249 = sadd.s32 %s248, 1
      %p252 = scmp.eq.s32.totalorder %s46, 2
      %p253 = scmp.ne.s32.totalorder %s248, %s250
      %p254 = scmp.eq.s32.totalorder %s46, 0
      %p255 = por %p253, %p254
      %p256 = scmp.ne.s32.totalorder %s248, %s250
      %p257 = scmp.eq.s32.totalorder %s51, 2
      %p258 = por %p256, %p257
      %p259 = scmp.ne.s32.totalorder %s250, %s251
      %p260 = scmp.eq.s32.totalorder %s51, 0
      %p261 = por %p259, %p260
      %p262 = scmp.ne.s32.totalorder %s250, %s251
      %p263 = scmp.eq.s32.totalorder %s52, 2
      %p264 = por %p262, %p263
      %p266 = scmp.ne.s32.totalorder %s251, %s265
      %p267 = scmp.eq.s32.totalorder %s52, 0
      %p268 = por %p266, %p267
      %s270 = sadd.s32 %s269, 1
      %p273 = scmp.eq.s32.totalorder %s46, 2
      %p274 = scmp.ne.s32.totalorder %s269, %s271
      %p275 = scmp.eq.s32.totalorder %s46, 0
      %p276 = por %p274, %p275
      %p277 = scmp.ne.s32.totalorder %s269, %s271
      %p278 = scmp.eq.s32.totalorder %s51, 2
      %p279 = por %p277, %p278
      %p280 = scmp.ne.s32.totalorder %s271, %s272
      %p281 = scmp.eq.s32.totalorder %s51, 0
      %p282 = por %p280, %p281
      %p283 = scmp.ne.s32.totalorder %s271, %s272
      %p284 = scmp.eq.s32.totalorder %s52, 2
      %p285 = por %p283, %p284
      %p287 = scmp.ne.s32.totalorder %s272, %s286
      %p288 = scmp.eq.s32.totalorder %s52, 0
      %p289 = por %p287, %p288
      %s291 = sadd.s32 %s290, 1
      %p294 = scmp.eq.s32.totalorder %s46, 2
      %p295 = scmp.ne.s32.totalorder %s290, %s292
      %p296 = scmp.eq.s32.totalorder %s46, 0
      %p297 = por %p295, %p296
      %p298 = scmp.ne.s32.totalorder %s290, %s292
      %p299 = scmp.eq.s32.totalorder %s51, 2
      %p300 = por %p298, %p299
      %p301 = scmp.ne.s32.totalorder %s292, %s293
      %p302 = scmp.eq.s32.totalorder %s51, 0
      %p303 = por %p301, %p302
      %p304 = scmp.ne.s32.totalorder %s292, %s293
      %p305 = scmp.eq.s32.totalorder %s52, 2
      %p306 = por %p304, %p305
      %p308 = scmp.ne.s32.totalorder %s293, %s307
      %p309 = scmp.eq.s32.totalorder %s52, 0
      %p310 = por %p308, %p309
      %s312 = sadd.s32 %s311, 1
      %p315 = scmp.eq.s32.totalorder %s46, 2
      %p316 = scmp.ne.s32.totalorder %s311, %s313
      %p317 = scmp.eq.s32.totalorder %s46, 0
      %p318 = por %p316, %p317
      %p319 = scmp.ne.s32.totalorder %s311, %s313
      %p320 = scmp.eq.s32.totalorder %s51, 2
      %p321 = por %p319, %p320
      %p322 = scmp.ne.s32.totalorder %s313, %s314
      %p323 = scmp.eq.s32.totalorder %s51, 0
      %p324 = por %p322, %p323
      %p325 = scmp.ne.s32.totalorder %s313, %s314
      %p326 = scmp.eq.s32.totalorder %s52, 2
      %p327 = por %p325, %p326
      %p329 = scmp.ne.s32.totalorder %s314, %s328
      %p330 = scmp.eq.s32.totalorder %s52, 0
      %p331 = por %p329, %p330
      %s333 = sadd.s32 %s332, 1
      %p336 = scmp.eq.s32.totalorder %s46, 2
      %p337 = scmp.ne.s32.totalorder %s332, %s334
      %p338 = scmp.eq.s32.totalorder %s46, 0
      %p339 = por %p337, %p338
      %p340 = scmp.ne.s32.totalorder %s332, %s334
      %p341 = scmp.eq.s32.totalorder %s51, 2
      %p342 = por %p340, %p341
      %p343 = scmp.ne.s32.totalorder %s334, %s335
      %p344 = scmp.eq.s32.totalorder %s51, 0
      %p345 = por %p343, %p344
      %p346 = scmp.ne.s32.totalorder %s334, %s335
      %p347 = scmp.eq.s32.totalorder %s52, 2
      %p348 = por %p346, %p347
      %p350 = scmp.ne.s32.totalorder %s335, %s349
      %p351 = scmp.eq.s32.totalorder %s52, 0
      %p352 = por %p350, %p351
      %s354 = sadd.s32 %s353, 1
      %p357 = scmp.eq.s32.totalorder %s46, 2
      %p358 = scmp.ne.s32.totalorder %s353, %s355
      %p359 = scmp.eq.s32.totalorder %s46, 0
      %p360 = por %p358, %p359
      %p361 = scmp.ne.s32.totalorder %s353, %s355
      %p362 = scmp.eq.s32.totalorder %s51, 2
      %p363 = por %p361, %p362
      %p364 = scmp.ne.s32.totalorder %s355, %s356
      %p365 = scmp.eq.s32.totalorder %s51, 0
      %p366 = por %p364, %p365
      %p367 = scmp.ne.s32.totalorder %s355, %s356
      %p368 = scmp.eq.s32.totalorder %s52, 2
      %p369 = por %p367, %p368
      %p371 = scmp.ne.s32.totalorder %s356, %s370
      %p372 = scmp.eq.s32.totalorder %s52, 0
      %p373 = por %p371, %p372
      %s375 = sadd.s32 %s374, 1
      %p378 = scmp.eq.s32.totalorder %s46, 2
      %p379 = scmp.ne.s32.totalorder %s374, %s376
      %p380 = scmp.eq.s32.totalorder %s46, 0
      %p381 = por %p379, %p380
      %p382 = scmp.ne.s32.totalorder %s374, %s376
      %p383 = scmp.eq.s32.totalorder %s51, 2
      %p384 = por %p382, %p383
      %p385 = scmp.ne.s32.totalorder %s376, %s377
      %p386 = scmp.eq.s32.totalorder %s51, 0
      %p387 = por %p385, %p386
      %p388 = scmp.ne.s32.totalorder %s376, %s377
      %p389 = scmp.eq.s32.totalorder %s52, 2
      %p390 = por %p388, %p389
      %p392 = scmp.ne.s32.totalorder %s377, %s391
      %p393 = scmp.eq.s32.totalorder %s52, 0
      %p394 = por %p392, %p393
      %s396 = sadd.s32 %s395, 1
      %p399 = scmp.eq.s32.totalorder %s46, 2
      %p400 = scmp.ne.s32.totalorder %s395, %s397
      %p401 = scmp.eq.s32.totalorder %s46, 0
      %p402 = por %p400, %p401
      %p403 = scmp.ne.s32.totalorder %s395, %s397
      %p404 = scmp.eq.s32.totalorder %s51, 2
      %p405 = por %p403, %p404
      %p406 = scmp.ne.s32.totalorder %s397, %s398
      %p407 = scmp.eq.s32.totalorder %s51, 0
      %p408 = por %p406, %p407
      %p409 = scmp.ne.s32.totalorder %s397, %s398
      %p410 = scmp.eq.s32.totalorder %s52, 2
      %p411 = por %p409, %p410
      %p413 = scmp.ne.s32.totalorder %s398, %s412
      %p414 = scmp.eq.s32.totalorder %s52, 0
      %p415 = por %p413, %p414
      %s417 = sadd.s32 %s416, 1
      %p420 = scmp.eq.s32.totalorder %s46, 2
      %p421 = scmp.ne.s32.totalorder %s416, %s418
      %p422 = scmp.eq.s32.totalorder %s46, 0
      %p423 = por %p421, %p422
      %p424 = scmp.ne.s32.totalorder %s416, %s418
      %p425 = scmp.eq.s32.totalorder %s51, 2
      %p426 = por %p424, %p425
      %p427 = scmp.ne.s32.totalorder %s418, %s419
      %p428 = scmp.eq.s32.totalorder %s51, 0
      %p429 = por %p427, %p428
      %p430 = scmp.ne.s32.totalorder %s418, %s419
      %p431 = scmp.eq.s32.totalorder %s52, 2
      %p432 = por %p430, %p431
      %p434 = scmp.ne.s32.totalorder %s419, %s433
      %p435 = scmp.eq.s32.totalorder %s52, 0
      %p436 = por %p434, %p435
      %s438 = sadd.s32 %s437, 1
      %p441 = scmp.eq.s32.totalorder %s46, 2
      %p442 = scmp.ne.s32.totalorder %s437, %s439
      %p443 = scmp.eq.s32.totalorder %s46, 0
      %p444 = por %p442, %p443
      %p445 = scmp.ne.s32.totalorder %s437, %s439
      %p446 = scmp.eq.s32.totalorder %s51, 2
      %p447 = por %p445, %p446
      %p448 = scmp.ne.s32.totalorder %s439, %s440
      %p449 = scmp.eq.s32.totalorder %s51, 0
      %p450 = por %p448, %p449
      %p451 = scmp.ne.s32.totalorder %s439, %s440
      %p452 = scmp.eq.s32.totalorder %s52, 2
      %p453 = por %p451, %p452
      %p455 = scmp.ne.s32.totalorder %s440, %s454
      %p456 = scmp.eq.s32.totalorder %s52, 0
      %p457 = por %p455, %p456
      %s459 = sadd.s32 %s458, 1
      %p462 = scmp.eq.s32.totalorder %s46, 2
      %p463 = scmp.ne.s32.totalorder %s458, %s460
      %p464 = scmp.eq.s32.totalorder %s46, 0
      %p465 = por %p463, %p464
      %p466 = scmp.ne.s32.totalorder %s458, %s460
      %p467 = scmp.eq.s32.totalorder %s51, 2
      %p468 = por %p466, %p467
      %p469 = scmp.ne.s32.totalorder %s460, %s461
      %p470 = scmp.eq.s32.totalorder %s51, 0
      %p471 = por %p469, %p470
      %p472 = scmp.ne.s32.totalorder %s460, %s461
      %p473 = scmp.eq.s32.totalorder %s52, 2
      %p474 = por %p472, %p473
      %p476 = scmp.ne.s32.totalorder %s461, %s475
      %p477 = scmp.eq.s32.totalorder %s52, 0
      %p478 = por %p476, %p477
      %s480 = sadd.s32 %s479, 1
      %p483 = scmp.eq.s32.totalorder %s46, 2
      %p484 = scmp.ne.s32.totalorder %s479, %s481
      %p485 = scmp.eq.s32.totalorder %s46, 0
      %p486 = por %p484, %p485
      %p487 = scmp.ne.s32.totalorder %s479, %s481
      %p488 = scmp.eq.s32.totalorder %s51, 2
      %p489 = por %p487, %p488
      %p490 = scmp.ne.s32.totalorder %s481, %s482
      %p491 = scmp.eq.s32.totalorder %s51, 0
      %p492 = por %p490, %p491
      %p493 = scmp.ne.s32.totalorder %s481, %s482
      %p494 = scmp.eq.s32.totalorder %s52, 2
      %p495 = por %p493, %p494
      %p497 = scmp.ne.s32.totalorder %s482, %s496
      %p498 = scmp.eq.s32.totalorder %s52, 0
      %p499 = por %p497, %p498
      %s501 = sadd.s32 %s500, 1
      %p504 = scmp.eq.s32.totalorder %s46, 2
      %p505 = scmp.ne.s32.totalorder %s500, %s502
      %p506 = scmp.eq.s32.totalorder %s46, 0
      %p507 = por %p505, %p506
      %p508 = scmp.ne.s32.totalorder %s500, %s502
      %p509 = scmp.eq.s32.totalorder %s51, 2
      %p510 = por %p508, %p509
      %p511 = scmp.ne.s32.totalorder %s502, %s503
      %p512 = scmp.eq.s32.totalorder %s51, 0
      %p513 = por %p511, %p512
      %p514 = scmp.ne.s32.totalorder %s502, %s503
      %p515 = scmp.eq.s32.totalorder %s52, 2
      %p516 = por %p514, %p515
      %p518 = scmp.ne.s32.totalorder %s503, %s517
      %p519 = scmp.eq.s32.totalorder %s52, 0
      %p520 = por %p518, %p519
      %s522 = sadd.s32 %s521, 1
      %p525 = scmp.eq.s32.totalorder %s46, 2
      %p526 = scmp.ne.s32.totalorder %s521, %s523
      %p527 = scmp.eq.s32.totalorder %s46, 0
      %p528 = por %p526, %p527
      %p529 = scmp.ne.s32.totalorder %s521, %s523
      %p530 = scmp.eq.s32.totalorder %s51, 2
      %p531 = por %p529, %p530
      %p532 = scmp.ne.s32.totalorder %s523, %s524
      %p533 = scmp.eq.s32.totalorder %s51, 0
      %p534 = por %p532, %p533
      %p535 = scmp.ne.s32.totalorder %s523, %s524
      %p536 = scmp.eq.s32.totalorder %s52, 2
      %p537 = por %p535, %p536
      %p539 = scmp.ne.s32.totalorder %s524, %s538
      %p540 = scmp.eq.s32.totalorder %s52, 0
      %p541 = por %p539, %p540
      %s543 = sadd.s32 %s542, 1
      %p546 = scmp.eq.s32.totalorder %s46, 2
      %p547 = scmp.ne.s32.totalorder %s542, %s544
      %p548 = scmp.eq.s32.totalorder %s46, 0
      %p549 = por %p547, %p548
      %p550 = scmp.ne.s32.totalorder %s542, %s544
      %p551 = scmp.eq.s32.totalorder %s51, 2
      %p552 = por %p550, %p551
      %p553 = scmp.ne.s32.totalorder %s544, %s545
      %p554 = scmp.eq.s32.totalorder %s51, 0
      %p555 = por %p553, %p554
      %p556 = scmp.ne.s32.totalorder %s544, %s545
      %p557 = scmp.eq.s32.totalorder %s52, 2
      %p558 = por %p556, %p557
      %p560 = scmp.ne.s32.totalorder %s545, %s559
      %p561 = scmp.eq.s32.totalorder %s52, 0
      %p562 = por %p560, %p561
      %s564 = sadd.s32 %s563, 1
      %p567 = scmp.eq.s32.totalorder %s46, 2
      %p568 = scmp.ne.s32.totalorder %s563, %s565
      %p569 = scmp.eq.s32.totalorder %s46, 0
      %p570 = por %p568, %p569
      %p571 = scmp.ne.s32.totalorder %s563, %s565
      %p572 = scmp.eq.s32.totalorder %s51, 2
      %p573 = por %p571, %p572
      %p574 = scmp.ne.s32.totalorder %s565, %s566
      %p575 = scmp.eq.s32.totalorder %s51, 0
      %p576 = por %p574, %p575
      %p577 = scmp.ne.s32.totalorder %s565, %s566
      %p578 = scmp.eq.s32.totalorder %s52, 2
      %p579 = por %p577, %p578
      %p581 = scmp.ne.s32.totalorder %s566, %s580
      %p582 = scmp.eq.s32.totalorder %s52, 0
      %p583 = por %p581, %p582
      %s585 = sadd.s32 %s584, 1
      %p588 = scmp.eq.s32.totalorder %s46, 2
      %p589 = scmp.ne.s32.totalorder %s584, %s586
      %p590 = scmp.eq.s32.totalorder %s46, 0
      %p591 = por %p589, %p590
      %p592 = scmp.ne.s32.totalorder %s584, %s586
      %p593 = scmp.eq.s32.totalorder %s51, 2
      %p594 = por %p592, %p593
      %p595 = scmp.ne.s32.totalorder %s586, %s587
      %p596 = scmp.eq.s32.totalorder %s51, 0
      %p597 = por %p595, %p596
      %p598 = scmp.ne.s32.totalorder %s586, %s587
      %p599 = scmp.eq.s32.totalorder %s52, 2
      %p600 = por %p598, %p599
      %p602 = scmp.ne.s32.totalorder %s587, %s601
      %p603 = scmp.eq.s32.totalorder %s52, 0
      %p604 = por %p602, %p603
      %s606 = sadd.s32 %s605, 1
      %p609 = scmp.eq.s32.totalorder %s46, 2
      %p610 = scmp.ne.s32.totalorder %s605, %s607
      %p611 = scmp.eq.s32.totalorder %s46, 0
      %p612 = por %p610, %p611
      %p613 = scmp.ne.s32.totalorder %s605, %s607
      %p614 = scmp.eq.s32.totalorder %s51, 2
      %p615 = por %p613, %p614
      %p616 = scmp.ne.s32.totalorder %s607, %s608
      %p617 = scmp.eq.s32.totalorder %s51, 0
      %p618 = por %p616, %p617
      %p619 = scmp.ne.s32.totalorder %s607, %s608
      %p620 = scmp.eq.s32.totalorder %s52, 2
      %p621 = por %p619, %p620
      %p623 = scmp.ne.s32.totalorder %s608, %s622
      %p624 = scmp.eq.s32.totalorder %s52, 0
      %p625 = por %p623, %p624
      %s626 = ssub.s32 %s46, %s53
      %p627 = scmp.eq.s32.totalorder %s626, 0
      %s629 = sadd.s32 %s628, 1
      %s630 = scalar_select %p627, %s628, %s629
      %p633 = pneg %p627
      %p634 = scmp.eq.s32.totalorder %s46, 2
      %p635 = por %p633, %p634
      %p636 = scmp.ne.s32.totalorder %s628, %s631
      %p637 = scmp.eq.s32.totalorder %s46, 0
      %p638 = por %p636, %p637
      %p639 = scmp.ne.s32.totalorder %s628, %s631
      %p640 = scmp.eq.s32.totalorder %s51, 2
      %p641 = por %p639, %p640
      %p642 = scmp.ne.s32.totalorder %s631, %s632
      %p643 = scmp.eq.s32.totalorder %s51, 0
      %p644 = por %p642, %p643
      %p645 = scmp.ne.s32.totalorder %s631, %s632
      %p646 = scmp.eq.s32.totalorder %s52, 2
      %p647 = por %p645, %p646
      %p649 = scmp.ne.s32.totalorder %s632, %s648
      %p650 = scmp.eq.s32.totalorder %s52, 0
      %p651 = por %p649, %p650
      %p652 = scmp.le.s32.totalorder 1, %s46
      %p653 = scmp.lt.s32.totalorder %s46, 4
      %p654 = pnand %p652, %p653
      %p655 = pneg %p654
      // Predicated region
      $region9: #{tpu_custom_call.1} parent=5 // pred_check
        _
      $region10: #{tpu_custom_call.1} parent=5 // pred_check_branch
        %657 = sbr.rel (%p654) target = $region12
      $region11: #{tpu_custom_call.1} parent=5 // pred_region
        %s658 = ssub.s32 %s46, 1
        // Predicated region
        $region13: #{tpu_custom_call.1} parent=11 // pred_check
          %p659 = pneg %p67
        $region14: #{tpu_custom_call.1} parent=11 // pred_check_branch
          %661 = sbr.rel (%p659) target = $region16
        $region15: #{tpu_custom_call.1} parent=11 // pred_region
          _
        $region16: #{tpu_custom_call.1} parent=11 // pred_fallthru
          _
        // Predicated region
        $region17: #{tpu_custom_call.1} parent=11 // pred_check
          %p662 = pneg %p114
        $region18: #{tpu_custom_call.1} parent=11 // pred_check_branch
          %664 = sbr.rel (%p662) target = $region20
        $region19: #{tpu_custom_call.1} parent=11 // pred_region
          _
        $region20: #{tpu_custom_call.1} parent=11 // pred_fallthru
          _
        // Predicated region
        $region21: #{tpu_custom_call.1} parent=11 // pred_check
          %p665 = pneg %p135
        $region22: #{tpu_custom_call.1} parent=11 // pred_check_branch
          %667 = sbr.rel (%p665) target = $region24
        $region23: #{tpu_custom_call.1} parent=11 // pred_region
          _
        $region24: #{tpu_custom_call.1} parent=11 // pred_fallthru
          _
        // Predicated region
        $region25: #{tpu_custom_call.1} parent=11 // pred_check
          %p668 = pneg %p156
        $region26: #{tpu_custom_call.1} parent=11 // pred_check_branch
          %670 = sbr.rel (%p668) target = $region28
        $region27: #{tpu_custom_call.1} parent=11 // pred_region
          %s672 = ssub.s32 256, 256
          %673 = vsyncadd [#allocation6], %s672
          %s674 = sshll.u32 [#allocation5], 4
          %s675 = int_to_ptr.vmem [resolvable:$true] %s674
          %680 = dma.hbm_to_vmem [thread:$0]  %s4, 256, %s675, [#allocation6], 128, 128, 8
        $region28: #{tpu_custom_call.1} parent=11 // pred_fallthru
          _
        // Predicated region
        $region29: #{tpu_custom_call.1} parent=11 // pred_check
          %p681 = pneg %p177
        $region30: #{tpu_custom_call.1} parent=11 // pred_check_branch
          %683 = sbr.rel (%p681) target = $region32
        $region31: #{tpu_custom_call.1} parent=11 // pred_region
          _
        $region32: #{tpu_custom_call.1} parent=11 // pred_fallthru
          _
        // Predicated region
        $region33: #{tpu_custom_call.1} parent=11 // pred_check
          %p684 = pneg %p198
        $region34: #{tpu_custom_call.1} parent=11 // pred_check_branch
          %686 = sbr.rel (%p684) target = $region36
        $region35: #{tpu_custom_call.1} parent=11 // pred_region
          _
        $region36: #{tpu_custom_call.1} parent=11 // pred_fallthru
          _
        // Predicated region
        $region37: #{tpu_custom_call.1} parent=11 // pred_check
          %p687 = pneg %p219
        $region38: #{tpu_custom_call.1} parent=11 // pred_check_branch
          %689 = sbr.rel (%p687) target = $region40
        $region39: #{tpu_custom_call.1} parent=11 // pred_region
          _
        $region40: #{tpu_custom_call.1} parent=11 // pred_fallthru
          _
        // Predicated region
        $region41: #{tpu_custom_call.1} parent=11 // pred_check
          %p690 = pneg %p240
        $region42: #{tpu_custom_call.1} parent=11 // pred_check_branch
          %692 = sbr.rel (%p690) target = $region44
        $region43: #{tpu_custom_call.1} parent=11 // pred_region
          %s694 = ssub.s32 16, 16
          %695 = vsyncadd [#allocation9], %s694
          %s697 = sshll.u32 [#allocation8], 4
          %s698 = int_to_ptr.vmem [resolvable:$true] %s697
          %700 = dma.hbm_to_vmem [thread:$0]  %s8, 16, %s698, [#allocation9]
        $region44: #{tpu_custom_call.1} parent=11 // pred_fallthru
          _
        // Predicated region
        $region45: #{tpu_custom_call.1} parent=11 // pred_check
          %p701 = pneg %p261
        $region46: #{tpu_custom_call.1} parent=11 // pred_check_branch
          %703 = sbr.rel (%p701) target = $region48
        $region47: #{tpu_custom_call.1} parent=11 // pred_region
          %s705 = ssub.s32 16, 16
          %706 = vsyncadd [#allocation9], %s705
          %s708 = sshll.u32 [#allocation10], 4
          %s709 = int_to_ptr.vmem [resolvable:$true] %s708
          %711 = dma.hbm_to_vmem [thread:$0]  %s9, 16, %s709, [#allocation9]
        $region48: #{tpu_custom_call.1} parent=11 // pred_fallthru
          _
        // Predicated region
        $region49: #{tpu_custom_call.1} parent=11 // pred_check
          %p712 = pneg %p282
        $region50: #{tpu_custom_call.1} parent=11 // pred_check_branch
          %714 = sbr.rel (%p712) target = $region52
        $region51: #{tpu_custom_call.1} parent=11 // pred_region
          %s716 = ssub.s32 128, 128
          %717 = vsyncadd [#allocation12], %s716
          %s719 = sshll.u32 [#allocation11], 4
          %s720 = int_to_ptr.vmem [resolvable:$true] %s719
          %722 = dma.hbm_to_vmem [thread:$0]  %s10, 128, %s720, [#allocation12]
        $region52: #{tpu_custom_call.1} parent=11 // pred_fallthru
          _
        // Predicated region
        $region53: #{tpu_custom_call.1} parent=11 // pred_check
          %p723 = pneg %p303
        $region54: #{tpu_custom_call.1} parent=11 // pred_check_branch
          %725 = sbr.rel (%p723) target = $region56
        $region55: #{tpu_custom_call.1} parent=11 // pred_region
          %s727 = ssub.s32 16, 16
          %728 = vsyncadd [#allocation12], %s727
          %s730 = sshll.u32 [#allocation13], 4
          %s731 = int_to_ptr.vmem [resolvable:$true] %s730
          %733 = dma.hbm_to_vmem [thread:$0]  %s11, 16, %s731, [#allocation12]
        $region56: #{tpu_custom_call.1} parent=11 // pred_fallthru
          _
        // Predicated region
        $region57: #{tpu_custom_call.1} parent=11 // pred_check
          %p734 = pneg %p324
        $region58: #{tpu_custom_call.1} parent=11 // pred_check_branch
          %736 = sbr.rel (%p734) target = $region60
        $region59: #{tpu_custom_call.1} parent=11 // pred_region
          %s738 = ssub.s32 128, 128
          %739 = vsyncadd [#allocation15], %s738
          %s741 = sshll.u32 [#allocation14], 4
          %s742 = int_to_ptr.vmem [resolvable:$true] %s741
          %744 = dma.hbm_to_vmem [thread:$0]  %s12, 128, %s742, [#allocation15]
        $region60: #{tpu_custom_call.1} parent=11 // pred_fallthru
          _
        // Predicated region
        $region61: #{tpu_custom_call.1} parent=11 // pred_check
          %p745 = pneg %p345
        $region62: #{tpu_custom_call.1} parent=11 // pred_check_branch
          %747 = sbr.rel (%p745) target = $region64
        $region63: #{tpu_custom_call.1} parent=11 // pred_region
          %s749 = ssub.s32 16, 16
          %750 = vsyncadd [#allocation15], %s749
          %s752 = sshll.u32 [#allocation16], 4
          %s753 = int_to_ptr.vmem [resolvable:$true] %s752
          %755 = dma.hbm_to_vmem [thread:$0]  %s13, 16, %s753, [#allocation15]
        $region64: #{tpu_custom_call.1} parent=11 // pred_fallthru
          _
        // Predicated region
        $region65: #{tpu_custom_call.1} parent=11 // pred_check
          %p756 = pneg %p366
        $region66: #{tpu_custom_call.1} parent=11 // pred_check_branch
          %758 = sbr.rel (%p756) target = $region68
        $region67: #{tpu_custom_call.1} parent=11 // pred_region
          %s760 = ssub.s32 512, 512
          %761 = vsyncadd [#allocation18], %s760
          %s762 = sshll.u32 [#allocation17], 4
          %s763 = int_to_ptr.vmem [resolvable:$true] %s762
          %768 = dma.hbm_to_vmem [thread:$0]  %s14, 512, %s763, [#allocation18], 128, 128, 8
        $region68: #{tpu_custom_call.1} parent=11 // pred_fallthru
          _
        // Predicated region
        $region69: #{tpu_custom_call.1} parent=11 // pred_check
          %p769 = pneg %p387
        $region70: #{tpu_custom_call.1} parent=11 // pred_check_branch
          %771 = sbr.rel (%p769) target = $region72
        $region71: #{tpu_custom_call.1} parent=11 // pred_region
          _
        $region72: #{tpu_custom_call.1} parent=11 // pred_fallthru
          _
        // Predicated region
        $region73: #{tpu_custom_call.1} parent=11 // pred_check
          %p772 = pneg %p408
        $region74: #{tpu_custom_call.1} parent=11 // pred_check_branch
          %774 = sbr.rel (%p772) target = $region76
        $region75: #{tpu_custom_call.1} parent=11 // pred_region
          %s776 = ssub.s32 16, 16
          %777 = vsyncadd [#allocation18], %s776
          %s779 = sshll.u32 [#allocation19], 4
          %s780 = int_to_ptr.vmem [resolvable:$true] %s779
          %782 = dma.hbm_to_vmem [thread:$0]  %s16, 16, %s780, [#allocation18]
        $region76: #{tpu_custom_call.1} parent=11 // pred_fallthru
          _
        // Predicated region
        $region77: #{tpu_custom_call.1} parent=11 // pred_check
          %p783 = pneg %p429
        $region78: #{tpu_custom_call.1} parent=11 // pred_check_branch
          %785 = sbr.rel (%p783) target = $region80
        $region79: #{tpu_custom_call.1} parent=11 // pred_region
          _
        $region80: #{tpu_custom_call.1} parent=11 // pred_fallthru
          _
        // Predicated region
        $region81: #{tpu_custom_call.1} parent=11 // pred_check
          %p786 = pneg %p450
        $region82: #{tpu_custom_call.1} parent=11 // pred_check_branch
          %788 = sbr.rel (%p786) target = $region84
        $region83: #{tpu_custom_call.1} parent=11 // pred_region
          %s790 = ssub.s32 16, 16
          %791 = vsyncadd [#allocation21], %s790
          %s793 = sshll.u32 [#allocation20], 4
          %s794 = int_to_ptr.vmem [resolvable:$true] %s793
          %796 = dma.hbm_to_vmem [thread:$0]  %s18, 16, %s794, [#allocation21]
        $region84: #{tpu_custom_call.1} parent=11 // pred_fallthru
          _
        // Predicated region
        $region85: #{tpu_custom_call.1} parent=11 // pred_check
          %p797 = pneg %p471
        $region86: #{tpu_custom_call.1} parent=11 // pred_check_branch
          %799 = sbr.rel (%p797) target = $region88
        $region87: #{tpu_custom_call.1} parent=11 // pred_region
          %s801 = ssub.s32 768, 768
          %802 = vsyncadd [#allocation21], %s801
          %s803 = sshll.u32 [#allocation22], 4
          %s804 = int_to_ptr.vmem [resolvable:$true] %s803
          %809 = dma.hbm_to_vmem [thread:$0]  %s19, 768, %s804, [#allocation21], 384, 384, 24
        $region88: #{tpu_custom_call.1} parent=11 // pred_fallthru
          _
        // Predicated region
        $region89: #{tpu_custom_call.1} parent=11 // pred_check
          %p810 = pneg %p492
        $region90: #{tpu_custom_call.1} parent=11 // pred_check_branch
          %812 = sbr.rel (%p810) target = $region92
        $region91: #{tpu_custom_call.1} parent=11 // pred_region
          _
        $region92: #{tpu_custom_call.1} parent=11 // pred_fallthru
          _
        // Predicated region
        $region93: #{tpu_custom_call.1} parent=11 // pred_check
          %p813 = pneg %p513
        $region94: #{tpu_custom_call.1} parent=11 // pred_check_branch
          %815 = sbr.rel (%p813) target = $region96
        $region95: #{tpu_custom_call.1} parent=11 // pred_region
          %s817 = ssub.s32 384, 384
          %818 = vsyncadd [#allocation24], %s817
          %s820 = sshll.u32 [#allocation23], 4
          %s821 = int_to_ptr.vmem [resolvable:$true] %s820
          %823 = dma.hbm_to_vmem [thread:$0]  %s21, 384, %s821, [#allocation24]
        $region96: #{tpu_custom_call.1} parent=11 // pred_fallthru
          _
        // Predicated region
        $region97: #{tpu_custom_call.1} parent=11 // pred_check
          %p824 = pneg %p534
        $region98: #{tpu_custom_call.1} parent=11 // pred_check_branch
          %826 = sbr.rel (%p824) target = $region100
        $region99: #{tpu_custom_call.1} parent=11 // pred_region
          _
        $region100: #{tpu_custom_call.1} parent=11 // pred_fallthru
          _
        // Predicated region
        $region101: #{tpu_custom_call.1} parent=11 // pred_check
          %p827 = pneg %p555
        $region102: #{tpu_custom_call.1} parent=11 // pred_check_branch
          %829 = sbr.rel (%p827) target = $region104
        $region103: #{tpu_custom_call.1} parent=11 // pred_region
          _
        $region104: #{tpu_custom_call.1} parent=11 // pred_fallthru
          _
        // Predicated region
        $region105: #{tpu_custom_call.1} parent=11 // pred_check
          %p830 = pneg %p576
        $region106: #{tpu_custom_call.1} parent=11 // pred_check_branch
          %832 = sbr.rel (%p830) target = $region108
        $region107: #{tpu_custom_call.1} parent=11 // pred_region
          %s834 = ssub.s32 48, 48
          %835 = vsyncadd [#allocation24], %s834
          %s837 = sshll.u32 [#allocation25], 4
          %s838 = int_to_ptr.vmem [resolvable:$true] %s837
          %840 = dma.hbm_to_vmem [thread:$0]  %s24, 48, %s838, [#allocation24]
        $region108: #{tpu_custom_call.1} parent=11 // pred_fallthru
          _
        // Predicated region
        $region109: #{tpu_custom_call.1} parent=11 // pred_check
          %p841 = pneg %p597
        $region110: #{tpu_custom_call.1} parent=11 // pred_check_branch
          %843 = sbr.rel (%p841) target = $region112
        $region111: #{tpu_custom_call.1} parent=11 // pred_region
          %s845 = ssub.s32 16, 16
          %846 = vsyncadd [#allocation27], %s845
          %s848 = sshll.u32 [#allocation26], 4
          %s849 = int_to_ptr.vmem [resolvable:$true] %s848
          %851 = dma.hbm_to_vmem [thread:$0]  %s25, 16, %s849, [#allocation27]
        $region112: #{tpu_custom_call.1} parent=11 // pred_fallthru
          _
        // Predicated region
        $region113: #{tpu_custom_call.1} parent=11 // pred_check
          %p852 = pneg %p618
        $region114: #{tpu_custom_call.1} parent=11 // pred_check_branch
          %854 = sbr.rel (%p852) target = $region116
        $region115: #{tpu_custom_call.1} parent=11 // pred_region
          _
        $region116: #{tpu_custom_call.1} parent=11 // pred_fallthru
          _
      $region12: #{tpu_custom_call.1} parent=5 // pred_fallthru
        _
      %p855 = scmp.lt.s32.totalorder %s46, 3
      // Predicated region
      $region117: #{tpu_custom_call.1} parent=5 // pred_check
        %p856 = pneg %p855
      $region118: #{tpu_custom_call.1} parent=5 // pred_check_branch
        %858 = sbr.rel (%p856) target = $region120
      $region119: #{tpu_custom_call.1} parent=5 // pred_region
        // Predicated region
        $region121: #{tpu_custom_call.1} parent=119 // pred_check
          %p859 = pneg %p87
        $region122: #{tpu_custom_call.1} parent=119 // pred_check_branch
          %861 = sbr.rel (%p859) target = $region124
        $region123: #{tpu_custom_call.1} parent=119 // pred_region
          %p862 = scmp.lt.s32.totalorder %s46, 2
          %s863 = scalar_select %p862, %s46, 2
          %s864 = smul.addr %s863, 2
          %s865 = smul.addr %s864, 8
          %s866 = scalar_lea.vmem %s1, %s865
        $region124: #{tpu_custom_call.1} parent=119 // pred_fallthru
          _
      $region120: #{tpu_custom_call.1} parent=5 // pred_fallthru
        _
      %p867 = scmp.le.s32.totalorder 1, %s46
      %p868 = scmp.lt.s32.totalorder %s46, 4
      %p869 = pnand %p867, %p868
      %p870 = pneg %p869
      // Predicated region
      $region125: #{tpu_custom_call.1} parent=5 // pred_check
        _
      $region126: #{tpu_custom_call.1} parent=5 // pred_check_branch
        %872 = sbr.rel (%p869) target = $region128
      $region127: #{tpu_custom_call.1} parent=5 // pred_region
        %s873 = ssub.s32 %s46, 1
        // Predicated region
        $region129: #{tpu_custom_call.1} parent=127 // pred_check
          %p874 = pneg %p156
        $region130: #{tpu_custom_call.1} parent=127 // pred_check_branch
          %876 = sbr.rel (%p874) target = $region132
        $region131: #{tpu_custom_call.1} parent=127 // pred_region
          %877 = dma.done [#allocation6], 256
        $region132: #{tpu_custom_call.1} parent=127 // pred_fallthru
          _
        // Predicated region
        $region133: #{tpu_custom_call.1} parent=127 // pred_check
          %p878 = pneg %p240
        $region134: #{tpu_custom_call.1} parent=127 // pred_check_branch
          %880 = sbr.rel (%p878) target = $region136
        $region135: #{tpu_custom_call.1} parent=127 // pred_region
          %881 = dma.done [#allocation9], 16
        $region136: #{tpu_custom_call.1} parent=127 // pred_fallthru
          _
        // Predicated region
        $region137: #{tpu_custom_call.1} parent=127 // pred_check
          %p882 = pneg %p261
        $region138: #{tpu_custom_call.1} parent=127 // pred_check_branch
          %884 = sbr.rel (%p882) target = $region140
        $region139: #{tpu_custom_call.1} parent=127 // pred_region
          %885 = dma.done [#allocation9], 16
        $region140: #{tpu_custom_call.1} parent=127 // pred_fallthru
          _
        // Predicated region
        $region141: #{tpu_custom_call.1} parent=127 // pred_check
          %p886 = pneg %p282
        $region142: #{tpu_custom_call.1} parent=127 // pred_check_branch
          %888 = sbr.rel (%p886) target = $region144
        $region143: #{tpu_custom_call.1} parent=127 // pred_region
          %889 = dma.done [#allocation12], 128
        $region144: #{tpu_custom_call.1} parent=127 // pred_fallthru
          _
        // Predicated region
        $region145: #{tpu_custom_call.1} parent=127 // pred_check
          %p890 = pneg %p303
        $region146: #{tpu_custom_call.1} parent=127 // pred_check_branch
          %892 = sbr.rel (%p890) target = $region148
        $region147: #{tpu_custom_call.1} parent=127 // pred_region
          %893 = dma.done [#allocation12], 16
        $region148: #{tpu_custom_call.1} parent=127 // pred_fallthru
          _
        // Predicated region
        $region149: #{tpu_custom_call.1} parent=127 // pred_check
          %p894 = pneg %p324
        $region150: #{tpu_custom_call.1} parent=127 // pred_check_branch
          %896 = sbr.rel (%p894) target = $region152
        $region151: #{tpu_custom_call.1} parent=127 // pred_region
          %897 = dma.done [#allocation15], 128
        $region152: #{tpu_custom_call.1} parent=127 // pred_fallthru
          _
        // Predicated region
        $region153: #{tpu_custom_call.1} parent=127 // pred_check
          %p898 = pneg %p345
        $region154: #{tpu_custom_call.1} parent=127 // pred_check_branch
          %900 = sbr.rel (%p898) target = $region156
        $region155: #{tpu_custom_call.1} parent=127 // pred_region
          %901 = dma.done [#allocation15], 16
        $region156: #{tpu_custom_call.1} parent=127 // pred_fallthru
          _
        // Predicated region
        $region157: #{tpu_custom_call.1} parent=127 // pred_check
          %p902 = pneg %p366
        $region158: #{tpu_custom_call.1} parent=127 // pred_check_branch
          %904 = sbr.rel (%p902) target = $region160
        $region159: #{tpu_custom_call.1} parent=127 // pred_region
          %905 = dma.done [#allocation18], 512
        $region160: #{tpu_custom_call.1} parent=127 // pred_fallthru
          _
        // Predicated region
        $region161: #{tpu_custom_call.1} parent=127 // pred_check
          %p906 = pneg %p408
        $region162: #{tpu_custom_call.1} parent=127 // pred_check_branch
          %908 = sbr.rel (%p906) target = $region164
        $region163: #{tpu_custom_call.1} parent=127 // pred_region
          %909 = dma.done [#allocation18], 16
        $region164: #{tpu_custom_call.1} parent=127 // pred_fallthru
          _
        // Predicated region
        $region165: #{tpu_custom_call.1} parent=127 // pred_check
          %p910 = pneg %p450
        $region166: #{tpu_custom_call.1} parent=127 // pred_check_branch
          %912 = sbr.rel (%p910) target = $region168
        $region167: #{tpu_custom_call.1} parent=127 // pred_region
          %913 = dma.done [#allocation21], 16
        $region168: #{tpu_custom_call.1} parent=127 // pred_fallthru
          _
        // Predicated region
        $region169: #{tpu_custom_call.1} parent=127 // pred_check
          %p914 = pneg %p471
        $region170: #{tpu_custom_call.1} parent=127 // pred_check_branch
          %916 = sbr.rel (%p914) target = $region172
        $region171: #{tpu_custom_call.1} parent=127 // pred_region
          %917 = dma.done [#allocation21], 768
        $region172: #{tpu_custom_call.1} parent=127 // pred_fallthru
          _
        // Predicated region
        $region173: #{tpu_custom_call.1} parent=127 // pred_check
          %p918 = pneg %p513
        $region174: #{tpu_custom_call.1} parent=127 // pred_check_branch
          %920 = sbr.rel (%p918) target = $region176
        $region175: #{tpu_custom_call.1} parent=127 // pred_region
          %921 = dma.done [#allocation24], 384
        $region176: #{tpu_custom_call.1} parent=127 // pred_fallthru
          _
        // Predicated region
        $region177: #{tpu_custom_call.1} parent=127 // pred_check
          %p922 = pneg %p576
        $region178: #{tpu_custom_call.1} parent=127 // pred_check_branch
          %924 = sbr.rel (%p922) target = $region180
        $region179: #{tpu_custom_call.1} parent=127 // pred_region
          %925 = dma.done [#allocation24], 48
        $region180: #{tpu_custom_call.1} parent=127 // pred_fallthru
          _
        // Predicated region
        $region181: #{tpu_custom_call.1} parent=127 // pred_check
          %p926 = pneg %p597
        $region182: #{tpu_custom_call.1} parent=127 // pred_check_branch
          %928 = sbr.rel (%p926) target = $region184
        $region183: #{tpu_custom_call.1} parent=127 // pred_region
          %929 = dma.done [#allocation27], 16
        $region184: #{tpu_custom_call.1} parent=127 // pred_fallthru
          _
        %p930 = pneg %p67
        %p931 = pneg %p64
        %p932 = scmp.lt.s32.totalorder %s51, 2
        %s933 = scalar_select %p932, %s51, 2
        %s934 = smul.addr %s933, 2
        %s935 = smul.addr %s934, 8
        %s936 = scalar_lea.vmem %s1, %s935
        %p937 = pneg %p93
        %p938 = pneg %p90
        %p939 = pneg %p114
        %p940 = pneg %p111
        %p941 = pneg %p135
        %p942 = pneg %p132
        %p943 = pneg %p156
        %p944 = pneg %p153
        %p945 = pneg %p177
        %p946 = pneg %p174
        %p947 = pneg %p198
        %p948 = pneg %p195
        %p949 = pneg %p219
        %p950 = pneg %p216
        %p951 = pneg %p240
        %p952 = pneg %p237
        %p953 = pneg %p261
        %p954 = pneg %p258
        %p955 = pneg %p282
        %p956 = pneg %p279
        %p957 = pneg %p303
        %p958 = pneg %p300
        %p959 = pneg %p324
        %p960 = pneg %p321
        %p961 = pneg %p345
        %p962 = pneg %p342
        %p963 = pneg %p366
        %p964 = pneg %p363
        %p965 = pneg %p387
        %p966 = pneg %p384
        %p967 = pneg %p408
        %p968 = pneg %p405
        %p969 = pneg %p429
        %p970 = pneg %p426
        %p971 = pneg %p450
        %p972 = pneg %p447
        %p973 = pneg %p471
        %p974 = pneg %p468
        %p975 = pneg %p492
        %p976 = pneg %p489
        %p977 = pneg %p513
        %p978 = pneg %p510
        %p979 = pneg %p534
        %p980 = pneg %p531
        %p981 = pneg %p555
        %p982 = pneg %p552
        %p983 = pneg %p576
        %p984 = pneg %p573
        %p985 = pneg %p597
        %p986 = pneg %p594
        %p987 = pneg %p618
        %p988 = pneg %p615
        %p989 = pneg %p644
        %p990 = pneg %p641
        %s991 = sand.u32 %s631, 1
        %s992 = scalar_lea.sflag [#allocation7], %s991
        %s993 = sand.u32 %s631, 1
        %s994 = smul.addr %s993, 2
        %s995 = scalar_lea.vmem [#allocation28], %s994
        %p996 = scmp.lt.s32.totalorder %s51, 2
        %s997 = scalar_select %p996, %s51, 2
        %s998 = smul.addr %s997, 2
        %s999 = smul.addr %s998, 8
        %s1000 = scalar_lea.vmem %s1, %s999
        %p1001 = scmp.eq.s32.totalorder %s51, 0
        // Predicated region
        $region185: #{tpu_custom_call.1} parent=127 // pred_check
          %p1002 = pneg %p1001
        $region186: #{tpu_custom_call.1} parent=127 // pred_check_branch
          %1004 = sbr.rel (%p1002) target = $region188
        $region187: #{tpu_custom_call.1} parent=127 // pred_region
          %1005 = vst [vmem:[#allocation2] sm:$0xff] 0.0
          %1006 = vst [vmem:[#allocation2 + $0x8] sm:$0xff] 0.0
          %v1007 = vld [vmem:[%s0] sm:$0xff]
          %v1008 = vld [vmem:[%s0 + $0x8] sm:$0xff]
          %vm1009 = vcmask 7168
          %1010 = vst.msk [vmem:[#allocation3] sm:$0xff] %vm1009, %v1007
          %1011 = vst.msk [vmem:[#allocation3 + $0x8] sm:$0xff] %vm1009, %v1008
        $region188: #{tpu_custom_call.1} parent=127 // pred_fallthru
          _
        %v1012 = vld [vmem:[#allocation3] sm:$0xff]
        %v1013 = vld [vmem:[#allocation3 + $0x8] sm:$0xff]
        %v1014 = vld [vmem:[%s1000] sm:$0xff]
        %v1015 = vld [vmem:[%s1000 + $0x8] sm:$0xff]
        %v1016 = vld [vmem:[%s2] sm:$0xff]
        %v1017 = vld [vmem:[%s2 + $0x8] sm:$0xff]
        %v1018 = vld [vmem:[%s2 + $0x10] sm:$0xff]
        %v1019 = vld [vmem:[%s2 + $0x18] sm:$0xff]
        %v1020 = vld [vmem:[%s3] sm:$0xff]
        %v1021 = vld [vmem:[%s3 + $0x8] sm:$0xff]
        %v1022 = vld [vmem:[%s3 + $0x10] sm:$0xff]
        %v1023 = vld [vmem:[%s3 + $0x18] sm:$0xff]
        %v1024 = vld [vmem:[#allocation10] sm:$0x1]
        %1026 = vset.pattern.permute.xlu0 0
        %1027 = vperm.xlu0 %1026, %v1012
        %v1028 = vpop.permute.xlu0 %1027
        %1031 = vset.pattern.permute.xlu0 0
        %1032 = vperm.xlu0 %1031, %v1013
        %v1033 = vpop.permute.xlu0 %1032
        %v1036 = vlaneseq
        %v1037 = vshrl.u32 %v1036, 7
        %v1038 = vsub.s32 0, %v1037
        %v1039 = vrot.slane %v1024, %v1038
        %v1041 = vmul.f32 %v1028, %v1039
        %v1042 = vmul.f32 %v1033, %v1039
        %v1043 = vld [vmem:[#allocation11] sm:$0x7f]
        %vm1044 = vcmask 56320
        %v1046 = vsel %vm1044, %v1014, 0
        %v1049 = vsel %vm1044, %v1015, 0
        %vm1051 = vcmask 1046528
        %v1053 = vsel %vm1051, %v1043, 0
        %1055 = vmatprep.subr.mxu0 0.0
        %1056 = vmatpush1.msra.mxu0 0.0
        %1057 = vmatprep.subr.mxu0 0.0
        %1058 = vmatpush1.msra.mxu0 0.0
        %1059 = vmatprep.subr.mxu0 0.0
        %1060 = vmatpush1.msra.mxu0 0.0
        %1061 = vmatprep.subr.mxu0 0.0
        %1062 = vmatpush1.msra.mxu0 0.0
        %1063 = vmatprep.subr.mxu0 0.0
        %1064 = vmatpush1.msra.mxu0 0.0
        %1065 = vmatprep.subr.mxu0 0.0
        %1066 = vmatpush1.msra.mxu0 0.0
        %1067 = vmatprep.subr.mxu0 0.0
        %1068 = vmatpush1.msra.mxu0 0.0
        %1069 = vmatprep.subr.mxu0 0.0
        %1070 = vmatpush1.msra.mxu0 0.0
        %1071 = vmatprep.subr.mxu0 0.0
        %1072 = vmatpush1.msra.mxu0 0.0
        %1073 = vmatprep.subr.mxu0 0.0
        %1074 = vmatpush1.msra.mxu0 0.0
        %1075 = vmatprep.subr.mxu0 0.0
        %1076 = vmatpush1.msra.mxu0 0.0
        %1077 = vmatprep.subr.mxu0 0.0
        %1078 = vmatpush1.msra.mxu0 0.0
        %1079 = vmatprep.subr.mxu0 0.0
        %1080 = vmatpush1.msra.mxu0 0.0
        %1081 = vmatprep.subr.mxu0 0.0
        %1082 = vmatpush1.msra.mxu0 0.0
        %1083 = vmatprep.subr.mxu0 0.0
        %1084 = vmatpush1.msra.mxu0 0.0
        %1085 = vmatprep.subr.mxu0 0.0
        %1086 = vmatpush1.msra.mxu0 %v1053
        %1087 = vmatprep.subr.mxu0 0.0
        %1088 = vmatpush2.msra.mxu0 0.0
        %1089 = vmatprep.subr.mxu0 0.0
        %1090 = vmatpush2.msra.mxu0 0.0
        %1091 = vmatprep.subr.mxu0 0.0
        %1092 = vmatpush2.msra.mxu0 0.0
        %1093 = vmatprep.subr.mxu0 0.0
        %1094 = vmatpush2.msra.mxu0 0.0
        %1095 = vmatprep.subr.mxu0 0.0
        %1096 = vmatpush2.msra.mxu0 0.0
        %1097 = vmatprep.subr.mxu0 0.0
        %1098 = vmatpush2.msra.mxu0 0.0
        %1099 = vmatprep.subr.mxu0 0.0
        %1100 = vmatpush2.msra.mxu0 0.0
        %1101 = vmatprep.subr.mxu0 0.0
        %1102 = vmatpush2.msra.mxu0 0.0
        %1103 = vmatprep.subr.mxu0 0.0
        %1104 = vmatpush2.msra.mxu0 0.0
        %1105 = vmatprep.subr.mxu0 0.0
        %1106 = vmatpush2.msra.mxu0 0.0
        %1107 = vmatprep.subr.mxu0 0.0
        %1108 = vmatpush2.msra.mxu0 0.0
        %1109 = vmatprep.subr.mxu0 0.0
        %1110 = vmatpush2.msra.mxu0 0.0
        %1111 = vmatprep.subr.mxu0 0.0
        %1112 = vmatpush2.msra.mxu0 0.0
        %1113 = vmatprep.subr.mxu0 0.0
        %1114 = vmatpush2.msra.mxu0 0.0
        %1115 = vmatprep.subr.mxu0 0.0
        %1116 = vmatpush2.msra.mxu0 0.0
        %1117 = vmatprep.subr.mxu0 0.0
        %1118 = vmatpush2.msra.mxu0 0.0
        %1119 = vmatprep.mubr.f32.mxu0 0.0
        %1120 = vmatmul.mubr.f32.gmra.mxu0 %v1046
        %v1121 = vpop.f32.mrf.mxu0
        %v1122 = vadd.f32 0.0, %v1121
        %v1123 = vpop.f32.mrf.mxu0
        %1124 = vmatprep.mubr.f32.mxu0 0.0
        %1125 = vmatmul.mubr.f32.gmra.mxu0 %v1049
        %v1126 = vpop.f32.mrf.mxu0
        %v1127 = vadd.f32 0.0, %v1126
        %v1128 = vpop.f32.mrf.mxu0
        %1129 = vdwg.mxu0
        %v1130 = vadd.f32 %v1041, %v1122
        %v1131 = vadd.f32 %v1042, %v1127
        %v1132 = vld [vmem:[#allocation13] sm:$0x1]
        %v1134 = vlaneseq
        %v1135 = vshrl.u32 %v1134, 7
        %v1136 = vsub.s32 0, %v1135
        %v1137 = vrot.slane %v1132, %v1136
        %v1139 = vmul.f32 %v1028, %v1137
        %v1140 = vmul.f32 %v1033, %v1137
        %v1141 = vld [vmem:[#allocation14] sm:$0x7f]
        %v1143 = vsel %vm1051, %v1141, 0
        %1145 = vmatprep.subr.mxu0 0.0
        %1146 = vmatpush1.msra.mxu0 0.0
        %1147 = vmatprep.subr.mxu0 0.0
        %1148 = vmatpush1.msra.mxu0 0.0
        %1149 = vmatprep.subr.mxu0 0.0
        %1150 = vmatpush1.msra.mxu0 0.0
        %1151 = vmatprep.subr.mxu0 0.0
        %1152 = vmatpush1.msra.mxu0 0.0
        %1153 = vmatprep.subr.mxu0 0.0
        %1154 = vmatpush1.msra.mxu0 0.0
        %1155 = vmatprep.subr.mxu0 0.0
        %1156 = vmatpush1.msra.mxu0 0.0
        %1157 = vmatprep.subr.mxu0 0.0
        %1158 = vmatpush1.msra.mxu0 0.0
        %1159 = vmatprep.subr.mxu0 0.0
        %1160 = vmatpush1.msra.mxu0 0.0
        %1161 = vmatprep.subr.mxu0 0.0
        %1162 = vmatpush1.msra.mxu0 0.0
        %1163 = vmatprep.subr.mxu0 0.0
        %1164 = vmatpush1.msra.mxu0 0.0
        %1165 = vmatprep.subr.mxu0 0.0
        %1166 = vmatpush1.msra.mxu0 0.0
        %1167 = vmatprep.subr.mxu0 0.0
        %1168 = vmatpush1.msra.mxu0 0.0
        %1169 = vmatprep.subr.mxu0 0.0
        %1170 = vmatpush1.msra.mxu0 0.0
        %1171 = vmatprep.subr.mxu0 0.0
        %1172 = vmatpush1.msra.mxu0 0.0
        %1173 = vmatprep.subr.mxu0 0.0
        %1174 = vmatpush1.msra.mxu0 0.0
        %1175 = vmatprep.subr.mxu0 0.0
        %1176 = vmatpush1.msra.mxu0 %v1143
        %1177 = vmatprep.subr.mxu0 0.0
        %1178 = vmatpush2.msra.mxu0 0.0
        %1179 = vmatprep.subr.mxu0 0.0
        %1180 = vmatpush2.msra.mxu0 0.0
        %1181 = vmatprep.subr.mxu0 0.0
        %1182 = vmatpush2.msra.mxu0 0.0
        %1183 = vmatprep.subr.mxu0 0.0
        %1184 = vmatpush2.msra.mxu0 0.0
        %1185 = vmatprep.subr.mxu0 0.0
        %1186 = vmatpush2.msra.mxu0 0.0
        %1187 = vmatprep.subr.mxu0 0.0
        %1188 = vmatpush2.msra.mxu0 0.0
        %1189 = vmatprep.subr.mxu0 0.0
        %1190 = vmatpush2.msra.mxu0 0.0
        %1191 = vmatprep.subr.mxu0 0.0
        %1192 = vmatpush2.msra.mxu0 0.0
        %1193 = vmatprep.subr.mxu0 0.0
        %1194 = vmatpush2.msra.mxu0 0.0
        %1195 = vmatprep.subr.mxu0 0.0
        %1196 = vmatpush2.msra.mxu0 0.0
        %1197 = vmatprep.subr.mxu0 0.0
        %1198 = vmatpush2.msra.mxu0 0.0
        %1199 = vmatprep.subr.mxu0 0.0
        %1200 = vmatpush2.msra.mxu0 0.0
        %1201 = vmatprep.subr.mxu0 0.0
        %1202 = vmatpush2.msra.mxu0 0.0
        %1203 = vmatprep.subr.mxu0 0.0
        %1204 = vmatpush2.msra.mxu0 0.0
        %1205 = vmatprep.subr.mxu0 0.0
        %1206 = vmatpush2.msra.mxu0 0.0
        %1207 = vmatprep.subr.mxu0 0.0
        %1208 = vmatpush2.msra.mxu0 0.0
        %1209 = vmatprep.mubr.f32.mxu0 0.0
        %1210 = vmatmul.mubr.f32.gmra.mxu0 %v1046
        %v1211 = vpop.f32.mrf.mxu0
        %v1212 = vadd.f32 0.0, %v1211
        %v1213 = vpop.f32.mrf.mxu0
        %1214 = vmatprep.mubr.f32.mxu0 0.0
        %1215 = vmatmul.mubr.f32.gmra.mxu0 %v1049
        %v1216 = vpop.f32.mrf.mxu0
        %v1217 = vadd.f32 0.0, %v1216
        %v1218 = vpop.f32.mrf.mxu0
        %1219 = vdwg.mxu0
        %v1220 = vadd.f32 %v1139, %v1212
        %v1221 = vadd.f32 %v1140, %v1217
        %1222 = vrot.lane.b32.xlu0 %v1014, 123
        %v1223 = vpop.permute.xlu0 %1222
        %1224 = vrot.lane.b32.xlu0 %v1015, 123
        %v1225 = vpop.permute.xlu0 %1224
        %vm1228 = vcmask 130048
        %v1230 = vsel %vm1228, %v1016, 0
        %v1233 = vsel %vm1228, %v1017, 0
        %v1236 = vsel %vm1228, %v1018, 0
        %v1239 = vsel %vm1228, %v1019, 0
        %1241 = vmatprep.subr.mxu0 0.0
        %1242 = vmatpush1.msra.mxu0 0.0
        %1243 = vmatprep.subr.mxu0 0.0
        %1244 = vmatpush1.msra.mxu0 0.0
        %1245 = vmatprep.subr.mxu0 0.0
        %1246 = vmatpush1.msra.mxu0 0.0
        %1247 = vmatprep.subr.mxu0 0.0
        %1248 = vmatpush1.msra.mxu0 0.0
        %1249 = vmatprep.subr.mxu0 0.0
        %1250 = vmatpush1.msra.mxu0 0.0
        %1251 = vmatprep.subr.mxu0 0.0
        %1252 = vmatpush1.msra.mxu0 0.0
        %1253 = vmatprep.subr.mxu0 0.0
        %1254 = vmatpush1.msra.mxu0 0.0
        %1255 = vmatprep.subr.mxu0 0.0
        %1256 = vmatpush1.msra.mxu0 0.0
        %1257 = vmatprep.subr.mxu0 0.0
        %1258 = vmatpush1.msra.mxu0 0.0
        %1259 = vmatprep.subr.mxu0 0.0
        %1260 = vmatpush1.msra.mxu0 0.0
        %1261 = vmatprep.subr.mxu0 0.0
        %1262 = vmatpush1.msra.mxu0 0.0
        %1263 = vmatprep.subr.mxu0 0.0
        %1264 = vmatpush1.msra.mxu0 0.0
        %1265 = vmatprep.subr.mxu0 0.0
        %1266 = vmatpush1.msra.mxu0 0.0
        %1267 = vmatprep.subr.mxu0 0.0
        %1268 = vmatpush1.msra.mxu0 0.0
        %1269 = vmatprep.subr.mxu0 0.0
        %1270 = vmatpush1.msra.mxu0 %v1225
        %1271 = vmatprep.subr.mxu0 0.0
        %1272 = vmatpush1.msra.mxu0 %v1223
        %1273 = vmatprep.subr.mxu0 0.0
        %1274 = vmatpush2.msra.mxu0 0.0
        %1275 = vmatprep.subr.mxu0 0.0
        %1276 = vmatpush2.msra.mxu0 0.0
        %1277 = vmatprep.subr.mxu0 0.0
        %1278 = vmatpush2.msra.mxu0 0.0
        %1279 = vmatprep.subr.mxu0 0.0
        %1280 = vmatpush2.msra.mxu0 0.0
        %1281 = vmatprep.subr.mxu0 0.0
        %1282 = vmatpush2.msra.mxu0 0.0
        %1283 = vmatprep.subr.mxu0 0.0
        %1284 = vmatpush2.msra.mxu0 0.0
        %1285 = vmatprep.subr.mxu0 0.0
        %1286 = vmatpush2.msra.mxu0 0.0
        %1287 = vmatprep.subr.mxu0 0.0
        %1288 = vmatpush2.msra.mxu0 0.0
        %1289 = vmatprep.subr.mxu0 0.0
        %1290 = vmatpush2.msra.mxu0 0.0
        %1291 = vmatprep.subr.mxu0 0.0
        %1292 = vmatpush2.msra.mxu0 0.0
        %1293 = vmatprep.subr.mxu0 0.0
        %1294 = vmatpush2.msra.mxu0 0.0
        %1295 = vmatprep.subr.mxu0 0.0
        %1296 = vmatpush2.msra.mxu0 0.0
        %1297 = vmatprep.subr.mxu0 0.0
        %1298 = vmatpush2.msra.mxu0 0.0
        %1299 = vmatprep.subr.mxu0 0.0
        %1300 = vmatpush2.msra.mxu0 0.0
        %1301 = vmatprep.subr.mxu0 0.0
        %1302 = vmatpush2.msra.mxu0 0.0
        %1303 = vmatprep.subr.mxu0 0.0
        %1304 = vmatpush2.msra.mxu0 0.0
        %1305 = vmatprep.mubr.f32.mxu0 0.0
        %1306 = vmatmul.mubr.f32.gmra.mxu0 %v1230
        %v1307 = vpop.f32.mrf.mxu0
        %v1308 = vadd.f32 0.0, %v1307
        %v1309 = vpop.f32.mrf.mxu0
        %1310 = vmatprep.mubr.f32.mxu0 0.0
        %1311 = vmatmul.mubr.f32.gmra.mxu0 %v1233
        %v1312 = vpop.f32.mrf.mxu0
        %v1313 = vadd.f32 0.0, %v1312
        %v1314 = vpop.f32.mrf.mxu0
        %1315 = vmatprep.mubr.f32.mxu0 0.0
        %1316 = vmatmul.mubr.f32.gmra.mxu0 %v1236
        %v1317 = vpop.f32.mrf.mxu0
        %v1318 = vadd.f32 0.0, %v1317
        %v1319 = vpop.f32.mrf.mxu0
        %1320 = vmatprep.mubr.f32.mxu0 0.0
        %1321 = vmatmul.mubr.f32.gmra.mxu0 %v1239
        %v1322 = vpop.f32.mrf.mxu0
        %v1323 = vadd.f32 0.0, %v1322
        %v1324 = vpop.f32.mrf.mxu0
        %1325 = vdwg.mxu0
        %v1326 = vld [vmem:[#allocation8] sm:$0x1]
        %v1328 = vlaneseq
        %v1329 = vshrl.u32 %v1328, 7
        %v1330 = vsub.s32 0, %v1329
        %v1331 = vrot.slane %v1326, %v1330
        %v1333 = vmul.f32 %v1308, %v1331
        %v1334 = vmul.f32 %v1313, %v1331
        %v1335 = vmul.f32 %v1318, %v1331
        %v1336 = vmul.f32 %v1323, %v1331
        %v1337 = vld [vmem:[%s7] sm:$0x1]
        %v1339 = vlaneseq
        %v1340 = vshrl.u32 %v1339, 7
        %v1341 = vsub.s32 0, %v1340
        %v1342 = vrot.slane %v1337, %v1341
        %v1344 = vadd.f32 %v1333, %v1342
        %v1345 = vadd.f32 %v1334, %v1342
        %v1346 = vadd.f32 %v1335, %v1342
        %v1347 = vadd.f32 %v1336, %v1342
        %v1348 = vld [vmem:[%s6] sm:$0xff]
        %v1349 = vld [vmem:[%s6 + $0x8] sm:$0xff]
        %v1350 = vld [vmem:[%s6 + $0x10] sm:$0xff]
        %v1351 = vld [vmem:[%s6 + $0x18] sm:$0xff]
        %1356 = vrot.lane.b32.xlu0 %v1344, 127
        %v1357 = vpop.permute.xlu0 %1356
        %1358 = vrot.lane.b32.xlu0 %v1345, 127
        %v1359 = vpop.permute.xlu0 %1358
        %1360 = vrot.lane.b32.xlu0 %v1346, 127
        %v1361 = vpop.permute.xlu0 %1360
        %1362 = vrot.lane.b32.xlu0 %v1347, 127
        %v1363 = vpop.permute.xlu0 %1362
        %v1368 = vsub.f32 %v1348, %v1357
        %v1369 = vsub.f32 %v1349, %v1359
        %v1370 = vsub.f32 %v1350, %v1361
        %v1371 = vsub.f32 %v1351, %v1363
        %v1372 = vand.u32 2147483647, %v1368
        %v1373 = vand.u32 2147483647, %v1369
        %v1374 = vand.u32 2147483647, %v1370
        %v1375 = vand.u32 2147483647, %v1371
        %v1376 = vand.u32 2147483647, %v1372
        %vm1377 = vcmp.le.f32.partialorder %v1376, 0.7853982
        %v1378 = vand.u32 %v1372, 2139095040
        %v1379 = vshrl.u32 %v1378, 23
        %v1380 = vsub.s32 %v1379, 127
        %v1381 = vand.u32 2147483647, %v1372
        %v1382 = vand.u32 %v1381, 8388607
        %v1383 = vor.u32 %v1382, 8388608
        %v1384 = vsub.s32 0, %v1383
        %v1385 = vadd.s32 %v1380, 1
        %vm1386 = vcmp.gt.s32.totalorder %v1385, 0
        %v1387 = vsel %vm1386, %v1385, 0
        %v1388 = vshrl.u32 %v1387, 5
        %v1389 = vand.u32 %v1387, 31
        %v1390 = vsub.s32 32, %v1389
        %v1391 = vshrl.u32 683565275, %v1390
        %v1392 = vshll.u32 683565275, %v1389
        %v1393 = vshrl.u32 2475754826, %v1390
        %v1394 = vor.u32 %v1392, %v1393
        %v1395 = vshll.u32 2475754826, %v1389
        %v1396 = vshrl.u32 2131351028, %v1390
        %v1397 = vor.u32 %v1395, %v1396
        %v1398 = vshll.u32 2131351028, %v1389
        %v1399 = vshrl.u32 2102212464, %v1390
        %v1400 = vor.u32 %v1398, %v1399
        %v1401 = vshll.u32 2102212464, %v1389
        %v1402 = vshrl.u32 920167782, %v1390
        %v1403 = vor.u32 %v1401, %v1402
        %v1404 = vshll.u32 920167782, %v1389
        %v1405 = vshrl.u32 1326507024, %v1390
        %v1406 = vor.u32 %v1404, %v1405
        %vm1407 = vcmp.lt.s32.totalorder %v1388, 1
        %vm1408 = vcmp.lt.s32.totalorder %v1388, 2
        %vm1409 = vcmp.lt.s32.totalorder %v1388, 3
        %vm1410 = vcmp.lt.s32.totalorder %v1388, 4
        %v1411 = vsel %vm1407, %v1391, %v1394
        %v1412 = vsel %vm1410, %v1400, 2102212464
        %v1413 = vsel %vm1409, %v1397, %v1412
        %v1414 = vsel %vm1408, %v1411, %v1413
        %v1415 = vsel %vm1407, %v1394, %v1397
        %v1416 = vsel %vm1410, %v1403, 920167782
        %v1417 = vsel %vm1409, %v1400, %v1416
        %v1418 = vsel %vm1408, %v1415, %v1417
        %v1419 = vsel %vm1407, %v1397, %v1400
        %v1420 = vsel %vm1410, %v1406, 1326507024
        %v1421 = vsel %vm1409, %v1403, %v1420
        %v1422 = vsel %vm1408, %v1419, %v1421
        %v1423 = vshll.u32 %v1383, 8
        %v1424 = vmul.u32.u64.compose %v1423, %v1422
        %v1425 = vextract.low.u32 %v1424
        %v1426 = vextract.high.u32 %v1424
        %v1427 = vmul.u32.u64.compose %v1423, %v1418
        %v1428 = vextract.low.u32 %v1427
        %v1429 = vextract.high.u32 %v1427
        %v1430 = vmul.u32 %v1423, %v1414
        %v1431 = vadd.s32 %v1426, %v1428
        %vm1432 = vc.u32 %v1426, %v1428
        %v1433 = vadd.s32 %v1429, 1
        %v1434 = vsel %vm1432, %v1433, %v1429
        %v1435 = vadd.s32 %v1430, %v1434
        %v1436 = vadd.s32 %v1435, 536870912
        %v1437 = vshrl.u32 %v1436, 30
        %v1438 = vshll.u32 %v1437, 30
        %v1439 = vsub.s32 %v1435, %v1438
        %vm1440 = vcmp.lt.s32.totalorder %v1439, 0
        %v1441 = vsub.s32 0, %v1439
        %v1442 = vsel %vm1440, %v1441, %v1439
        %v1443 = vclz %v1442
        %v1444 = vsub.s32 %v1443, 2
        %vm1445 = vcmp.gt.s32.totalorder 0, %v1444
        %v1446 = vsel %vm1445, 0, %v1444
        %v1447 = vsub.s32 32, %v1446
        %v1448 = vshll.u32 %v1439, %v1446
        %v1449 = vshrl.u32 %v1431, %v1447
        %v1450 = vor.u32 %v1448, %v1449
        %v1451 = vsub.s32 4294967266, %v1446
        %v1452 = vadd.s32 %v1451, 127
        %v1453 = vshll.u32 %v1452, 23
        %v1454 = vor.u32 4788187, %v1453
        %v1455 = vand.u32 2147483647, %v1454
        %v1457 = vcvt.s32.f32 %v1450
        %v1458 = vmul.f32 %v1457, %v1455
        %v1459 = vxor.u32 %v1458, 2147483648
        %v1460 = vsub.s32 4, %v1437
        %v1461 = vsel %vm1377, %v1372, %v1458
        %v1462 = vsel %vm1377, 0, %v1437
        %v1463 = vcosq.f32.pop %v1461
        %v1464 = vsinq.f32.pop %v1461
        %vm1465 = vweird.f32 %v1372
        %v1466 = vand.u32 %v1462, 3
        %vm1467 = vcmp.lt.s32.totalorder %v1466, 2
        %vm1468 = vcmp.eq.s32.totalorder %v1466, 0
        %v1469 = vxor.u32 %v1464, 2147483648
        %v1470 = vsel %vm1468, %v1463, %v1469
        %vm1471 = vcmp.eq.s32.totalorder %v1466, 2
        %v1472 = vxor.u32 %v1463, 2147483648
        %v1473 = vsel %vm1471, %v1472, %v1464
        %v1474 = vsel %vm1467, %v1470, %v1473
        %v1475 = vsel %vm1465, nan, %v1474
        %v1476 = vand.u32 2147483647, %v1373
        %vm1477 = vcmp.le.f32.partialorder %v1476, 0.7853982
        %v1478 = vand.u32 %v1373, 2139095040
        %v1479 = vshrl.u32 %v1478, 23
        %v1480 = vsub.s32 %v1479, 127
        %v1481 = vand.u32 2147483647, %v1373
        %v1482 = vand.u32 %v1481, 8388607
        %v1483 = vor.u32 %v1482, 8388608
        %v1484 = vsub.s32 0, %v1483
        %v1485 = vadd.s32 %v1480, 1
        %vm1486 = vcmp.gt.s32.totalorder %v1485, 0
        %v1487 = vsel %vm1486, %v1485, 0
        %v1488 = vshrl.u32 %v1487, 5
        %v1489 = vand.u32 %v1487, 31
        %v1490 = vsub.s32 32, %v1489
        %v1491 = vshrl.u32 683565275, %v1490
        %v1492 = vshll.u32 683565275, %v1489
        %v1493 = vshrl.u32 2475754826, %v1490
        %v1494 = vor.u32 %v1492, %v1493
        %v1495 = vshll.u32 2475754826, %v1489
        %v1496 = vshrl.u32 2131351028, %v1490
        %v1497 = vor.u32 %v1495, %v1496
        %v1498 = vshll.u32 2131351028, %v1489
        %v1499 = vshrl.u32 2102212464, %v1490
        %v1500 = vor.u32 %v1498, %v1499
        %v1501 = vshll.u32 2102212464, %v1489
        %v1502 = vshrl.u32 920167782, %v1490
        %v1503 = vor.u32 %v1501, %v1502
        %v1504 = vshll.u32 920167782, %v1489
        %v1505 = vshrl.u32 1326507024, %v1490
        %v1506 = vor.u32 %v1504, %v1505
        %vm1507 = vcmp.lt.s32.totalorder %v1488, 1
        %vm1508 = vcmp.lt.s32.totalorder %v1488, 2
        %vm1509 = vcmp.lt.s32.totalorder %v1488, 3
        %vm1510 = vcmp.lt.s32.totalorder %v1488, 4
        %v1511 = vsel %vm1507, %v1491, %v1494
        %v1512 = vsel %vm1510, %v1500, 2102212464
        %v1513 = vsel %vm1509, %v1497, %v1512
        %v1514 = vsel %vm1508, %v1511, %v1513
        %v1515 = vsel %vm1507, %v1494, %v1497
        %v1516 = vsel %vm1510, %v1503, 920167782
        %v1517 = vsel %vm1509, %v1500, %v1516
        %v1518 = vsel %vm1508, %v1515, %v1517
        %v1519 = vsel %vm1507, %v1497, %v1500
        %v1520 = vsel %vm1510, %v1506, 1326507024
        %v1521 = vsel %vm1509, %v1503, %v1520
        %v1522 = vsel %vm1508, %v1519, %v1521
        %v1523 = vshll.u32 %v1483, 8
        %v1524 = vmul.u32.u64.compose %v1523, %v1522
        %v1525 = vextract.low.u32 %v1524
        %v1526 = vextract.high.u32 %v1524
        %v1527 = vmul.u32.u64.compose %v1523, %v1518
        %v1528 = vextract.low.u32 %v1527
        %v1529 = vextract.high.u32 %v1527
        %v1530 = vmul.u32 %v1523, %v1514
        %v1531 = vadd.s32 %v1526, %v1528
        %vm1532 = vc.u32 %v1526, %v1528
        %v1533 = vadd.s32 %v1529, 1
        %v1534 = vsel %vm1532, %v1533, %v1529
        %v1535 = vadd.s32 %v1530, %v1534
        %v1536 = vadd.s32 %v1535, 536870912
        %v1537 = vshrl.u32 %v1536, 30
        %v1538 = vshll.u32 %v1537, 30
        %v1539 = vsub.s32 %v1535, %v1538
        %vm1540 = vcmp.lt.s32.totalorder %v1539, 0
        %v1541 = vsub.s32 0, %v1539
        %v1542 = vsel %vm1540, %v1541, %v1539
        %v1543 = vclz %v1542
        %v1544 = vsub.s32 %v1543, 2
        %vm1545 = vcmp.gt.s32.totalorder 0, %v1544
        %v1546 = vsel %vm1545, 0, %v1544
        %v1547 = vsub.s32 32, %v1546
        %v1548 = vshll.u32 %v1539, %v1546
        %v1549 = vshrl.u32 %v1531, %v1547
        %v1550 = vor.u32 %v1548, %v1549
        %v1551 = vsub.s32 4294967266, %v1546
        %v1552 = vadd.s32 %v1551, 127
        %v1553 = vshll.u32 %v1552, 23
        %v1554 = vor.u32 4788187, %v1553
        %v1555 = vand.u32 2147483647, %v1554
        %v1557 = vcvt.s32.f32 %v1550
        %v1558 = vmul.f32 %v1557, %v1555
        %v1559 = vxor.u32 %v1558, 2147483648
        %v1560 = vsub.s32 4, %v1537
        %v1561 = vsel %vm1477, %v1373, %v1558
        %v1562 = vsel %vm1477, 0, %v1537
        %v1563 = vcosq.f32.pop %v1561
        %v1564 = vsinq.f32.pop %v1561
        %vm1565 = vweird.f32 %v1373
        %v1566 = vand.u32 %v1562, 3
        %vm1567 = vcmp.lt.s32.totalorder %v1566, 2
        %vm1568 = vcmp.eq.s32.totalorder %v1566, 0
        %v1569 = vxor.u32 %v1564, 2147483648
        %v1570 = vsel %vm1568, %v1563, %v1569
        %vm1571 = vcmp.eq.s32.totalorder %v1566, 2
        %v1572 = vxor.u32 %v1563, 2147483648
        %v1573 = vsel %vm1571, %v1572, %v1564
        %v1574 = vsel %vm1567, %v1570, %v1573
        %v1575 = vsel %vm1565, nan, %v1574
        %v1576 = vand.u32 2147483647, %v1374
        %vm1577 = vcmp.le.f32.partialorder %v1576, 0.7853982
        %v1578 = vand.u32 %v1374, 2139095040
        %v1579 = vshrl.u32 %v1578, 23
        %v1580 = vsub.s32 %v1579, 127
        %v1581 = vand.u32 2147483647, %v1374
        %v1582 = vand.u32 %v1581, 8388607
        %v1583 = vor.u32 %v1582, 8388608
        %v1584 = vsub.s32 0, %v1583
        %v1585 = vadd.s32 %v1580, 1
        %vm1586 = vcmp.gt.s32.totalorder %v1585, 0
        %v1587 = vsel %vm1586, %v1585, 0
        %v1588 = vshrl.u32 %v1587, 5
        %v1589 = vand.u32 %v1587, 31
        %v1590 = vsub.s32 32, %v1589
        %v1591 = vshrl.u32 683565275, %v1590
        %v1592 = vshll.u32 683565275, %v1589
        %v1593 = vshrl.u32 2475754826, %v1590
        %v1594 = vor.u32 %v1592, %v1593
        %v1595 = vshll.u32 2475754826, %v1589
        %v1596 = vshrl.u32 2131351028, %v1590
        %v1597 = vor.u32 %v1595, %v1596
        %v1598 = vshll.u32 2131351028, %v1589
        %v1599 = vshrl.u32 2102212464, %v1590
        %v1600 = vor.u32 %v1598, %v1599
        %v1601 = vshll.u32 2102212464, %v1589
        %v1602 = vshrl.u32 920167782, %v1590
        %v1603 = vor.u32 %v1601, %v1602
        %v1604 = vshll.u32 920167782, %v1589
        %v1605 = vshrl.u32 1326507024, %v1590
        %v1606 = vor.u32 %v1604, %v1605
        %vm1607 = vcmp.lt.s32.totalorder %v1588, 1
        %vm1608 = vcmp.lt.s32.totalorder %v1588, 2
        %vm1609 = vcmp.lt.s32.totalorder %v1588, 3
        %vm1610 = vcmp.lt.s32.totalorder %v1588, 4
        %v1611 = vsel %vm1607, %v1591, %v1594
        %v1612 = vsel %vm1610, %v1600, 2102212464
        %v1613 = vsel %vm1609, %v1597, %v1612
        %v1614 = vsel %vm1608, %v1611, %v1613
        %v1615 = vsel %vm1607, %v1594, %v1597
        %v1616 = vsel %vm1610, %v1603, 920167782
        %v1617 = vsel %vm1609, %v1600, %v1616
        %v1618 = vsel %vm1608, %v1615, %v1617
        %v1619 = vsel %vm1607, %v1597, %v1600
        %v1620 = vsel %vm1610, %v1606, 1326507024
        %v1621 = vsel %vm1609, %v1603, %v1620
        %v1622 = vsel %vm1608, %v1619, %v1621
        %v1623 = vshll.u32 %v1583, 8
        %v1624 = vmul.u32.u64.compose %v1623, %v1622
        %v1625 = vextract.low.u32 %v1624
        %v1626 = vextract.high.u32 %v1624
        %v1627 = vmul.u32.u64.compose %v1623, %v1618
        %v1628 = vextract.low.u32 %v1627
        %v1629 = vextract.high.u32 %v1627
        %v1630 = vmul.u32 %v1623, %v1614
        %v1631 = vadd.s32 %v1626, %v1628
        %vm1632 = vc.u32 %v1626, %v1628
        %v1633 = vadd.s32 %v1629, 1
        %v1634 = vsel %vm1632, %v1633, %v1629
        %v1635 = vadd.s32 %v1630, %v1634
        %v1636 = vadd.s32 %v1635, 536870912
        %v1637 = vshrl.u32 %v1636, 30
        %v1638 = vshll.u32 %v1637, 30
        %v1639 = vsub.s32 %v1635, %v1638
        %vm1640 = vcmp.lt.s32.totalorder %v1639, 0
        %v1641 = vsub.s32 0, %v1639
        %v1642 = vsel %vm1640, %v1641, %v1639
        %v1643 = vclz %v1642
        %v1644 = vsub.s32 %v1643, 2
        %vm1645 = vcmp.gt.s32.totalorder 0, %v1644
        %v1646 = vsel %vm1645, 0, %v1644
        %v1647 = vsub.s32 32, %v1646
        %v1648 = vshll.u32 %v1639, %v1646
        %v1649 = vshrl.u32 %v1631, %v1647
        %v1650 = vor.u32 %v1648, %v1649
        %v1651 = vsub.s32 4294967266, %v1646
        %v1652 = vadd.s32 %v1651, 127
        %v1653 = vshll.u32 %v1652, 23
        %v1654 = vor.u32 4788187, %v1653
        %v1655 = vand.u32 2147483647, %v1654
        %v1657 = vcvt.s32.f32 %v1650
        %v1658 = vmul.f32 %v1657, %v1655
        %v1659 = vxor.u32 %v1658, 2147483648
        %v1660 = vsub.s32 4, %v1637
        %v1661 = vsel %vm1577, %v1374, %v1658
        %v1662 = vsel %vm1577, 0, %v1637
        %v1663 = vcosq.f32.pop %v1661
        %v1664 = vsinq.f32.pop %v1661
        %vm1665 = vweird.f32 %v1374
        %v1666 = vand.u32 %v1662, 3
        %vm1667 = vcmp.lt.s32.totalorder %v1666, 2
        %vm1668 = vcmp.eq.s32.totalorder %v1666, 0
        %v1669 = vxor.u32 %v1664, 2147483648
        %v1670 = vsel %vm1668, %v1663, %v1669
        %vm1671 = vcmp.eq.s32.totalorder %v1666, 2
        %v1672 = vxor.u32 %v1663, 2147483648
        %v1673 = vsel %vm1671, %v1672, %v1664
        %v1674 = vsel %vm1667, %v1670, %v1673
        %v1675 = vsel %vm1665, nan, %v1674
        %v1676 = vand.u32 2147483647, %v1375
        %vm1677 = vcmp.le.f32.partialorder %v1676, 0.7853982
        %v1678 = vand.u32 %v1375, 2139095040
        %v1679 = vshrl.u32 %v1678, 23
        %v1680 = vsub.s32 %v1679, 127
        %v1681 = vand.u32 2147483647, %v1375
        %v1682 = vand.u32 %v1681, 8388607
        %v1683 = vor.u32 %v1682, 8388608
        %v1684 = vsub.s32 0, %v1683
        %v1685 = vadd.s32 %v1680, 1
        %vm1686 = vcmp.gt.s32.totalorder %v1685, 0
        %v1687 = vsel %vm1686, %v1685, 0
        %v1688 = vshrl.u32 %v1687, 5
        %v1689 = vand.u32 %v1687, 31
        %v1690 = vsub.s32 32, %v1689
        %v1691 = vshrl.u32 683565275, %v1690
        %v1692 = vshll.u32 683565275, %v1689
        %v1693 = vshrl.u32 2475754826, %v1690
        %v1694 = vor.u32 %v1692, %v1693
        %v1695 = vshll.u32 2475754826, %v1689
        %v1696 = vshrl.u32 2131351028, %v1690
        %v1697 = vor.u32 %v1695, %v1696
        %v1698 = vshll.u32 2131351028, %v1689
        %v1699 = vshrl.u32 2102212464, %v1690
        %v1700 = vor.u32 %v1698, %v1699
        %v1701 = vshll.u32 2102212464, %v1689
        %v1702 = vshrl.u32 920167782, %v1690
        %v1703 = vor.u32 %v1701, %v1702
        %v1704 = vshll.u32 920167782, %v1689
        %v1705 = vshrl.u32 1326507024, %v1690
        %v1706 = vor.u32 %v1704, %v1705
        %vm1707 = vcmp.lt.s32.totalorder %v1688, 1
        %vm1708 = vcmp.lt.s32.totalorder %v1688, 2
        %vm1709 = vcmp.lt.s32.totalorder %v1688, 3
        %vm1710 = vcmp.lt.s32.totalorder %v1688, 4
        %v1711 = vsel %vm1707, %v1691, %v1694
        %v1712 = vsel %vm1710, %v1700, 2102212464
        %v1713 = vsel %vm1709, %v1697, %v1712
        %v1714 = vsel %vm1708, %v1711, %v1713
        %v1715 = vsel %vm1707, %v1694, %v1697
        %v1716 = vsel %vm1710, %v1703, 920167782
        %v1717 = vsel %vm1709, %v1700, %v1716
        %v1718 = vsel %vm1708, %v1715, %v1717
        %v1719 = vsel %vm1707, %v1697, %v1700
        %v1720 = vsel %vm1710, %v1706, 1326507024
        %v1721 = vsel %vm1709, %v1703, %v1720
        %v1722 = vsel %vm1708, %v1719, %v1721
        %v1723 = vshll.u32 %v1683, 8
        %v1724 = vmul.u32.u64.compose %v1723, %v1722
        %v1725 = vextract.low.u32 %v1724
        %v1726 = vextract.high.u32 %v1724
        %v1727 = vmul.u32.u64.compose %v1723, %v1718
        %v1728 = vextract.low.u32 %v1727
        %v1729 = vextract.high.u32 %v1727
        %v1730 = vmul.u32 %v1723, %v1714
        %v1731 = vadd.s32 %v1726, %v1728
        %vm1732 = vc.u32 %v1726, %v1728
        %v1733 = vadd.s32 %v1729, 1
        %v1734 = vsel %vm1732, %v1733, %v1729
        %v1735 = vadd.s32 %v1730, %v1734
        %v1736 = vadd.s32 %v1735, 536870912
        %v1737 = vshrl.u32 %v1736, 30
        %v1738 = vshll.u32 %v1737, 30
        %v1739 = vsub.s32 %v1735, %v1738
        %vm1740 = vcmp.lt.s32.totalorder %v1739, 0
        %v1741 = vsub.s32 0, %v1739
        %v1742 = vsel %vm1740, %v1741, %v1739
        %v1743 = vclz %v1742
        %v1744 = vsub.s32 %v1743, 2
        %vm1745 = vcmp.gt.s32.totalorder 0, %v1744
        %v1746 = vsel %vm1745, 0, %v1744
        %v1747 = vsub.s32 32, %v1746
        %v1748 = vshll.u32 %v1739, %v1746
        %v1749 = vshrl.u32 %v1731, %v1747
        %v1750 = vor.u32 %v1748, %v1749
        %v1751 = vsub.s32 4294967266, %v1746
        %v1752 = vadd.s32 %v1751, 127
        %v1753 = vshll.u32 %v1752, 23
        %v1754 = vor.u32 4788187, %v1753
        %v1755 = vand.u32 2147483647, %v1754
        %v1757 = vcvt.s32.f32 %v1750
        %v1758 = vmul.f32 %v1757, %v1755
        %v1759 = vxor.u32 %v1758, 2147483648
        %v1760 = vsub.s32 4, %v1737
        %v1761 = vsel %vm1677, %v1375, %v1758
        %v1762 = vsel %vm1677, 0, %v1737
        %v1763 = vcosq.f32.pop %v1761
        %v1764 = vsinq.f32.pop %v1761
        %vm1765 = vweird.f32 %v1375
        %v1766 = vand.u32 %v1762, 3
        %vm1767 = vcmp.lt.s32.totalorder %v1766, 2
        %vm1768 = vcmp.eq.s32.totalorder %v1766, 0
        %v1769 = vxor.u32 %v1764, 2147483648
        %v1770 = vsel %vm1768, %v1763, %v1769
        %vm1771 = vcmp.eq.s32.totalorder %v1766, 2
        %v1772 = vxor.u32 %v1763, 2147483648
        %v1773 = vsel %vm1771, %v1772, %v1764
        %v1774 = vsel %vm1767, %v1770, %v1773
        %v1775 = vsel %vm1765, nan, %v1774
        %v1776 = vmul.f32 %v1344, %v1475
        %v1777 = vmul.f32 %v1345, %v1575
        %v1778 = vmul.f32 %v1346, %v1675
        %v1779 = vmul.f32 %v1347, %v1775
        %v1780 = vld [vmem:[%s5] sm:$0xff]
        %v1781 = vld [vmem:[%s5 + $0x8] sm:$0xff]
        %v1782 = vld [vmem:[%s5 + $0x10] sm:$0xff]
        %v1783 = vld [vmem:[%s5 + $0x18] sm:$0xff]
        %v1784 = vmul.f32 %v1776, %v1780
        %v1785 = vmul.f32 %v1777, %v1781
        %v1786 = vmul.f32 %v1778, %v1782
        %v1787 = vmul.f32 %v1779, %v1783
        %v1788 = vmax.f32 %v1784, 0.0
        %v1789 = vmax.f32 %v1785, 0.0
        %v1790 = vmax.f32 %v1786, 0.0
        %v1791 = vmax.f32 %v1787, 0.0
        %v1793 = vsel %vm1228, %v1020, 0
        %v1796 = vsel %vm1228, %v1021, 0
        %v1799 = vsel %vm1228, %v1022, 0
        %v1802 = vsel %vm1228, %v1023, 0
        %1804 = vmatprep.subr.mxu0 0.0
        %1805 = vmatpush1.msra.mxu0 0.0
        %1806 = vmatprep.subr.mxu0 0.0
        %1807 = vmatpush1.msra.mxu0 0.0
        %1808 = vmatprep.subr.mxu0 0.0
        %1809 = vmatpush1.msra.mxu0 0.0
        %1810 = vmatprep.subr.mxu0 0.0
        %1811 = vmatpush1.msra.mxu0 0.0
        %1812 = vmatprep.subr.mxu0 0.0
        %1813 = vmatpush1.msra.mxu0 0.0
        %1814 = vmatprep.subr.mxu0 0.0
        %1815 = vmatpush1.msra.mxu0 0.0
        %1816 = vmatprep.subr.mxu0 0.0
        %1817 = vmatpush1.msra.mxu0 0.0
        %1818 = vmatprep.subr.mxu0 0.0
        %1819 = vmatpush1.msra.mxu0 0.0
        %1820 = vmatprep.subr.mxu0 0.0
        %1821 = vmatpush1.msra.mxu0 0.0
        %1822 = vmatprep.subr.mxu0 0.0
        %1823 = vmatpush1.msra.mxu0 0.0
        %1824 = vmatprep.subr.mxu0 0.0
        %1825 = vmatpush1.msra.mxu0 0.0
        %1826 = vmatprep.subr.mxu0 0.0
        %1827 = vmatpush1.msra.mxu0 0.0
        %1828 = vmatprep.subr.mxu0 0.0
        %1829 = vmatpush1.msra.mxu0 0.0
        %1830 = vmatprep.subr.mxu0 0.0
        %1831 = vmatpush1.msra.mxu0 0.0
        %1832 = vmatprep.subr.mxu0 0.0
        %1833 = vmatpush1.msra.mxu0 %v1221
        %1834 = vmatprep.subr.mxu0 0.0
        %1835 = vmatpush1.msra.mxu0 %v1220
        %1836 = vmatprep.subr.mxu0 0.0
        %1837 = vmatpush2.msra.mxu0 0.0
        %1838 = vmatprep.subr.mxu0 0.0
        %1839 = vmatpush2.msra.mxu0 0.0
        %1840 = vmatprep.subr.mxu0 0.0
        %1841 = vmatpush2.msra.mxu0 0.0
        %1842 = vmatprep.subr.mxu0 0.0
        %1843 = vmatpush2.msra.mxu0 0.0
        %1844 = vmatprep.subr.mxu0 0.0
        %1845 = vmatpush2.msra.mxu0 0.0
        %1846 = vmatprep.subr.mxu0 0.0
        %1847 = vmatpush2.msra.mxu0 0.0
        %1848 = vmatprep.subr.mxu0 0.0
        %1849 = vmatpush2.msra.mxu0 0.0
        %1850 = vmatprep.subr.mxu0 0.0
        %1851 = vmatpush2.msra.mxu0 0.0
        %1852 = vmatprep.subr.mxu0 0.0
        %1853 = vmatpush2.msra.mxu0 0.0
        %1854 = vmatprep.subr.mxu0 0.0
        %1855 = vmatpush2.msra.mxu0 0.0
        %1856 = vmatprep.subr.mxu0 0.0
        %1857 = vmatpush2.msra.mxu0 0.0
        %1858 = vmatprep.subr.mxu0 0.0
        %1859 = vmatpush2.msra.mxu0 0.0
        %1860 = vmatprep.subr.mxu0 0.0
        %1861 = vmatpush2.msra.mxu0 0.0
        %1862 = vmatprep.subr.mxu0 0.0
        %1863 = vmatpush2.msra.mxu0 0.0
        %1864 = vmatprep.subr.mxu0 0.0
        %1865 = vmatpush2.msra.mxu0 0.0
        %1866 = vmatprep.subr.mxu0 0.0
        %1867 = vmatpush2.msra.mxu0 0.0
        %1868 = vmatprep.mubr.f32.mxu0 0.0
        %1869 = vmatmul.mubr.f32.gmra.mxu0 %v1793
        %v1870 = vpop.f32.mrf.mxu0
        %v1871 = vadd.f32 0.0, %v1870
        %v1872 = vpop.f32.mrf.mxu0
        %1873 = vmatprep.mubr.f32.mxu0 0.0
        %1874 = vmatmul.mubr.f32.gmra.mxu0 %v1796
        %v1875 = vpop.f32.mrf.mxu0
        %v1876 = vadd.f32 0.0, %v1875
        %v1877 = vpop.f32.mrf.mxu0
        %1878 = vmatprep.mubr.f32.mxu0 0.0
        %1879 = vmatmul.mubr.f32.gmra.mxu0 %v1799
        %v1880 = vpop.f32.mrf.mxu0
        %v1881 = vadd.f32 0.0, %v1880
        %v1882 = vpop.f32.mrf.mxu0
        %1883 = vmatprep.mubr.f32.mxu0 0.0
        %1884 = vmatmul.mubr.f32.gmra.mxu0 %v1802
        %v1885 = vpop.f32.mrf.mxu0
        %v1886 = vadd.f32 0.0, %v1885
        %v1887 = vpop.f32.mrf.mxu0
        %1888 = vdwg.mxu0
        %1889 = vmatprep.subr.mxu0 0.0
        %1890 = vmatpush1.msra.mxu0 0.0
        %1891 = vmatprep.subr.mxu0 0.0
        %1892 = vmatpush1.msra.mxu0 0.0
        %1893 = vmatprep.subr.mxu0 0.0
        %1894 = vmatpush1.msra.mxu0 0.0
        %1895 = vmatprep.subr.mxu0 0.0
        %1896 = vmatpush1.msra.mxu0 0.0
        %1897 = vmatprep.subr.mxu0 0.0
        %1898 = vmatpush1.msra.mxu0 0.0
        %1899 = vmatprep.subr.mxu0 0.0
        %1900 = vmatpush1.msra.mxu0 0.0
        %1901 = vmatprep.subr.mxu0 0.0
        %1902 = vmatpush1.msra.mxu0 0.0
        %1903 = vmatprep.subr.mxu0 0.0
        %1904 = vmatpush1.msra.mxu0 0.0
        %1905 = vmatprep.subr.mxu0 0.0
        %1906 = vmatpush1.msra.mxu0 0.0
        %1907 = vmatprep.subr.mxu0 0.0
        %1908 = vmatpush1.msra.mxu0 0.0
        %1909 = vmatprep.subr.mxu0 0.0
        %1910 = vmatpush1.msra.mxu0 0.0
        %1911 = vmatprep.subr.mxu0 0.0
        %1912 = vmatpush1.msra.mxu0 0.0
        %1913 = vmatprep.subr.mxu0 0.0
        %1914 = vmatpush1.msra.mxu0 0.0
        %1915 = vmatprep.subr.mxu0 0.0
        %1916 = vmatpush1.msra.mxu0 0.0
        %1917 = vmatprep.subr.mxu0 0.0
        %1918 = vmatpush1.msra.mxu0 %v1131
        %1919 = vmatprep.subr.mxu0 0.0
        %1920 = vmatpush1.msra.mxu0 %v1130
        %1921 = vmatprep.subr.mxu0 0.0
        %1922 = vmatpush2.msra.mxu0 0.0
        %1923 = vmatprep.subr.mxu0 0.0
        %1924 = vmatpush2.msra.mxu0 0.0
        %1925 = vmatprep.subr.mxu0 0.0
        %1926 = vmatpush2.msra.mxu0 0.0
        %1927 = vmatprep.subr.mxu0 0.0
        %1928 = vmatpush2.msra.mxu0 0.0
        %1929 = vmatprep.subr.mxu0 0.0
        %1930 = vmatpush2.msra.mxu0 0.0
        %1931 = vmatprep.subr.mxu0 0.0
        %1932 = vmatpush2.msra.mxu0 0.0
        %1933 = vmatprep.subr.mxu0 0.0
        %1934 = vmatpush2.msra.mxu0 0.0
        %1935 = vmatprep.subr.mxu0 0.0
        %1936 = vmatpush2.msra.mxu0 0.0
        %1937 = vmatprep.subr.mxu0 0.0
        %1938 = vmatpush2.msra.mxu0 0.0
        %1939 = vmatprep.subr.mxu0 0.0
        %1940 = vmatpush2.msra.mxu0 0.0
        %1941 = vmatprep.subr.mxu0 0.0
        %1942 = vmatpush2.msra.mxu0 0.0
        %1943 = vmatprep.subr.mxu0 0.0
        %1944 = vmatpush2.msra.mxu0 0.0
        %1945 = vmatprep.subr.mxu0 0.0
        %1946 = vmatpush2.msra.mxu0 0.0
        %1947 = vmatprep.subr.mxu0 0.0
        %1948 = vmatpush2.msra.mxu0 0.0
        %1949 = vmatprep.subr.mxu0 0.0
        %1950 = vmatpush2.msra.mxu0 0.0
        %1951 = vmatprep.subr.mxu0 0.0
        %1952 = vmatpush2.msra.mxu0 0.0
        %1953 = vmatprep.mubr.f32.mxu0 0.0
        %1954 = vmatmul.mubr.f32.gmra.mxu0 %v1230
        %v1955 = vpop.f32.mrf.mxu0
        %v1956 = vadd.f32 %v1871, %v1955
        %v1957 = vpop.f32.mrf.mxu0
        %1958 = vmatprep.mubr.f32.mxu0 0.0
        %1959 = vmatmul.mubr.f32.gmra.mxu0 %v1233
        %v1960 = vpop.f32.mrf.mxu0
        %v1961 = vadd.f32 %v1876, %v1960
        %v1962 = vpop.f32.mrf.mxu0
        %1963 = vmatprep.mubr.f32.mxu0 0.0
        %1964 = vmatmul.mubr.f32.gmra.mxu0 %v1236
        %v1965 = vpop.f32.mrf.mxu0
        %v1966 = vadd.f32 %v1881, %v1965
        %v1967 = vpop.f32.mrf.mxu0
        %1968 = vmatprep.mubr.f32.mxu0 0.0
        %1969 = vmatmul.mubr.f32.gmra.mxu0 %v1239
        %v1970 = vpop.f32.mrf.mxu0
        %v1971 = vadd.f32 %v1886, %v1970
        %v1972 = vpop.f32.mrf.mxu0
        %1973 = vdwg.mxu0
        %v1974 = vld [vmem:[#allocation16] sm:$0x1]
        %1976 = vset.pattern.permute.xlu0 0
        %1977 = vperm.xlu0 %1976, %v1788
        %v1978 = vpop.permute.xlu0 %1977
        %1981 = vset.pattern.permute.xlu0 0
        %1982 = vperm.xlu0 %1981, %v1789
        %v1983 = vpop.permute.xlu0 %1982
        %1986 = vset.pattern.permute.xlu0 0
        %1987 = vperm.xlu0 %1986, %v1790
        %v1988 = vpop.permute.xlu0 %1987
        %1991 = vset.pattern.permute.xlu0 0
        %1992 = vperm.xlu0 %1991, %v1791
        %v1993 = vpop.permute.xlu0 %1992
        %v1996 = vlaneseq
        %v1997 = vshrl.u32 %v1996, 7
        %v1998 = vsub.s32 0, %v1997
        %v1999 = vrot.slane %v1974, %v1998
        %v2001 = vmul.f32 %v1978, %v1999
        %v2002 = vmul.f32 %v1983, %v1999
        %v2003 = vmul.f32 %v1988, %v1999
        %v2004 = vmul.f32 %v1993, %v1999
        %v2005 = vadd.f32 %v1956, %v2001
        %v2006 = vadd.f32 %v1961, %v2002
        %v2007 = vadd.f32 %v1966, %v2003
        %v2008 = vadd.f32 %v1971, %v2004
        %v2009 = vld [vmem:[#allocation17] sm:$0xff]
        %v2010 = vld [vmem:[#allocation17 + $0x8] sm:$0xff]
        %v2011 = vld [vmem:[#allocation17 + $0x10] sm:$0xff]
        %v2012 = vld [vmem:[#allocation17 + $0x18] sm:$0xff]
        %v2013 = vadd.f32 %v2005, %v2009
        %v2014 = vadd.f32 %v2006, %v2010
        %v2015 = vadd.f32 %v2007, %v2011
        %v2016 = vadd.f32 %v2008, %v2012
        %v2017 = vxor.u32 %v2013, 2147483648
        %v2018 = vxor.u32 %v2014, 2147483648
        %v2019 = vxor.u32 %v2015, 2147483648
        %v2020 = vxor.u32 %v2016, 2147483648
        %v2021 = vmul.f32 %v2017, 1.442695
        %v2022 = vpow.pop %v2021
        %v2023 = vmul.f32 %v2018, 1.442695
        %v2024 = vpow.pop %v2023
        %v2025 = vmul.f32 %v2019, 1.442695
        %v2026 = vpow.pop %v2025
        %v2027 = vmul.f32 %v2020, 1.442695
        %v2028 = vpow.pop %v2027
        %v2029 = vadd.f32 %v2022, 1.0
        %v2030 = vadd.f32 %v2024, 1.0
        %v2031 = vadd.f32 %v2026, 1.0
        %v2032 = vadd.f32 %v2028, 1.0
        %v2033 = vrcp.pop %v2029
        %v2034 = vmul.f32 1.0, %v2033
        %v2035 = vrcp.pop %v2030
        %v2036 = vmul.f32 1.0, %v2035
        %v2037 = vrcp.pop %v2031
        %v2038 = vmul.f32 1.0, %v2037
        %v2039 = vrcp.pop %v2032
        %v2040 = vmul.f32 1.0, %v2039
        %v2041 = vld [vmem:[%s15] sm:$0xff]
        %v2042 = vld [vmem:[%s15 + $0x8] sm:$0xff]
        %v2043 = vld [vmem:[%s15 + $0x10] sm:$0xff]
        %v2044 = vld [vmem:[%s15 + $0x18] sm:$0xff]
        %v2045 = vld [vmem:[#allocation19] sm:$0x1]
        %v2047 = vlaneseq
        %v2048 = vshrl.u32 %v2047, 7
        %v2049 = vsub.s32 0, %v2048
        %v2050 = vrot.slane %v2045, %v2049
        %vm2052 = vcmask 261120
        %v2054 = vsel %vm2052, %v2034, 0
        %v2057 = vsel %vm2052, %v2036, 0
        %v2060 = vsel %vm2052, %v2038, 0
        %v2063 = vsel %vm2052, %v2040, 0
        %2065 = vmatprep.subr.mxu0 0.0
        %2066 = vmatpush1.msra.mxu0 0.0
        %2067 = vmatprep.subr.mxu0 0.0
        %2068 = vmatpush1.msra.mxu0 0.0
        %2069 = vmatprep.subr.mxu0 0.0
        %2070 = vmatpush1.msra.mxu0 0.0
        %2071 = vmatprep.subr.mxu0 0.0
        %2072 = vmatpush1.msra.mxu0 0.0
        %2073 = vmatprep.subr.mxu0 0.0
        %2074 = vmatpush1.msra.mxu0 0.0
        %2075 = vmatprep.subr.mxu0 0.0
        %2076 = vmatpush1.msra.mxu0 0.0
        %2077 = vmatprep.subr.mxu0 0.0
        %2078 = vmatpush1.msra.mxu0 0.0
        %2079 = vmatprep.subr.mxu0 0.0
        %2080 = vmatpush1.msra.mxu0 0.0
        %2081 = vmatprep.subr.mxu0 0.0
        %2082 = vmatpush1.msra.mxu0 0.0
        %2083 = vmatprep.subr.mxu0 0.0
        %2084 = vmatpush1.msra.mxu0 0.0
        %2085 = vmatprep.subr.mxu0 0.0
        %2086 = vmatpush1.msra.mxu0 0.0
        %2087 = vmatprep.subr.mxu0 0.0
        %2088 = vmatpush1.msra.mxu0 0.0
        %2089 = vmatprep.subr.mxu0 0.0
        %2090 = vmatpush1.msra.mxu0 %v2044
        %2091 = vmatprep.subr.mxu0 0.0
        %2092 = vmatpush1.msra.mxu0 %v2043
        %2093 = vmatprep.subr.mxu0 0.0
        %2094 = vmatpush1.msra.mxu0 %v2042
        %2095 = vmatprep.subr.mxu0 0.0
        %2096 = vmatpush1.msra.mxu0 %v2041
        %2097 = vmatprep.subr.mxu0 0.0
        %2098 = vmatpush2.msra.mxu0 0.0
        %2099 = vmatprep.subr.mxu0 0.0
        %2100 = vmatpush2.msra.mxu0 0.0
        %2101 = vmatprep.subr.mxu0 0.0
        %2102 = vmatpush2.msra.mxu0 0.0
        %2103 = vmatprep.subr.mxu0 0.0
        %2104 = vmatpush2.msra.mxu0 0.0
        %2105 = vmatprep.subr.mxu0 0.0
        %2106 = vmatpush2.msra.mxu0 0.0
        %2107 = vmatprep.subr.mxu0 0.0
        %2108 = vmatpush2.msra.mxu0 0.0
        %2109 = vmatprep.subr.mxu0 0.0
        %2110 = vmatpush2.msra.mxu0 0.0
        %2111 = vmatprep.subr.mxu0 0.0
        %2112 = vmatpush2.msra.mxu0 0.0
        %2113 = vmatprep.subr.mxu0 0.0
        %2114 = vmatpush2.msra.mxu0 0.0
        %2115 = vmatprep.subr.mxu0 0.0
        %2116 = vmatpush2.msra.mxu0 0.0
        %2117 = vmatprep.subr.mxu0 0.0
        %2118 = vmatpush2.msra.mxu0 0.0
        %2119 = vmatprep.subr.mxu0 0.0
        %2120 = vmatpush2.msra.mxu0 0.0
        %2121 = vmatprep.subr.mxu0 0.0
        %2122 = vmatpush2.msra.mxu0 0.0
        %2123 = vmatprep.subr.mxu0 0.0
        %2124 = vmatpush2.msra.mxu0 0.0
        %2125 = vmatprep.subr.mxu0 0.0
        %2126 = vmatpush2.msra.mxu0 0.0
        %2127 = vmatprep.subr.mxu0 0.0
        %2128 = vmatpush2.msra.mxu0 0.0
        %2129 = vmatprep.mubr.f32.mxu0 0.0
        %2130 = vmatmul.mubr.f32.gmra.mxu0 %v2054
        %v2131 = vpop.f32.mrf.mxu0
        %v2132 = vadd.f32 %v2050, %v2131
        %v2133 = vpop.f32.mrf.mxu0
        %2134 = vmatprep.mubr.f32.mxu0 0.0
        %2135 = vmatmul.mubr.f32.gmra.mxu0 %v2057
        %v2136 = vpop.f32.mrf.mxu0
        %v2137 = vadd.f32 %v2050, %v2136
        %v2138 = vpop.f32.mrf.mxu0
        %2139 = vmatprep.mubr.f32.mxu0 0.0
        %2140 = vmatmul.mubr.f32.gmra.mxu0 %v2060
        %v2141 = vpop.f32.mrf.mxu0
        %v2142 = vadd.f32 %v2050, %v2141
        %v2143 = vpop.f32.mrf.mxu0
        %2144 = vmatprep.mubr.f32.mxu0 0.0
        %2145 = vmatmul.mubr.f32.gmra.mxu0 %v2063
        %v2146 = vpop.f32.mrf.mxu0
        %v2147 = vadd.f32 %v2050, %v2146
        %v2148 = vpop.f32.mrf.mxu0
        %2149 = vdwg.mxu0
        %v2150 = vxor.u32 %v2132, 2147483648
        %v2151 = vxor.u32 %v2137, 2147483648
        %v2152 = vxor.u32 %v2142, 2147483648
        %v2153 = vxor.u32 %v2147, 2147483648
        %v2154 = vmul.f32 %v2150, 1.442695
        %v2155 = vpow.pop %v2154
        %v2156 = vmul.f32 %v2151, 1.442695
        %v2157 = vpow.pop %v2156
        %v2158 = vmul.f32 %v2152, 1.442695
        %v2159 = vpow.pop %v2158
        %v2160 = vmul.f32 %v2153, 1.442695
        %v2161 = vpow.pop %v2160
        %v2162 = vadd.f32 %v2155, 1.0
        %v2163 = vadd.f32 %v2157, 1.0
        %v2164 = vadd.f32 %v2159, 1.0
        %v2165 = vadd.f32 %v2161, 1.0
        %v2166 = vrcp.pop %v2162
        %v2167 = vmul.f32 1.0, %v2166
        %v2168 = vrcp.pop %v2163
        %v2169 = vmul.f32 1.0, %v2168
        %v2170 = vrcp.pop %v2164
        %v2171 = vmul.f32 1.0, %v2170
        %v2172 = vrcp.pop %v2165
        %v2173 = vmul.f32 1.0, %v2172
        %v2174 = vld [vmem:[#allocation5] sm:$0xff]
        %v2175 = vld [vmem:[#allocation5 + $0x8] sm:$0xff]
        %v2177 = vsel %vm2052, %v2174, 0
        %v2180 = vsel %vm2052, %v2175, 0
        %2182 = vmatprep.subr.mxu0 0.0
        %2183 = vmatpush1.msra.mxu0 0.0
        %2184 = vmatprep.subr.mxu0 0.0
        %2185 = vmatpush1.msra.mxu0 0.0
        %2186 = vmatprep.subr.mxu0 0.0
        %2187 = vmatpush1.msra.mxu0 0.0
        %2188 = vmatprep.subr.mxu0 0.0
        %2189 = vmatpush1.msra.mxu0 0.0
        %2190 = vmatprep.subr.mxu0 0.0
        %2191 = vmatpush1.msra.mxu0 0.0
        %2192 = vmatprep.subr.mxu0 0.0
        %2193 = vmatpush1.msra.mxu0 0.0
        %2194 = vmatprep.subr.mxu0 0.0
        %2195 = vmatpush1.msra.mxu0 0.0
        %2196 = vmatprep.subr.mxu0 0.0
        %2197 = vmatpush1.msra.mxu0 0.0
        %2198 = vmatprep.subr.mxu0 0.0
        %2199 = vmatpush1.msra.mxu0 0.0
        %2200 = vmatprep.subr.mxu0 0.0
        %2201 = vmatpush1.msra.mxu0 0.0
        %2202 = vmatprep.subr.mxu0 0.0
        %2203 = vmatpush1.msra.mxu0 0.0
        %2204 = vmatprep.subr.mxu0 0.0
        %2205 = vmatpush1.msra.mxu0 0.0
        %2206 = vmatprep.subr.mxu0 0.0
        %2207 = vmatpush1.msra.mxu0 %v2173
        %2208 = vmatprep.subr.mxu0 0.0
        %2209 = vmatpush1.msra.mxu0 %v2171
        %2210 = vmatprep.subr.mxu0 0.0
        %2211 = vmatpush1.msra.mxu0 %v2169
        %2212 = vmatprep.subr.mxu0 0.0
        %2213 = vmatpush1.msra.mxu0 %v2167
        %2214 = vmatprep.subr.mxu0 0.0
        %2215 = vmatpush2.msra.mxu0 0.0
        %2216 = vmatprep.subr.mxu0 0.0
        %2217 = vmatpush2.msra.mxu0 0.0
        %2218 = vmatprep.subr.mxu0 0.0
        %2219 = vmatpush2.msra.mxu0 0.0
        %2220 = vmatprep.subr.mxu0 0.0
        %2221 = vmatpush2.msra.mxu0 0.0
        %2222 = vmatprep.subr.mxu0 0.0
        %2223 = vmatpush2.msra.mxu0 0.0
        %2224 = vmatprep.subr.mxu0 0.0
        %2225 = vmatpush2.msra.mxu0 0.0
        %2226 = vmatprep.subr.mxu0 0.0
        %2227 = vmatpush2.msra.mxu0 0.0
        %2228 = vmatprep.subr.mxu0 0.0
        %2229 = vmatpush2.msra.mxu0 0.0
        %2230 = vmatprep.subr.mxu0 0.0
        %2231 = vmatpush2.msra.mxu0 0.0
        %2232 = vmatprep.subr.mxu0 0.0
        %2233 = vmatpush2.msra.mxu0 0.0
        %2234 = vmatprep.subr.mxu0 0.0
        %2235 = vmatpush2.msra.mxu0 0.0
        %2236 = vmatprep.subr.mxu0 0.0
        %2237 = vmatpush2.msra.mxu0 0.0
        %2238 = vmatprep.subr.mxu0 0.0
        %2239 = vmatpush2.msra.mxu0 0.0
        %2240 = vmatprep.subr.mxu0 0.0
        %2241 = vmatpush2.msra.mxu0 0.0
        %2242 = vmatprep.subr.mxu0 0.0
        %2243 = vmatpush2.msra.mxu0 0.0
        %2244 = vmatprep.subr.mxu0 0.0
        %2245 = vmatpush2.msra.mxu0 0.0
        %2246 = vmatprep.mubr.f32.mxu0 0.0
        %2247 = vmatmul.mubr.f32.gmra.mxu0 %v2177
        %v2248 = vpop.f32.mrf.mxu0
        %v2249 = vadd.f32 0.0, %v2248
        %v2250 = vpop.f32.mrf.mxu0
        %2251 = vmatprep.mubr.f32.mxu0 0.0
        %2252 = vmatmul.mubr.f32.gmra.mxu0 %v2180
        %v2253 = vpop.f32.mrf.mxu0
        %v2254 = vadd.f32 0.0, %v2253
        %v2255 = vpop.f32.mrf.mxu0
        %2256 = vdwg.mxu0
        %v2257 = vld [vmem:[%s17] sm:$0xff]
        %v2258 = vld [vmem:[%s17 + $0x8] sm:$0xff]
        %v2259 = vld [vmem:[%s17 + $0x10] sm:$0x3f]
        %v2260 = vld [vmem:[#allocation20] sm:$0x1]
        %v2262 = vlaneseq
        %v2263 = vshrl.u32 %v2262, 7
        %v2264 = vsub.s32 0, %v2263
        %v2265 = vrot.slane %v2260, %v2264
        %vm2267 = vcmask 179200
        %v2269 = vsel %vm2267, %v2249, 0
        %v2272 = vsel %vm2267, %v2254, 0
        %vm2274 = vcmask 1045504
        %v2276 = vsel %vm2274, %v2259, 0
        %2278 = vmatprep.subr.mxu0 0.0
        %2279 = vmatpush1.msra.mxu0 0.0
        %2280 = vmatprep.subr.mxu0 0.0
        %2281 = vmatpush1.msra.mxu0 0.0
        %2282 = vmatprep.subr.mxu0 0.0
        %2283 = vmatpush1.msra.mxu0 0.0
        %2284 = vmatprep.subr.mxu0 0.0
        %2285 = vmatpush1.msra.mxu0 0.0
        %2286 = vmatprep.subr.mxu0 0.0
        %2287 = vmatpush1.msra.mxu0 0.0
        %2288 = vmatprep.subr.mxu0 0.0
        %2289 = vmatpush1.msra.mxu0 0.0
        %2290 = vmatprep.subr.mxu0 0.0
        %2291 = vmatpush1.msra.mxu0 0.0
        %2292 = vmatprep.subr.mxu0 0.0
        %2293 = vmatpush1.msra.mxu0 0.0
        %2294 = vmatprep.subr.mxu0 0.0
        %2295 = vmatpush1.msra.mxu0 0.0
        %2296 = vmatprep.subr.mxu0 0.0
        %2297 = vmatpush1.msra.mxu0 0.0
        %2298 = vmatprep.subr.mxu0 0.0
        %2299 = vmatpush1.msra.mxu0 0.0
        %2300 = vmatprep.subr.mxu0 0.0
        %2301 = vmatpush1.msra.mxu0 0.0
        %2302 = vmatprep.subr.mxu0 0.0
        %2303 = vmatpush1.msra.mxu0 0.0
        %2304 = vmatprep.subr.mxu0 0.0
        %2305 = vmatpush1.msra.mxu0 %v2276
        %2306 = vmatprep.subr.mxu0 0.0
        %2307 = vmatpush1.msra.mxu0 %v2258
        %2308 = vmatprep.subr.mxu0 0.0
        %2309 = vmatpush1.msra.mxu0 %v2257
        %2310 = vmatprep.subr.mxu0 0.0
        %2311 = vmatpush2.msra.mxu0 0.0
        %2312 = vmatprep.subr.mxu0 0.0
        %2313 = vmatpush2.msra.mxu0 0.0
        %2314 = vmatprep.subr.mxu0 0.0
        %2315 = vmatpush2.msra.mxu0 0.0
        %2316 = vmatprep.subr.mxu0 0.0
        %2317 = vmatpush2.msra.mxu0 0.0
        %2318 = vmatprep.subr.mxu0 0.0
        %2319 = vmatpush2.msra.mxu0 0.0
        %2320 = vmatprep.subr.mxu0 0.0
        %2321 = vmatpush2.msra.mxu0 0.0
        %2322 = vmatprep.subr.mxu0 0.0
        %2323 = vmatpush2.msra.mxu0 0.0
        %2324 = vmatprep.subr.mxu0 0.0
        %2325 = vmatpush2.msra.mxu0 0.0
        %2326 = vmatprep.subr.mxu0 0.0
        %2327 = vmatpush2.msra.mxu0 0.0
        %2328 = vmatprep.subr.mxu0 0.0
        %2329 = vmatpush2.msra.mxu0 0.0
        %2330 = vmatprep.subr.mxu0 0.0
        %2331 = vmatpush2.msra.mxu0 0.0
        %2332 = vmatprep.subr.mxu0 0.0
        %2333 = vmatpush2.msra.mxu0 0.0
        %2334 = vmatprep.subr.mxu0 0.0
        %2335 = vmatpush2.msra.mxu0 0.0
        %2336 = vmatprep.subr.mxu0 0.0
        %2337 = vmatpush2.msra.mxu0 0.0
        %2338 = vmatprep.subr.mxu0 0.0
        %2339 = vmatpush2.msra.mxu0 0.0
        %2340 = vmatprep.subr.mxu0 0.0
        %2341 = vmatpush2.msra.mxu0 0.0
        %2342 = vmatprep.mubr.f32.mxu0 0.0
        %2343 = vmatmul.mubr.f32.gmra.mxu0 %v2269
        %v2344 = vpop.f32.mrf.mxu0
        %v2345 = vadd.f32 %v2265, %v2344
        %v2346 = vpop.f32.mrf.mxu0
        %2347 = vmatprep.mubr.f32.mxu0 0.0
        %2348 = vmatmul.mubr.f32.gmra.mxu0 %v2272
        %v2349 = vpop.f32.mrf.mxu0
        %v2350 = vadd.f32 %v2265, %v2349
        %v2351 = vpop.f32.mrf.mxu0
        %2352 = vdwg.mxu0
        %v2353 = vxor.u32 %v2345, 2147483648
        %v2354 = vxor.u32 %v2350, 2147483648
        %v2355 = vmul.f32 %v2353, 1.442695
        %v2356 = vpow.pop %v2355
        %v2357 = vmul.f32 %v2354, 1.442695
        %v2358 = vpow.pop %v2357
        %v2359 = vadd.f32 %v2356, 1.0
        %v2360 = vadd.f32 %v2358, 1.0
        %v2361 = vrcp.pop %v2359
        %v2362 = vmul.f32 1.0, %v2361
        %v2363 = vrcp.pop %v2360
        %v2364 = vmul.f32 1.0, %v2363
        %v2365 = vld [vmem:[#allocation2] sm:$0xff]
        %v2366 = vld [vmem:[#allocation2 + $0x8] sm:$0xff]
        %v2367 = vld [vmem:[#allocation22] sm:$0xff]
        %v2368 = vld [vmem:[#allocation22 + $0x8] sm:$0xff]
        %v2369 = vld [vmem:[#allocation22 + $0x10] sm:$0xff]
        %v2370 = vld [vmem:[#allocation22 + $0x18] sm:$0x1]
        %v2371 = vld [vmem:[#allocation22 + $0x20] sm:$0x1]
        %v2372 = vld [vmem:[#allocation22 + $0x28] sm:$0x1]
        %v2373 = vld [vmem:[%s20] sm:$0x7]
        %v2375 = vlaneseq
        %v2376 = vshrl.u32 %v2375, 7
        %v2377 = vsub.s32 0, %v2376
        %v2378 = vrot.slane %v2373, %v2377
        %v2379 = vlaneseq
        %v2380 = vshrl.u32 %v2379, 7
        %v2381 = vsub.s32 1, %v2380
        %v2382 = vrot.slane %v2373, %v2381
        %v2383 = vlaneseq
        %v2384 = vshrl.u32 %v2383, 7
        %v2385 = vsub.s32 2, %v2384
        %v2386 = vrot.slane %v2373, %v2385
        %v2390 = vmul.f32 %v1028, %v2378
        %v2391 = vmul.f32 %v1028, %v2382
        %v2392 = vmul.f32 %v1028, %v2386
        %v2393 = vmul.f32 %v1033, %v2378
        %v2394 = vmul.f32 %v1033, %v2382
        %v2395 = vmul.f32 %v1033, %v2386
        %vm2396 = vcmask 72704
        %v2398 = vsel %vm2396, %v2362, 0
        %v2401 = vsel %vm2396, %v2364, 0
        %vm2403 = vcmask 1040384
        %v2405 = vsel %vm2403, %v2370, 0
        %v2408 = vsel %vm2403, %v2371, 0
        %v2411 = vsel %vm2403, %v2372, 0
        %2413 = vmatprep.subr.mxu0 0.0
        %2414 = vmatpush1.msra.mxu0 0.0
        %2415 = vmatprep.subr.mxu0 0.0
        %2416 = vmatpush1.msra.mxu0 0.0
        %2417 = vmatprep.subr.mxu0 0.0
        %2418 = vmatpush1.msra.mxu0 0.0
        %2419 = vmatprep.subr.mxu0 0.0
        %2420 = vmatpush1.msra.mxu0 0.0
        %2421 = vmatprep.subr.mxu0 0.0
        %2422 = vmatpush1.msra.mxu0 0.0
        %2423 = vmatprep.subr.mxu0 0.0
        %2424 = vmatpush1.msra.mxu0 0.0
        %2425 = vmatprep.subr.mxu0 0.0
        %2426 = vmatpush1.msra.mxu0 0.0
        %2427 = vmatprep.subr.mxu0 0.0
        %2428 = vmatpush1.msra.mxu0 0.0
        %2429 = vmatprep.subr.mxu0 0.0
        %2430 = vmatpush1.msra.mxu0 0.0
        %2431 = vmatprep.subr.mxu0 0.0
        %2432 = vmatpush1.msra.mxu0 0.0
        %2433 = vmatprep.subr.mxu0 0.0
        %2434 = vmatpush1.msra.mxu0 0.0
        %2435 = vmatprep.subr.mxu0 0.0
        %2436 = vmatpush1.msra.mxu0 0.0
        %2437 = vmatprep.subr.mxu0 0.0
        %2438 = vmatpush1.msra.mxu0 0.0
        %2439 = vmatprep.subr.mxu0 0.0
        %2440 = vmatpush1.msra.mxu0 0.0
        %2441 = vmatprep.subr.mxu0 %v2408
        %2442 = vmatpush1.msra.mxu0 %v2405
        %2443 = vmatprep.subr.mxu0 %v2368
        %2444 = vmatpush1.msra.mxu0 %v2367
        %2445 = vmatprep.subr.mxu0 0.0
        %2446 = vmatpush2.msra.mxu0 0.0
        %2447 = vmatprep.subr.mxu0 0.0
        %2448 = vmatpush2.msra.mxu0 0.0
        %2449 = vmatprep.subr.mxu0 0.0
        %2450 = vmatpush2.msra.mxu0 0.0
        %2451 = vmatprep.subr.mxu0 0.0
        %2452 = vmatpush2.msra.mxu0 0.0
        %2453 = vmatprep.subr.mxu0 0.0
        %2454 = vmatpush2.msra.mxu0 0.0
        %2455 = vmatprep.subr.mxu0 0.0
        %2456 = vmatpush2.msra.mxu0 0.0
        %2457 = vmatprep.subr.mxu0 0.0
        %2458 = vmatpush2.msra.mxu0 0.0
        %2459 = vmatprep.subr.mxu0 0.0
        %2460 = vmatpush2.msra.mxu0 0.0
        %2461 = vmatprep.subr.mxu0 0.0
        %2462 = vmatpush2.msra.mxu0 0.0
        %2463 = vmatprep.subr.mxu0 0.0
        %2464 = vmatpush2.msra.mxu0 0.0
        %2465 = vmatprep.subr.mxu0 0.0
        %2466 = vmatpush2.msra.mxu0 0.0
        %2467 = vmatprep.subr.mxu0 0.0
        %2468 = vmatpush2.msra.mxu0 0.0
        %2469 = vmatprep.subr.mxu0 0.0
        %2470 = vmatpush2.msra.mxu0 0.0
        %2471 = vmatprep.subr.mxu0 0.0
        %2472 = vmatpush2.msra.mxu0 0.0
        %2473 = vmatprep.subr.mxu0 0.0
        %2474 = vmatpush2.msra.mxu0 0.0
        %2475 = vmatprep.subr.mxu0 0.0
        %2476 = vmatpush2.msra.mxu0 0.0
        %2477 = vmatprep.mubr.f32.mxu0 0.0
        %2478 = vmatmul.mubr.f32.gmra.mxu0 %v2398
        %v2479 = vpop.f32.mrf.mxu0
        %v2480 = vadd.f32 %v2390, %v2479
        %v2481 = vpop.f32.mrf.mxu0
        %v2482 = vadd.f32 %v2391, %v2481
        %2483 = vmatprep.mubr.f32.mxu0 0.0
        %2484 = vmatmul.mubr.f32.gmra.mxu0 %v2401
        %v2485 = vpop.f32.mrf.mxu0
        %v2486 = vadd.f32 %v2393, %v2485
        %v2487 = vpop.f32.mrf.mxu0
        %v2488 = vadd.f32 %v2394, %v2487
        %2489 = vdwg.mxu0
        %2490 = vmatprep.subr.mxu0 0.0
        %2491 = vmatpush1.msra.mxu0 0.0
        %2492 = vmatprep.subr.mxu0 0.0
        %2493 = vmatpush1.msra.mxu0 0.0
        %2494 = vmatprep.subr.mxu0 0.0
        %2495 = vmatpush1.msra.mxu0 0.0
        %2496 = vmatprep.subr.mxu0 0.0
        %2497 = vmatpush1.msra.mxu0 0.0
        %2498 = vmatprep.subr.mxu0 0.0
        %2499 = vmatpush1.msra.mxu0 0.0
        %2500 = vmatprep.subr.mxu0 0.0
        %2501 = vmatpush1.msra.mxu0 0.0
        %2502 = vmatprep.subr.mxu0 0.0
        %2503 = vmatpush1.msra.mxu0 0.0
        %2504 = vmatprep.subr.mxu0 0.0
        %2505 = vmatpush1.msra.mxu0 0.0
        %2506 = vmatprep.subr.mxu0 0.0
        %2507 = vmatpush1.msra.mxu0 0.0
        %2508 = vmatprep.subr.mxu0 0.0
        %2509 = vmatpush1.msra.mxu0 0.0
        %2510 = vmatprep.subr.mxu0 0.0
        %2511 = vmatpush1.msra.mxu0 0.0
        %2512 = vmatprep.subr.mxu0 0.0
        %2513 = vmatpush1.msra.mxu0 0.0
        %2514 = vmatprep.subr.mxu0 0.0
        %2515 = vmatpush1.msra.mxu0 0.0
        %2516 = vmatprep.subr.mxu0 0.0
        %2517 = vmatpush1.msra.mxu0 0.0
        %2518 = vmatprep.subr.mxu0 0.0
        %2519 = vmatpush1.msra.mxu0 %v2411
        %2520 = vmatprep.subr.mxu0 0.0
        %2521 = vmatpush1.msra.mxu0 %v2369
        %2522 = vmatprep.subr.mxu0 0.0
        %2523 = vmatpush2.msra.mxu0 0.0
        %2524 = vmatprep.subr.mxu0 0.0
        %2525 = vmatpush2.msra.mxu0 0.0
        %2526 = vmatprep.subr.mxu0 0.0
        %2527 = vmatpush2.msra.mxu0 0.0
        %2528 = vmatprep.subr.mxu0 0.0
        %2529 = vmatpush2.msra.mxu0 0.0
        %2530 = vmatprep.subr.mxu0 0.0
        %2531 = vmatpush2.msra.mxu0 0.0
        %2532 = vmatprep.subr.mxu0 0.0
        %2533 = vmatpush2.msra.mxu0 0.0
        %2534 = vmatprep.subr.mxu0 0.0
        %2535 = vmatpush2.msra.mxu0 0.0
        %2536 = vmatprep.subr.mxu0 0.0
        %2537 = vmatpush2.msra.mxu0 0.0
        %2538 = vmatprep.subr.mxu0 0.0
        %2539 = vmatpush2.msra.mxu0 0.0
        %2540 = vmatprep.subr.mxu0 0.0
        %2541 = vmatpush2.msra.mxu0 0.0
        %2542 = vmatprep.subr.mxu0 0.0
        %2543 = vmatpush2.msra.mxu0 0.0
        %2544 = vmatprep.subr.mxu0 0.0
        %2545 = vmatpush2.msra.mxu0 0.0
        %2546 = vmatprep.subr.mxu0 0.0
        %2547 = vmatpush2.msra.mxu0 0.0
        %2548 = vmatprep.subr.mxu0 0.0
        %2549 = vmatpush2.msra.mxu0 0.0
        %2550 = vmatprep.subr.mxu0 0.0
        %2551 = vmatpush2.msra.mxu0 0.0
        %2552 = vmatprep.subr.mxu0 0.0
        %2553 = vmatpush2.msra.mxu0 0.0
        %2554 = vmatprep.mubr.f32.mxu0 0.0
        %2555 = vmatmul.mubr.f32.gmra.mxu0 %v2398
        %v2556 = vpop.f32.mrf.mxu0
        %v2557 = vadd.f32 %v2392, %v2556
        %v2558 = vpop.f32.mrf.mxu0
        %2559 = vmatprep.mubr.f32.mxu0 0.0
        %2560 = vmatmul.mubr.f32.gmra.mxu0 %v2401
        %v2561 = vpop.f32.mrf.mxu0
        %v2562 = vadd.f32 %v2395, %v2561
        %v2563 = vpop.f32.mrf.mxu0
        %2564 = vdwg.mxu0
        %v2565 = vld [vmem:[#allocation23] sm:$0x7f]
        %v2566 = vld [vmem:[#allocation23 + $0x8] sm:$0x7f]
        %v2567 = vld [vmem:[#allocation23 + $0x10] sm:$0x7f]
        %v2569 = vsel %vm1051, %v2565, 0
        %v2572 = vsel %vm1051, %v2566, 0
        %v2575 = vsel %vm1051, %v2567, 0
        %2577 = vmatprep.subr.mxu0 0.0
        %2578 = vmatpush1.msra.mxu0 0.0
        %2579 = vmatprep.subr.mxu0 0.0
        %2580 = vmatpush1.msra.mxu0 0.0
        %2581 = vmatprep.subr.mxu0 0.0
        %2582 = vmatpush1.msra.mxu0 0.0
        %2583 = vmatprep.subr.mxu0 0.0
        %2584 = vmatpush1.msra.mxu0 0.0
        %2585 = vmatprep.subr.mxu0 0.0
        %2586 = vmatpush1.msra.mxu0 0.0
        %2587 = vmatprep.subr.mxu0 0.0
        %2588 = vmatpush1.msra.mxu0 0.0
        %2589 = vmatprep.subr.mxu0 0.0
        %2590 = vmatpush1.msra.mxu0 0.0
        %2591 = vmatprep.subr.mxu0 0.0
        %2592 = vmatpush1.msra.mxu0 0.0
        %2593 = vmatprep.subr.mxu0 0.0
        %2594 = vmatpush1.msra.mxu0 0.0
        %2595 = vmatprep.subr.mxu0 0.0
        %2596 = vmatpush1.msra.mxu0 0.0
        %2597 = vmatprep.subr.mxu0 0.0
        %2598 = vmatpush1.msra.mxu0 0.0
        %2599 = vmatprep.subr.mxu0 0.0
        %2600 = vmatpush1.msra.mxu0 0.0
        %2601 = vmatprep.subr.mxu0 0.0
        %2602 = vmatpush1.msra.mxu0 0.0
        %2603 = vmatprep.subr.mxu0 0.0
        %2604 = vmatpush1.msra.mxu0 0.0
        %2605 = vmatprep.subr.mxu0 0.0
        %2606 = vmatpush1.msra.mxu0 0.0
        %2607 = vmatprep.subr.mxu0 %v2572
        %2608 = vmatpush1.msra.mxu0 %v2569
        %2609 = vmatprep.subr.mxu0 0.0
        %2610 = vmatpush2.msra.mxu0 0.0
        %2611 = vmatprep.subr.mxu0 0.0
        %2612 = vmatpush2.msra.mxu0 0.0
        %2613 = vmatprep.subr.mxu0 0.0
        %2614 = vmatpush2.msra.mxu0 0.0
        %2615 = vmatprep.subr.mxu0 0.0
        %2616 = vmatpush2.msra.mxu0 0.0
        %2617 = vmatprep.subr.mxu0 0.0
        %2618 = vmatpush2.msra.mxu0 0.0
        %2619 = vmatprep.subr.mxu0 0.0
        %2620 = vmatpush2.msra.mxu0 0.0
        %2621 = vmatprep.subr.mxu0 0.0
        %2622 = vmatpush2.msra.mxu0 0.0
        %2623 = vmatprep.subr.mxu0 0.0
        %2624 = vmatpush2.msra.mxu0 0.0
        %2625 = vmatprep.subr.mxu0 0.0
        %2626 = vmatpush2.msra.mxu0 0.0
        %2627 = vmatprep.subr.mxu0 0.0
        %2628 = vmatpush2.msra.mxu0 0.0
        %2629 = vmatprep.subr.mxu0 0.0
        %2630 = vmatpush2.msra.mxu0 0.0
        %2631 = vmatprep.subr.mxu0 0.0
        %2632 = vmatpush2.msra.mxu0 0.0
        %2633 = vmatprep.subr.mxu0 0.0
        %2634 = vmatpush2.msra.mxu0 0.0
        %2635 = vmatprep.subr.mxu0 0.0
        %2636 = vmatpush2.msra.mxu0 0.0
        %2637 = vmatprep.subr.mxu0 0.0
        %2638 = vmatpush2.msra.mxu0 0.0
        %2639 = vmatprep.subr.mxu0 0.0
        %2640 = vmatpush2.msra.mxu0 0.0
        %2641 = vmatprep.mubr.f32.mxu0 0.0
        %2642 = vmatmul.mubr.f32.gmra.mxu0 %v1046
        %v2643 = vpop.f32.mrf.mxu0
        %v2644 = vadd.f32 0.0, %v2643
        %v2645 = vpop.f32.mrf.mxu0
        %v2646 = vadd.f32 0.0, %v2645
        %2647 = vmatprep.mubr.f32.mxu0 0.0
        %2648 = vmatmul.mubr.f32.gmra.mxu0 %v1049
        %v2649 = vpop.f32.mrf.mxu0
        %v2650 = vadd.f32 0.0, %v2649
        %v2651 = vpop.f32.mrf.mxu0
        %v2652 = vadd.f32 0.0, %v2651
        %2653 = vdwg.mxu0
        %2654 = vmatprep.subr.mxu0 0.0
        %2655 = vmatpush1.msra.mxu0 0.0
        %2656 = vmatprep.subr.mxu0 0.0
        %2657 = vmatpush1.msra.mxu0 0.0
        %2658 = vmatprep.subr.mxu0 0.0
        %2659 = vmatpush1.msra.mxu0 0.0
        %2660 = vmatprep.subr.mxu0 0.0
        %2661 = vmatpush1.msra.mxu0 0.0
        %2662 = vmatprep.subr.mxu0 0.0
        %2663 = vmatpush1.msra.mxu0 0.0
        %2664 = vmatprep.subr.mxu0 0.0
        %2665 = vmatpush1.msra.mxu0 0.0
        %2666 = vmatprep.subr.mxu0 0.0
        %2667 = vmatpush1.msra.mxu0 0.0
        %2668 = vmatprep.subr.mxu0 0.0
        %2669 = vmatpush1.msra.mxu0 0.0
        %2670 = vmatprep.subr.mxu0 0.0
        %2671 = vmatpush1.msra.mxu0 0.0
        %2672 = vmatprep.subr.mxu0 0.0
        %2673 = vmatpush1.msra.mxu0 0.0
        %2674 = vmatprep.subr.mxu0 0.0
        %2675 = vmatpush1.msra.mxu0 0.0
        %2676 = vmatprep.subr.mxu0 0.0
        %2677 = vmatpush1.msra.mxu0 0.0
        %2678 = vmatprep.subr.mxu0 0.0
        %2679 = vmatpush1.msra.mxu0 0.0
        %2680 = vmatprep.subr.mxu0 0.0
        %2681 = vmatpush1.msra.mxu0 0.0
        %2682 = vmatprep.subr.mxu0 0.0
        %2683 = vmatpush1.msra.mxu0 0.0
        %2684 = vmatprep.subr.mxu0 0.0
        %2685 = vmatpush1.msra.mxu0 %v2575
        %2686 = vmatprep.subr.mxu0 0.0
        %2687 = vmatpush2.msra.mxu0 0.0
        %2688 = vmatprep.subr.mxu0 0.0
        %2689 = vmatpush2.msra.mxu0 0.0
        %2690 = vmatprep.subr.mxu0 0.0
        %2691 = vmatpush2.msra.mxu0 0.0
        %2692 = vmatprep.subr.mxu0 0.0
        %2693 = vmatpush2.msra.mxu0 0.0
        %2694 = vmatprep.subr.mxu0 0.0
        %2695 = vmatpush2.msra.mxu0 0.0
        %2696 = vmatprep.subr.mxu0 0.0
        %2697 = vmatpush2.msra.mxu0 0.0
        %2698 = vmatprep.subr.mxu0 0.0
        %2699 = vmatpush2.msra.mxu0 0.0
        %2700 = vmatprep.subr.mxu0 0.0
        %2701 = vmatpush2.msra.mxu0 0.0
        %2702 = vmatprep.subr.mxu0 0.0
        %2703 = vmatpush2.msra.mxu0 0.0
        %2704 = vmatprep.subr.mxu0 0.0
        %2705 = vmatpush2.msra.mxu0 0.0
        %2706 = vmatprep.subr.mxu0 0.0
        %2707 = vmatpush2.msra.mxu0 0.0
        %2708 = vmatprep.subr.mxu0 0.0
        %2709 = vmatpush2.msra.mxu0 0.0
        %2710 = vmatprep.subr.mxu0 0.0
        %2711 = vmatpush2.msra.mxu0 0.0
        %2712 = vmatprep.subr.mxu0 0.0
        %2713 = vmatpush2.msra.mxu0 0.0
        %2714 = vmatprep.subr.mxu0 0.0
        %2715 = vmatpush2.msra.mxu0 0.0
        %2716 = vmatprep.subr.mxu0 0.0
        %2717 = vmatpush2.msra.mxu0 0.0
        %2718 = vmatprep.mubr.f32.mxu0 0.0
        %2719 = vmatmul.mubr.f32.gmra.mxu0 %v1046
        %v2720 = vpop.f32.mrf.mxu0
        %v2721 = vadd.f32 0.0, %v2720
        %v2722 = vpop.f32.mrf.mxu0
        %2723 = vmatprep.mubr.f32.mxu0 0.0
        %2724 = vmatmul.mubr.f32.gmra.mxu0 %v1049
        %v2725 = vpop.f32.mrf.mxu0
        %v2726 = vadd.f32 0.0, %v2725
        %v2727 = vpop.f32.mrf.mxu0
        %2728 = vdwg.mxu0
        %v2729 = vadd.f32 %v2480, %v2644
        %v2730 = vadd.f32 %v2482, %v2646
        %v2731 = vadd.f32 %v2557, %v2721
        %v2732 = vadd.f32 %v2486, %v2650
        %v2733 = vadd.f32 %v2488, %v2652
        %v2734 = vadd.f32 %v2562, %v2726
        %v2735 = vld [vmem:[%s22] sm:$0x7]
        %v2737 = vlaneseq
        %v2738 = vshrl.u32 %v2737, 7
        %v2739 = vsub.s32 0, %v2738
        %v2740 = vrot.slane %v2735, %v2739
        %v2741 = vlaneseq
        %v2742 = vshrl.u32 %v2741, 7
        %v2743 = vsub.s32 1, %v2742
        %v2744 = vrot.slane %v2735, %v2743
        %v2745 = vlaneseq
        %v2746 = vshrl.u32 %v2745, 7
        %v2747 = vsub.s32 2, %v2746
        %v2748 = vrot.slane %v2735, %v2747
        %v2752 = vadd.f32 %v2729, %v2740
        %v2753 = vadd.f32 %v2730, %v2744
        %v2754 = vadd.f32 %v2731, %v2748
        %v2755 = vadd.f32 %v2732, %v2740
        %v2756 = vadd.f32 %v2733, %v2744
        %v2757 = vadd.f32 %v2734, %v2748
        %v2758 = vld [vmem:[%s23] sm:$0xff]
        %v2759 = vld [vmem:[%s23 + $0x8] sm:$0xff]
        %v2760 = vld [vmem:[%s23 + $0x10] sm:$0xff]
        %v2761 = vld [vmem:[%s23 + $0x18] sm:$0xff]
        %v2762 = vld [vmem:[%s23 + $0x20] sm:$0xff]
        %v2763 = vld [vmem:[%s23 + $0x28] sm:$0xff]
        %v2764 = vld [vmem:[%s23 + $0x30] sm:$0xff]
        %v2765 = vld [vmem:[%s23 + $0x38] sm:$0xff]
        %v2766 = vld [vmem:[%s23 + $0x40] sm:$0xff]
        %v2767 = vld [vmem:[%s23 + $0x48] sm:$0xff]
        %v2768 = vld [vmem:[%s23 + $0x50] sm:$0xff]
        %v2769 = vld [vmem:[%s23 + $0x58] sm:$0xff]
        %v2770 = vld [vmem:[%s23 + $0x60] sm:$0xff]
        %v2771 = vld [vmem:[%s23 + $0x68] sm:$0xff]
        %v2772 = vld [vmem:[%s23 + $0x70] sm:$0xff]
        %v2773 = vld [vmem:[%s23 + $0x78] sm:$0xff]
        %v2774 = vld [vmem:[%s23 + $0x80] sm:$0xff]
        %v2775 = vld [vmem:[%s23 + $0x88] sm:$0xff]
        %v2776 = vld [vmem:[%s23 + $0x90] sm:$0xff]
        %v2777 = vld [vmem:[%s23 + $0x98] sm:$0xff]
        %v2778 = vld [vmem:[%s23 + $0xa0] sm:$0xff]
        %v2779 = vld [vmem:[%s23 + $0xa8] sm:$0xff]
        %v2780 = vld [vmem:[%s23 + $0xb0] sm:$0xff]
        %v2781 = vld [vmem:[%s23 + $0xb8] sm:$0xff]
        %v2782 = vld [vmem:[%s23 + $0xc0] sm:$0xff]
        %v2783 = vld [vmem:[%s23 + $0xc8] sm:$0xff]
        %v2784 = vld [vmem:[%s23 + $0xd0] sm:$0xff]
        %v2785 = vld [vmem:[%s23 + $0xd8] sm:$0xff]
        %v2786 = vld [vmem:[%s23 + $0xe0] sm:$0xff]
        %v2787 = vld [vmem:[%s23 + $0xe8] sm:$0xff]
        %v2788 = vld [vmem:[%s23 + $0xf0] sm:$0xff]
        %v2789 = vld [vmem:[%s23 + $0xf8] sm:$0xff]
        %v2790 = vld [vmem:[%s23 + $0x100] sm:$0xff]
        %v2791 = vld [vmem:[%s23 + $0x108] sm:$0xff]
        %v2792 = vld [vmem:[%s23 + $0x110] sm:$0xff]
        %v2793 = vld [vmem:[%s23 + $0x118] sm:$0xff]
        %v2794 = vld [vmem:[%s23 + $0x120] sm:$0xff]
        %v2795 = vld [vmem:[%s23 + $0x128] sm:$0xff]
        %v2796 = vld [vmem:[%s23 + $0x130] sm:$0xff]
        %v2797 = vld [vmem:[%s23 + $0x138] sm:$0xff]
        %v2798 = vld [vmem:[%s23 + $0x140] sm:$0xff]
        %v2799 = vld [vmem:[%s23 + $0x148] sm:$0xff]
        %v2800 = vld [vmem:[%s23 + $0x150] sm:$0xff]
        %v2801 = vld [vmem:[%s23 + $0x158] sm:$0xff]
        %v2802 = vld [vmem:[%s23 + $0x160] sm:$0xff]
        %v2803 = vld [vmem:[%s23 + $0x168] sm:$0xff]
        %v2804 = vld [vmem:[%s23 + $0x170] sm:$0xff]
        %v2805 = vld [vmem:[%s23 + $0x178] sm:$0xff]
        %v2806 = vld [vmem:[#allocation25] sm:$0x7]
        %v2808 = vlaneseq
        %v2809 = vshrl.u32 %v2808, 7
        %v2810 = vsub.s32 0, %v2809
        %v2811 = vrot.slane %v2806, %v2810
        %v2812 = vlaneseq
        %v2813 = vshrl.u32 %v2812, 7
        %v2814 = vsub.s32 1, %v2813
        %v2815 = vrot.slane %v2806, %v2814
        %v2816 = vlaneseq
        %v2817 = vshrl.u32 %v2816, 7
        %v2818 = vsub.s32 2, %v2817
        %v2819 = vrot.slane %v2806, %v2818
        %2823 = vmatprep.subr.mxu0 %v2804
        %2824 = vmatpush1.msra.mxu0 %v2803
        %2825 = vmatprep.subr.mxu0 %v2801
        %2826 = vmatpush1.msra.mxu0 %v2800
        %2827 = vmatprep.subr.mxu0 %v2798
        %2828 = vmatpush1.msra.mxu0 %v2797
        %2829 = vmatprep.subr.mxu0 %v2795
        %2830 = vmatpush1.msra.mxu0 %v2794
        %2831 = vmatprep.subr.mxu0 %v2792
        %2832 = vmatpush1.msra.mxu0 %v2791
        %2833 = vmatprep.subr.mxu0 %v2789
        %2834 = vmatpush1.msra.mxu0 %v2788
        %2835 = vmatprep.subr.mxu0 %v2786
        %2836 = vmatpush1.msra.mxu0 %v2785
        %2837 = vmatprep.subr.mxu0 %v2783
        %2838 = vmatpush1.msra.mxu0 %v2782
        %2839 = vmatprep.subr.mxu0 %v2780
        %2840 = vmatpush1.msra.mxu0 %v2779
        %2841 = vmatprep.subr.mxu0 %v2777
        %2842 = vmatpush1.msra.mxu0 %v2776
        %2843 = vmatprep.subr.mxu0 %v2774
        %2844 = vmatpush1.msra.mxu0 %v2773
        %2845 = vmatprep.subr.mxu0 %v2771
        %2846 = vmatpush1.msra.mxu0 %v2770
        %2847 = vmatprep.subr.mxu0 %v2768
        %2848 = vmatpush1.msra.mxu0 %v2767
        %2849 = vmatprep.subr.mxu0 %v2765
        %2850 = vmatpush1.msra.mxu0 %v2764
        %2851 = vmatprep.subr.mxu0 %v2762
        %2852 = vmatpush1.msra.mxu0 %v2761
        %2853 = vmatprep.subr.mxu0 %v2759
        %2854 = vmatpush1.msra.mxu0 %v2758
        %2855 = vmatprep.subr.mxu0 0.0
        %2856 = vmatpush2.msra.mxu0 0.0
        %2857 = vmatprep.subr.mxu0 0.0
        %2858 = vmatpush2.msra.mxu0 0.0
        %2859 = vmatprep.subr.mxu0 0.0
        %2860 = vmatpush2.msra.mxu0 0.0
        %2861 = vmatprep.subr.mxu0 0.0
        %2862 = vmatpush2.msra.mxu0 0.0
        %2863 = vmatprep.subr.mxu0 0.0
        %2864 = vmatpush2.msra.mxu0 0.0
        %2865 = vmatprep.subr.mxu0 0.0
        %2866 = vmatpush2.msra.mxu0 0.0
        %2867 = vmatprep.subr.mxu0 0.0
        %2868 = vmatpush2.msra.mxu0 0.0
        %2869 = vmatprep.subr.mxu0 0.0
        %2870 = vmatpush2.msra.mxu0 0.0
        %2871 = vmatprep.subr.mxu0 0.0
        %2872 = vmatpush2.msra.mxu0 0.0
        %2873 = vmatprep.subr.mxu0 0.0
        %2874 = vmatpush2.msra.mxu0 0.0
        %2875 = vmatprep.subr.mxu0 0.0
        %2876 = vmatpush2.msra.mxu0 0.0
        %2877 = vmatprep.subr.mxu0 0.0
        %2878 = vmatpush2.msra.mxu0 0.0
        %2879 = vmatprep.subr.mxu0 0.0
        %2880 = vmatpush2.msra.mxu0 0.0
        %2881 = vmatprep.subr.mxu0 0.0
        %2882 = vmatpush2.msra.mxu0 0.0
        %2883 = vmatprep.subr.mxu0 0.0
        %2884 = vmatpush2.msra.mxu0 0.0
        %2885 = vmatprep.subr.mxu0 0.0
        %2886 = vmatpush2.msra.mxu0 0.0
        %2887 = vmatprep.mubr.f32.mxu0 0.0
        %2888 = vmatmul.mubr.f32.gmra.mxu0 %v2365
        %v2889 = vpop.f32.mrf.mxu0
        %v2890 = vadd.f32 %v2811, %v2889
        %v2891 = vpop.f32.mrf.mxu0
        %v2892 = vadd.f32 %v2815, %v2891
        %2893 = vmatprep.mubr.f32.mxu0 0.0
        %2894 = vmatmul.mubr.f32.gmra.mxu0 %v2366
        %v2895 = vpop.f32.mrf.mxu0
        %v2896 = vadd.f32 %v2811, %v2895
        %v2897 = vpop.f32.mrf.mxu0
        %v2898 = vadd.f32 %v2815, %v2897
        %2899 = vdwg.mxu0
        %2900 = vmatprep.subr.mxu0 0.0
        %2901 = vmatpush1.msra.mxu0 %v2805
        %2902 = vmatprep.subr.mxu0 0.0
        %2903 = vmatpush1.msra.mxu0 %v2802
        %2904 = vmatprep.subr.mxu0 0.0
        %2905 = vmatpush1.msra.mxu0 %v2799
        %2906 = vmatprep.subr.mxu0 0.0
        %2907 = vmatpush1.msra.mxu0 %v2796
        %2908 = vmatprep.subr.mxu0 0.0
        %2909 = vmatpush1.msra.mxu0 %v2793
        %2910 = vmatprep.subr.mxu0 0.0
        %2911 = vmatpush1.msra.mxu0 %v2790
        %2912 = vmatprep.subr.mxu0 0.0
        %2913 = vmatpush1.msra.mxu0 %v2787
        %2914 = vmatprep.subr.mxu0 0.0
        %2915 = vmatpush1.msra.mxu0 %v2784
        %2916 = vmatprep.subr.mxu0 0.0
        %2917 = vmatpush1.msra.mxu0 %v2781
        %2918 = vmatprep.subr.mxu0 0.0
        %2919 = vmatpush1.msra.mxu0 %v2778
        %2920 = vmatprep.subr.mxu0 0.0
        %2921 = vmatpush1.msra.mxu0 %v2775
        %2922 = vmatprep.subr.mxu0 0.0
        %2923 = vmatpush1.msra.mxu0 %v2772
        %2924 = vmatprep.subr.mxu0 0.0
        %2925 = vmatpush1.msra.mxu0 %v2769
        %2926 = vmatprep.subr.mxu0 0.0
        %2927 = vmatpush1.msra.mxu0 %v2766
        %2928 = vmatprep.subr.mxu0 0.0
        %2929 = vmatpush1.msra.mxu0 %v2763
        %2930 = vmatprep.subr.mxu0 0.0
        %2931 = vmatpush1.msra.mxu0 %v2760
        %2932 = vmatprep.subr.mxu0 0.0
        %2933 = vmatpush2.msra.mxu0 0.0
        %2934 = vmatprep.subr.mxu0 0.0
        %2935 = vmatpush2.msra.mxu0 0.0
        %2936 = vmatprep.subr.mxu0 0.0
        %2937 = vmatpush2.msra.mxu0 0.0
        %2938 = vmatprep.subr.mxu0 0.0
        %2939 = vmatpush2.msra.mxu0 0.0
        %2940 = vmatprep.subr.mxu0 0.0
        %2941 = vmatpush2.msra.mxu0 0.0
        %2942 = vmatprep.subr.mxu0 0.0
        %2943 = vmatpush2.msra.mxu0 0.0
        %2944 = vmatprep.subr.mxu0 0.0
        %2945 = vmatpush2.msra.mxu0 0.0
        %2946 = vmatprep.subr.mxu0 0.0
        %2947 = vmatpush2.msra.mxu0 0.0
        %2948 = vmatprep.subr.mxu0 0.0
        %2949 = vmatpush2.msra.mxu0 0.0
        %2950 = vmatprep.subr.mxu0 0.0
        %2951 = vmatpush2.msra.mxu0 0.0
        %2952 = vmatprep.subr.mxu0 0.0
        %2953 = vmatpush2.msra.mxu0 0.0
        %2954 = vmatprep.subr.mxu0 0.0
        %2955 = vmatpush2.msra.mxu0 0.0
        %2956 = vmatprep.subr.mxu0 0.0
        %2957 = vmatpush2.msra.mxu0 0.0
        %2958 = vmatprep.subr.mxu0 0.0
        %2959 = vmatpush2.msra.mxu0 0.0
        %2960 = vmatprep.subr.mxu0 0.0
        %2961 = vmatpush2.msra.mxu0 0.0
        %2962 = vmatprep.subr.mxu0 0.0
        %2963 = vmatpush2.msra.mxu0 0.0
        %2964 = vmatprep.mubr.f32.mxu0 0.0
        %2965 = vmatmul.mubr.f32.gmra.mxu0 %v2365
        %v2966 = vpop.f32.mrf.mxu0
        %v2967 = vadd.f32 %v2819, %v2966
        %v2968 = vpop.f32.mrf.mxu0
        %2969 = vmatprep.mubr.f32.mxu0 0.0
        %2970 = vmatmul.mubr.f32.gmra.mxu0 %v2366
        %v2971 = vpop.f32.mrf.mxu0
        %v2972 = vadd.f32 %v2819, %v2971
        %v2973 = vpop.f32.mrf.mxu0
        %2974 = vdwg.mxu0
        %v2975 = vadd.f32 %v2752, %v2890
        %v2976 = vadd.f32 %v2755, %v2896
        %v2977 = vxor.u32 %v2975, 2147483648
        %v2978 = vxor.u32 %v2976, 2147483648
        %v2979 = vmul.f32 %v2977, 1.442695
        %v2980 = vpow.pop %v2979
        %v2981 = vmul.f32 %v2978, 1.442695
        %v2982 = vpow.pop %v2981
        %v2983 = vadd.f32 %v2980, 1.0
        %v2984 = vadd.f32 %v2982, 1.0
        %v2985 = vrcp.pop %v2983
        %v2986 = vmul.f32 1.0, %v2985
        %v2987 = vrcp.pop %v2984
        %v2988 = vmul.f32 1.0, %v2987
        %v2989 = vadd.f32 %v2753, %v2892
        %v2990 = vadd.f32 %v2756, %v2898
        %v2991 = vxor.u32 %v2989, 2147483648
        %v2992 = vxor.u32 %v2990, 2147483648
        %v2993 = vmul.f32 %v2991, 1.442695
        %v2994 = vpow.pop %v2993
        %v2995 = vmul.f32 %v2992, 1.442695
        %v2996 = vpow.pop %v2995
        %v2997 = vadd.f32 %v2994, 1.0
        %v2998 = vadd.f32 %v2996, 1.0
        %v2999 = vrcp.pop %v2997
        %v3000 = vmul.f32 1.0, %v2999
        %v3001 = vrcp.pop %v2998
        %v3002 = vmul.f32 1.0, %v3001
        %v3003 = vmul.f32 %v2986, %v2967
        %v3004 = vmul.f32 %v2988, %v2972
        %v3005 = vadd.f32 %v2754, %v3003
        %v3006 = vadd.f32 %v2757, %v3004
        %v3007 = vtanh.pop %v3005
        %v3008 = vtanh.pop %v3006
        %v3009 = vsub.f32 %v2365, %v3007
        %v3010 = vsub.f32 %v2366, %v3008
        %v3011 = vmul.f32 %v3000, %v3009
        %v3012 = vmul.f32 %v3002, %v3010
        %v3013 = vadd.f32 %v3007, %v3011
        %v3014 = vadd.f32 %v3008, %v3012
        %3015 = vst [vmem:[#allocation2] sm:$0xff] %v3013
        %3016 = vst [vmem:[#allocation2 + $0x8] sm:$0xff] %v3014
        %v3017 = vld [vmem:[#allocation26] sm:$0x1]
        %v3019 = vlaneseq
        %v3020 = vshrl.u32 %v3019, 7
        %v3021 = vsub.s32 0, %v3020
        %v3022 = vrot.slane %v3017, %v3021
        %v3024 = vmul.f32 %v3013, %v3022
        %v3025 = vmul.f32 %v3014, %v3022
        %3026 = vadd.xlane.f32.xlu0 %v3024
        %v3027 = vpop.xlane.xlu0 %3026
        %3028 = vadd.xlane.f32.xlu0 %v3025
        %v3029 = vpop.xlane.xlu0 %3028
        %v3030 = vld [vmem:[#allocation4] sm:$0x1]
        %v3032 = vlaneseq
        %v3033 = vshrl.u32 %v3032, 7
        %v3034 = vsub.s32 0, %v3033
        %v3035 = vrot.slane %v3030, %v3034
        %v3037 = vadd.f32 %v3027, %v3035
        %v3038 = vadd.f32 %v3029, %v3035
        %vm3039 = vcmask 7168
        %3040 = vst.msk [vmem:[#allocation3] sm:$0xff] %vm3039, %v3037
        %3041 = vst.msk [vmem:[#allocation3 + $0x8] sm:$0xff] %vm3039, %v3038
        %v3042 = vld [vmem:[#allocation4] sm:$0x1]
        %v3044 = vlaneseq
        %v3045 = vshrl.u32 %v3044, 7
        %v3046 = vsub.s32 0, %v3045
        %v3047 = vrot.slane %v3042, %v3046
        %3048 = vset.pattern.permute.xlu0 0
        %3049 = vperm.xlu0 %3048, %v3047
        %v3050 = vpop.permute.xlu0 %3049
        %v3052 = vadd.f32 %v3027, %v3050
        %v3053 = vadd.f32 %v3029, %v3050
        %v3056 = vlaneseq
        %v3057 = vand.u32 %v3056, 127
        %v3058 = vlaneseq
        %v3059 = vshrl.u32 %v3058, 7
        %v3060 = vsub.s32 %v3057, %v3059
        %v3061 = vrot.slane %v3052, %v3060
        %v3062 = vlaneseq
        %v3063 = vshrl.u32 %v3062, 7
        %v3064 = vsub.s32 %v3057, %v3063
        %v3065 = vrot.slane %v3053, %v3064
        %vm3066 = vcmask 1041409
        %v3067 = vsel %vm3066, %v3065, %v3061
        %vm3069 = vcmask 58368
        %3070 = vst.msk [vmem:[%s995] sm:$0x3] %vm3069, %v3067
        %s3071 = sand.u32 %s631, 1
        %s3072 = scalar_lea.sflag [#allocation7], %s3071
        %s3073 = sand.u32 %s631, 1
        %s3074 = smul.addr %s3073, 2
        %s3075 = scalar_lea.vmem [#allocation28], %s3074
        // Predicated region
        $region189: #{tpu_custom_call.1} parent=127 // pred_check
          %p3076 = pneg %p641
        $region190: #{tpu_custom_call.1} parent=127 // pred_check_branch
          %3078 = sbr.rel (%p3076) target = $region192
        $region191: #{tpu_custom_call.1} parent=127 // pred_region
          %s3080 = ssub.s32 32, 32
          %3081 = vsyncadd %s3072, %s3080
          %s3082 = smul.addr %s51, 32
          %s3083 = scalar_lea.hbm %s27, %s3082
          %s3085 = sshll.u32 %s3075, 4
          %s3086 = int_to_ptr.vmem [resolvable:$true] %s3085
          %3088 = dma.vmem_to_hbm [thread:$0]  %s3086, 32, %s3083, %s3072
        $region192: #{tpu_custom_call.1} parent=127 // pred_fallthru
          _
      $region128: #{tpu_custom_call.1} parent=5 // pred_fallthru
        _
      %p3089 = scmp.le.s32.totalorder 2, %s46
      // Predicated region
      $region193: #{tpu_custom_call.1} parent=5 // pred_check
        %p3090 = pneg %p3089
      $region194: #{tpu_custom_call.1} parent=5 // pred_check_branch
        %3092 = sbr.rel (%p3090) target = $region196
      $region195: #{tpu_custom_call.1} parent=5 // pred_region
        %s3093 = ssub.s32 %s46, 2
        // Predicated region
        $region197: #{tpu_custom_call.1} parent=195 // pred_check
          %p3094 = pneg %p647
        $region198: #{tpu_custom_call.1} parent=195 // pred_check_branch
          %3096 = sbr.rel (%p3094) target = $region200
        $region199: #{tpu_custom_call.1} parent=195 // pred_region
          %s3097 = sand.u32 %s632, 1
          %s3098 = scalar_lea.sflag [#allocation7], %s3097
          %s3099 = sand.u32 %s632, 1
          %s3100 = smul.addr %s3099, 2
          %s3101 = scalar_lea.vmem [#allocation28], %s3100
          %3102 = dma.done %s3098, 32
        $region200: #{tpu_custom_call.1} parent=195 // pred_fallthru
          _
      $region196: #{tpu_custom_call.1} parent=5 // pred_fallthru
        _
    $region6: #{tpu_custom_call.1} parent=1 // loop_footer
      %s50 = sadd.s32 1, %s46
    $region7: #{tpu_custom_call.1} parent=1 // loop_footer_branch
      %45 = sbr.rel target = $region3
    $region8: #{tpu_custom_call.1} parent=1 // loop_exit
      _
    %3103 = vsyncpa [#allocation6], 1
    %s3104 = scalar_lea.sflag [#allocation6], 1
    %3105 = vsyncpa %s3104, 1
    %3106 = vsyncpa [#allocation9], 1
    %3107 = vsyncpa [#allocation12], 1
    %3108 = vsyncpa [#allocation15], 1
    %3109 = vsyncpa [#allocation18], 1
    %3110 = vsyncpa [#allocation21], 1
    %3111 = vsyncpa [#allocation24], 1
    %3112 = vsyncpa [#allocation27], 1
    %3113 = vsyncpa [#allocation7], 1
    %s3114 = scalar_lea.sflag [#allocation7], 1
    %3115 = vsyncpa %s3114, 1

</llo_original>
